<compile_context>
chip_gen: v5e
topology: v5e:2x2
jax: 0.10.0
libtpu: 0.0.40
codegen_flags: <defaults>
</compile_context>

<pallas_src>
import functools

import jax
import jax.numpy as jnp
from jax.experimental import pallas as pl
from jax.experimental.pallas import tpu as pltpu


_SINGLE_STEP = pltpu.CompilerParams(dimension_semantics=("arbitrary",))
_PARALLEL_1D = pltpu.CompilerParams(dimension_semantics=("parallel",))


# ---------------------------------------------------------------------------
# Kernel 1: EmbeddingLinear fused with PositionalEncoding (single grid step)
#   out[b, s, :] = x[b, s] * w + bias + pe[s, :]
# ---------------------------------------------------------------------------
def _embed_pe_kernel(x_ref, w_ref, b_ref, pe_ref, o_ref):
    # x: (B,S,1) broadcast against (1,D) weight row -> (B,S,D)
    o_ref[...] = x_ref[...] * w_ref[...] + b_ref[...] + pe_ref[...]


def embed_positional(x, w_row, b_row, pe):
    """x: (B, S); w_row/b_row: (1, D); pe: (S, D) -> (B, S, D)."""
    B, S = x.shape
    D = w_row.shape[1]
    x3 = x.reshape(B, S, 1).astype(jnp.float32)
    return pl.pallas_call(
        _embed_pe_kernel,
        out_shape=jax.ShapeDtypeStruct((B, S, D), jnp.float32),
        grid_spec=pltpu.PrefetchScalarGridSpec(
            num_scalar_prefetch=0,
            grid=(1,),
            in_specs=[
                pl.BlockSpec((B, S, 1), lambda i: (0, 0, 0)),
                pl.BlockSpec((1, D), lambda i: (0, 0)),
                pl.BlockSpec((1, D), lambda i: (0, 0)),
                pl.BlockSpec((S, D), lambda i: (0, 0)),
            ],
            out_specs=pl.BlockSpec((B, S, D), lambda i: (0, 0, 0)),
        ),
        compiler_params=_SINGLE_STEP,
    )(x3, w_row, b_row, pe)


# ---------------------------------------------------------------------------
# Kernel 2: fully fused decoder layer (one pallas_call per layer)
#   self-MHA -> Add&LN -> cross-MHA -> Add&LN -> FF (MLP) -> Add&LN
# Everything (weights + activations) stays in VMEM / vregs.
# ---------------------------------------------------------------------------
def _decoder_layer_kernel(
        x_ref, enc_ref, mask_ref,
        wqkv_s_ref, bqkv_s_ref, wo_s_ref, bo_s_ref,
        wq_c_ref, bq_c_ref, wkv_c_ref, bkv_c_ref, wo_c_ref, bo_c_ref,
        ln_g_ref, ln_b_ref,
        ff_w1_ref, ff_b1_ref, ff_w2_ref, ff_b2_ref,
        o_ref, *, h, eps):
    D = x_ref.shape[-1]
    dk = D // h
    scale = 1.0 / (dk ** 0.5)

    x = x_ref[0]          # (S_dec, D)
    enc = enc_ref[0]      # (S_enc, D)
    causal = mask_ref[...]            # (S_dec, S_dec), INT32_MIN above diag
    gamma = ln_g_ref[...]             # (1, D)  shared per-layer LayerNorm
    beta = ln_b_ref[...]              # (1, D)

    lane = jax.lax.broadcasted_iota(jnp.int32, (1, D), 1)

    def add_ln(a, b):
        z = a + b
        mu = jnp.mean(z, axis=-1, keepdims=True)
        zc = z - mu
        var = jnp.mean(zc * zc, axis=-1, keepdims=True)
        return zc * jax.lax.rsqrt(var + eps) * gamma + beta

    def attend(q, k, v, bias):
        # Per-head attention without lane-splitting reshapes/transposes:
        # head hh is isolated by zeroing K/V lanes outside the head's dk
        # columns; heads write disjoint output lanes, so summing the per-head
        # contexts reconstructs concat_heads exactly.
        ctx = jnp.zeros(q.shape, jnp.float32)
        for hh in range(h):
            sel = jnp.logical_and(lane >= hh * dk, lane < (hh + 1) * dk)
            kh = jnp.where(sel, k, 0.0)
            vh = jnp.where(sel, v, 0.0)
            s = jax.lax.dot_general(
                q, kh, (((1,), (1,)), ((), ())),
                preferred_element_type=jnp.float32) * scale
            if bias is not None:
                s = s + bias
            s = s - jnp.max(s, axis=-1, keepdims=True)
            p = jnp.exp(s)
            p = p * pl.reciprocal(jnp.sum(p, axis=-1, keepdims=True),
                                  approx=True)
            ctx = ctx + jnp.dot(p, vh, preferred_element_type=jnp.float32)
        return ctx

    # ---- self attention (fused QKV matmul, lane-aligned 128-wide slices) ---
    qkv = jnp.dot(x, wqkv_s_ref[...],
                  preferred_element_type=jnp.float32) + bqkv_s_ref[...]
    q, k, v = qkv[:, :D], qkv[:, D:2 * D], qkv[:, 2 * D:]
    sa = attend(q, k, v, causal)
    sa = jnp.dot(sa, wo_s_ref[...],
                 preferred_element_type=jnp.float32) + bo_s_ref[...]
    x1 = add_ln(x, sa)

    # ---- cross attention (Q from decoder stream, fused K/V from encoder) ---
    qc = jnp.dot(x1, wq_c_ref[...],
                 preferred_element_type=jnp.float32) + bq_c_ref[...]
    kv = jnp.dot(enc, wkv_c_ref[...],
                 preferred_element_type=jnp.float32) + bkv_c_ref[...]
    kc, vc = kv[:, :D], kv[:, D:]
    ca = attend(qc, kc, vc, None)            # no mask -> no mask DMA/add
    ca = jnp.dot(ca, wo_c_ref[...],
                 preferred_element_type=jnp.float32) + bo_c_ref[...]
    x2 = add_ln(ca, x1)

    # ---- feed forward (MLP): FF1+ReLU+FF2 fused, hidden stays in vregs -----
    f = jnp.dot(x2, ff_w1_ref[...],
                preferred_element_type=jnp.float32) + ff_b1_ref[...]
    f = jnp.maximum(f, 0.0)
    f = jnp.dot(f, ff_w2_ref[...],
                preferred_element_type=jnp.float32) + ff_b2_ref[...]
    o_ref[0] = add_ln(f, x2)


def decoder_layer(x, enc, mask, lp, h, *, eps=1e-5):
    """x: (B, S_dec, D); enc: (B, S_enc, D); mask: (S_dec, S_dec)."""
    B, S_dec, D = x.shape
    S_enc = enc.shape[1]
    F = lp["ff_w1"].shape[1]
    const = lambda b: (0, 0)
    return pl.pallas_call(
        functools.partial(_decoder_layer_kernel, h=h, eps=eps),
        out_shape=jax.ShapeDtypeStruct((B, S_dec, D), jnp.float32),
        grid_spec=pltpu.PrefetchScalarGridSpec(
            num_scalar_prefetch=0,
            grid=(B,),                                    # parallel over batch
            in_specs=[
                pl.BlockSpec((1, S_dec, D), lambda b: (b, 0, 0)),
                pl.BlockSpec((1, S_enc, D), lambda b: (b, 0, 0)),
                pl.BlockSpec((S_dec, S_dec), const),
                pl.BlockSpec((D, 3 * D), const),          # resident weights
                pl.BlockSpec((1, 3 * D), const),
                pl.BlockSpec((D, D), const),
                pl.BlockSpec((1, D), const),
                pl.BlockSpec((D, D), const),
                pl.BlockSpec((1, D), const),
                pl.BlockSpec((D, 2 * D), const),
                pl.BlockSpec((1, 2 * D), const),
                pl.BlockSpec((D, D), const),
                pl.BlockSpec((1, D), const),
                pl.BlockSpec((1, D), const),
                pl.BlockSpec((1, D), const),
                pl.BlockSpec((D, F), const),
                pl.BlockSpec((1, F), const),
                pl.BlockSpec((F, D), const),
                pl.BlockSpec((1, D), const),
            ],
            out_specs=pl.BlockSpec((1, S_dec, D), lambda b: (b, 0, 0)),
        ),
        compiler_params=_PARALLEL_1D,
    )(x, enc, mask,
      lp["self_wqkv"], lp["self_bqkv"], lp["self_wo"], lp["self_bo"],
      lp["cross_wq"], lp["cross_bq"], lp["cross_wkv"], lp["cross_bkv"],
      lp["cross_wo"], lp["cross_bo"],
      lp["ln_g"], lp["ln_b"],
      lp["ff_w1"], lp["ff_b1"], lp["ff_w2"], lp["ff_b2"])


# ---------------------------------------------------------------------------
# Kernel 3: conv_final (1x1) + AvgPool1d(d_FF), algebraically collapsed:
#   mean(x @ W + b, -1) == x @ mean(W, axis=1) + mean(b)
# Implemented as a broadcast-multiply + lane reduction (no (M,F) intermediate).
# ---------------------------------------------------------------------------
def _head_kernel(x_ref, w_ref, b_ref, o_ref):
    y = jnp.sum(x_ref[...] * w_ref[...], axis=-1, keepdims=True)
    o_ref[...] = y + b_ref[...]


def final_head(x, w_row, b11):
    """x: (B, S, D); w_row: (1, D) = mean(W_conv, out-axis); b11: (1, 1)."""
    B, S, D = x.shape
    return pl.pallas_call(
        _head_kernel,
        out_shape=jax.ShapeDtypeStruct((B, S, 1), jnp.float32),
        grid_spec=pltpu.PrefetchScalarGridSpec(
            num_scalar_prefetch=0,
            grid=(1,),
            in_specs=[
                pl.BlockSpec((B, S, D), lambda i: (0, 0, 0)),
                pl.BlockSpec((1, D), lambda i: (0, 0)),
                pl.BlockSpec((1, 1), lambda i: (0, 0)),
            ],
            out_specs=pl.BlockSpec((B, S, 1), lambda i: (0, 0, 0)),
        ),
        compiler_params=_SINGLE_STEP,
    )(x, w_row, b11)


# ---------------------------------------------------------------------------
# Full Transformer forward (inference): 2 embed calls + N layer calls + 1 head
# ---------------------------------------------------------------------------
def transformer_forward(fp, cfg, inputs, outputs):
    h = cfg["h"]
    B, S_enc = inputs.shape
    S_dec = outputs.shape[1]

    enc = embed_positional(inputs, fp["emb_in_w"], fp["emb_in_b"],
                           fp["pe_enc"][:S_enc])
    dec = embed_positional(outputs, fp["emb_out_w"], fp["emb_out_b"],
                           fp["pe_dec"][:S_dec])

    # NOTE: the reference PyTorch loop writes `encoder = encoder(out_encoder)`,
    # so encoder-layer outputs are discarded; out_encoder stays the
    # pos-encoded embedding. We reproduce that (and skip the dead compute).
    out_encoder = enc
    out_decoder = dec
    mask = fp["mask_dec"][:S_dec, :S_dec]

    for layer in fp["decoder_layers"]:
        out_decoder = decoder_layer(out_decoder, out_encoder, mask, layer, h)

    return final_head(out_decoder, fp["head_w"], fp["head_b"])


# ---------------------------------------------------------------------------
# Parameter construction (matches the torch module's structure / init ranges)
# ---------------------------------------------------------------------------
def positional_encoding(max_len, d_model):
    pos = jnp.arange(max_len, dtype=jnp.float32)[:, None]
    two_i = jnp.arange(0, d_model - 1, 2, dtype=jnp.float32)[None, :]
    theta = pos / jnp.power(10000.0, two_i / d_model)
    pe = jnp.zeros((max_len, d_model), jnp.float32)
    pe = pe.at[:, 0::2].set(jnp.sin(theta))
    pe = pe.at[:, 1::2].set(jnp.cos(theta))
    return pe


def causal_mask(max_len):
    # torch: triu(ones*(-1e20), diagonal=1).int()  -> INT32_MIN above diagonal
    neg = jnp.full((max_len, max_len), float(-(2 ** 31)), jnp.float32)
    return jnp.triu(neg, k=1)


def init_params(key, cfg):
    D, F, N = cfg["d_model"], cfg["d_FF"], cfg["N"]
    keys = iter(jax.random.split(key, 64))

    def unif(shape, fan_in):
        bound = 1.0 / (fan_in ** 0.5)
        return jax.random.uniform(next(keys), shape, jnp.float32, -bound, bound)

    def lin_p(din, dout):
        return unif((din, dout), din), unif((1, dout), din)

    params = {}
    params["emb_in_w"], params["emb_in_b"] = lin_p(1, D)
    params["emb_out_w"], params["emb_out_b"] = lin_p(1, D)
    params["pe_enc"] = positional_encoding(cfg["max_seqlen_encoder"], D)
    params["pe_dec"] = positional_encoding(cfg["max_seqlen_decoder"], D)
    params["mask_dec"] = causal_mask(cfg["max_seqlen_decoder"])

    layers = []
    for _ in range(N):
        layer = {}
        for name in ("self_attn", "cross_attn"):
            wq, bq = lin_p(D, D)
            wk, bk = lin_p(D, D)
            wv, bv = lin_p(D, D)
            wo, bo = lin_p(D, D)
            layer[name] = dict(wq=wq, bq=bq, wk=wk, bk=bk,
                               wv=wv, bv=bv, wo=wo, bo=bo)
        layer["ln_g"] = jnp.ones((1, D), jnp.float32)
        layer["ln_b"] = jnp.zeros((1, D), jnp.float32)
        layer["ff_w1"], layer["ff_b1"] = lin_p(D, F)
        layer["ff_w2"], layer["ff_b2"] = lin_p(F, D)
        layers.append(layer)
    params["decoder_layers"] = layers

    params["convf_w"], params["convf_b"] = lin_p(D, F)   # 1x1 conv == linear
    return params


def fuse_params(params):
    """Re-pack torch-layout params into the fused kernel layout (done once)."""
    fp = {
        "emb_in_w": params["emb_in_w"], "emb_in_b": params["emb_in_b"],
        "emb_out_w": params["emb_out_w"], "emb_out_b": params["emb_out_b"],
        "pe_enc": params["pe_enc"], "pe_dec": params["pe_dec"],
        "mask_dec": params["mask_dec"],
        # conv_final + AvgPool collapsed: mean over the F output channels.
        "head_w": jnp.mean(params["convf_w"], axis=1)[None, :],   # (1, D)
        "head_b": jnp.mean(params["convf_b"], axis=1, keepdims=True),  # (1,1)
        "decoder_layers": [],
    }
    for layer in params["decoder_layers"]:
        sa, ca = layer["self_attn"], layer["cross_attn"]
        fp["decoder_layers"].append(dict(
            self_wqkv=jnp.concatenate([sa["wq"], sa["wk"], sa["wv"]], axis=1),
            self_bqkv=jnp.concatenate([sa["bq"], sa["bk"], sa["bv"]], axis=1),
            self_wo=sa["wo"], self_bo=sa["bo"],
            cross_wq=ca["wq"], cross_bq=ca["bq"],
            cross_wkv=jnp.concatenate([ca["wk"], ca["wv"]], axis=1),
            cross_bkv=jnp.concatenate([ca["bk"], ca["bv"]], axis=1),
            cross_wo=ca["wo"], cross_bo=ca["bo"],
            ln_g=layer["ln_g"], ln_b=layer["ln_b"],
            ff_w1=layer["ff_w1"], ff_b1=layer["ff_b1"],
            ff_w2=layer["ff_w2"], ff_b2=layer["ff_b2"],
        ))
    return fp


# ---------------------------------------------------------------------------
# Pure-JAX reference (high-precision matmuls) for correctness checking
# ---------------------------------------------------------------------------
def reference_forward(params, cfg, inputs, outputs):
    D, h = cfg["d_model"], cfg["h"]
    dk = D // h
    P = jax.lax.Precision.HIGHEST
    B, S_enc = inputs.shape
    S_dec = outputs.shape[1]

    def lin(x, w, b):
        return jnp.dot(x, w, precision=P) + b

    def mha(q_in, k_in, v_in, p, mask):
        Sq, Sk = q_in.shape[1], k_in.shape[1]
        Q = lin(q_in, p["wq"], p["bq"]).reshape(B, Sq, h, dk).transpose(0, 2, 1, 3)
        K = lin(k_in, p["wk"], p["bk"]).reshape(B, Sk, h, dk).transpose(0, 2, 1, 3)
        V = lin(v_in, p["wv"], p["bv"]).reshape(B, Sk, h, dk).transpose(0, 2, 1, 3)
        s = jnp.einsum("bhqd,bhkd->bhqk", Q, K, precision=P) / (dk ** 0.5)
        if mask is not None:
            s = s + mask[None, None]
        a = jax.nn.softmax(s, axis=-1)
        o = jnp.einsum("bhqk,bhkd->bhqd", a, V, precision=P)
        return lin(o.transpose(0, 2, 1, 3).reshape(B, Sq, D), p["wo"], p["bo"])

    def add_ln(x, y, g, b):
        z = x + y
        mu = jnp.mean(z, -1, keepdims=True)
        var = jnp.mean((z - mu) ** 2, -1, keepdims=True)
        return (z - mu) / jnp.sqrt(var + 1e-5) * g + b

    enc = inputs[..., None] * params["emb_in_w"] + params["emb_in_b"]
    enc = enc + params["pe_enc"][:S_enc][None]
    dec = outputs[..., None] * params["emb_out_w"] + params["emb_out_b"]
    dec = dec + params["pe_dec"][:S_dec][None]

    out_encoder = enc        # encoder-layer outputs discarded (as in torch code)
    out_decoder = dec
    mask = params["mask_dec"][:S_dec, :S_dec]
    for layer in params["decoder_layers"]:
        sa = mha(out_decoder, out_decoder, out_decoder, layer["self_attn"], mask)
        x1 = add_ln(out_decoder, sa, layer["ln_g"], layer["ln_b"])
        ca = mha(x1, out_encoder, out_encoder, layer["cross_attn"], None)
        x2 = add_ln(ca, x1, layer["ln_g"], layer["ln_b"])
        ff = jnp.maximum(lin(x2, layer["ff_w1"], layer["ff_b1"]), 0.0)
        ff = lin(ff, layer["ff_w2"], layer["ff_b2"])
        out_decoder = add_ln(ff, x2, layer["ln_g"], layer["ln_b"])

    y = lin(out_decoder, params["convf_w"], params["convf_b"])
    return jnp.mean(y, axis=-1, keepdims=True)


# ---------------------------------------------------------------------------
if __name__ == "__main__":
    cfg = dict(d_model=128, h=4, N=2, d_FF=64, p=0.1,
               max_seqlen_encoder=16, max_seqlen_decoder=16,
               network_type="MLP", kernel_size=1)
    B, S_enc, S_dec = 2, 8, 8

    k_params, k_in, k_out = jax.random.split(jax.random.PRNGKey(0), 3)
    params = init_params(k_params, cfg)
    fused = fuse_params(params)

    inputs = jax.random.normal(k_in, (B, S_enc), jnp.float32)     # encoder prices
    outputs = jax.random.normal(k_out, (B, S_dec), jnp.float32)   # decoder prices

    fwd = jax.jit(lambda p, a, b: transformer_forward(p, cfg, a, b))
    out = jax.block_until_ready(fwd(fused, inputs, outputs))

    ref = reference_forward(params, cfg, inputs, outputs)
    assert out.shape == (B, S_dec, 1)
    assert bool(jnp.all(jnp.isfinite(out)))
    # Tolerance covers MXU precision, the approx-reciprocal softmax and the
    # algebraic conv+pool collapse vs the HIGHEST-precision XLA reference.
    assert jnp.allclose(out, ref, atol=1e-2, rtol=1e-2), \
        f"max abs err = {float(jnp.max(jnp.abs(out - ref)))}"

    print("KERNEL_OK")
</pallas_src>

<mosaic_0001>
module attributes {stable_mosaic.version = 11 : i64} {
  func.func @_embed_pe_kernel(%arg0: i32, %arg1: memref<2x8x1xf32, #tpu.memory_space<vmem>>, %arg2: memref<1x128xf32, #tpu.memory_space<vmem>>, %arg3: memref<1x128xf32, #tpu.memory_space<vmem>>, %arg4: memref<8x128xf32, #tpu.memory_space<vmem>>, %arg5: memref<2x8x128xf32, #tpu.memory_space<vmem>>) attributes {dimension_semantics = [#tpu.dimension_semantics<arbitrary>], iteration_bounds = array<i64: 1>, scalar_prefetch = 0 : i64, scratch_operands = 0 : i64, tpu.core_type = #tpu.core_type<tc>, window_params = [{pipeline_mode = #tpu.pipeline_mode<synchronous>, transform_indices = @transform_0, window_bounds = array<i64: 2, 8, 1>}, {pipeline_mode = #tpu.pipeline_mode<synchronous>, transform_indices = @transform_1, window_bounds = array<i64: 1, 128>}, {pipeline_mode = #tpu.pipeline_mode<synchronous>, transform_indices = @transform_2, window_bounds = array<i64: 1, 128>}, {pipeline_mode = #tpu.pipeline_mode<synchronous>, transform_indices = @transform_3, window_bounds = array<i64: 8, 128>}, {pipeline_mode = #tpu.pipeline_mode<synchronous>, transform_indices = @transform_4, window_bounds = array<i64: 2, 8, 128>}]} {
    %c0 = arith.constant 0 : index
    %c0_0 = arith.constant 0 : index
    %c0_1 = arith.constant 0 : index
    %0 = vector.load %arg1[%c0, %c0_0, %c0_1] : memref<2x8x1xf32, #tpu.memory_space<vmem>>, vector<2x8x1xf32>
    %c0_2 = arith.constant 0 : index
    %c0_3 = arith.constant 0 : index
    %1 = vector.load %arg2[%c0_2, %c0_3] : memref<1x128xf32, #tpu.memory_space<vmem>>, vector<1x128xf32>
    %2 = vector.shape_cast %1 : vector<1x128xf32> to vector<1x1x128xf32>
    %3 = vector.broadcast %0 : vector<2x8x1xf32> to vector<2x8x128xf32>
    %4 = vector.broadcast %2 : vector<1x1x128xf32> to vector<2x8x128xf32>
    %5 = arith.mulf %3, %4 : vector<2x8x128xf32>
    %c0_4 = arith.constant 0 : index
    %c0_5 = arith.constant 0 : index
    %6 = vector.load %arg3[%c0_4, %c0_5] : memref<1x128xf32, #tpu.memory_space<vmem>>, vector<1x128xf32>
    %7 = vector.shape_cast %6 : vector<1x128xf32> to vector<1x1x128xf32>
    %8 = vector.broadcast %7 : vector<1x1x128xf32> to vector<2x8x128xf32>
    %9 = arith.addf %5, %8 : vector<2x8x128xf32>
    %c0_6 = arith.constant 0 : index
    %c0_7 = arith.constant 0 : index
    %10 = vector.load %arg4[%c0_6, %c0_7] : memref<8x128xf32, #tpu.memory_space<vmem>>, vector<8x128xf32>
    %11 = vector.shape_cast %10 : vector<8x128xf32> to vector<1x8x128xf32>
    %12 = vector.broadcast %11 : vector<1x8x128xf32> to vector<2x8x128xf32>
    %13 = arith.addf %9, %12 : vector<2x8x128xf32>
    %c0_8 = arith.constant 0 : index
    %c0_9 = arith.constant 0 : index
    %c0_10 = arith.constant 0 : index
    %14 = vector.load %arg5[%c0_8, %c0_9, %c0_10] : memref<2x8x128xf32, #tpu.memory_space<vmem>>, vector<2x8x128xf32>
    tpu.vector_store %arg5[%c0_8, %c0_9, %c0_10], %13 {strides = array<i32>} : memref<2x8x128xf32, #tpu.memory_space<vmem>>, vector<2x8x128xf32>,
    return
  }
  func.func @transform_0(%arg0: i32) -> (i32, i32, i32) {
    %c0_i32 = arith.constant 0 : i32
    %c0_i32_0 = arith.constant 0 : i32
    %c0_i32_1 = arith.constant 0 : i32
    %c0_i32_2 = arith.constant 0 : i32
    return %c0_i32, %c0_i32_0, %c0_i32_1 : i32, i32, i32
  }
  func.func @transform_1(%arg0: i32) -> (i32, i32) {
    %c0_i32 = arith.constant 0 : i32
    %c0_i32_0 = arith.constant 0 : i32
    %c0_i32_1 = arith.constant 0 : i32
    return %c0_i32, %c0_i32_0 : i32, i32
  }
  func.func @transform_2(%arg0: i32) -> (i32, i32) {
    %c0_i32 = arith.constant 0 : i32
    %c0_i32_0 = arith.constant 0 : i32
    %c0_i32_1 = arith.constant 0 : i32
    return %c0_i32, %c0_i32_0 : i32, i32
  }
  func.func @transform_3(%arg0: i32) -> (i32, i32) {
    %c0_i32 = arith.constant 0 : i32
    %c0_i32_0 = arith.constant 0 : i32
    %c0_i32_1 = arith.constant 0 : i32
    return %c0_i32, %c0_i32_0 : i32, i32
  }
  func.func @transform_4(%arg0: i32) -> (i32, i32, i32) {
    %c0_i32 = arith.constant 0 : i32
    %c0_i32_0 = arith.constant 0 : i32
    %c0_i32_1 = arith.constant 0 : i32
    %c0_i32_2 = arith.constant 0 : i32
    return %c0_i32, %c0_i32_0, %c0_i32_1 : i32, i32, i32
  }
}

module attributes {stable_mosaic.version = 11 : i64} {
  func.func @_head_kernel(%arg0: i32, %arg1: memref<2x8x128xf32, #tpu.memory_space<vmem>>, %arg2: memref<1x128xf32, #tpu.memory_space<vmem>>, %arg3: memref<1x1xf32, #tpu.memory_space<vmem>>, %arg4: memref<2x8x1xf32, #tpu.memory_space<vmem>>) attributes {dimension_semantics = [#tpu.dimension_semantics<arbitrary>], iteration_bounds = array<i64: 1>, scalar_prefetch = 0 : i64, scratch_operands = 0 : i64, tpu.core_type = #tpu.core_type<tc>, window_params = [{pipeline_mode = #tpu.pipeline_mode<synchronous>, transform_indices = @transform_0, window_bounds = array<i64: 2, 8, 128>}, {pipeline_mode = #tpu.pipeline_mode<synchronous>, transform_indices = @transform_1, window_bounds = array<i64: 1, 128>}, {pipeline_mode = #tpu.pipeline_mode<synchronous>, transform_indices = @transform_2, window_bounds = array<i64: 1, 1>}, {pipeline_mode = #tpu.pipeline_mode<synchronous>, transform_indices = @transform_3, window_bounds = array<i64: 2, 8, 1>}]} {
    %c0 = arith.constant 0 : index
    %c0_0 = arith.constant 0 : index
    %c0_1 = arith.constant 0 : index
    %0 = vector.load %arg1[%c0, %c0_0, %c0_1] : memref<2x8x128xf32, #tpu.memory_space<vmem>>, vector<2x8x128xf32>
    %c0_2 = arith.constant 0 : index
    %c0_3 = arith.constant 0 : index
    %1 = vector.load %arg2[%c0_2, %c0_3] : memref<1x128xf32, #tpu.memory_space<vmem>>, vector<1x128xf32>
    %2 = vector.shape_cast %1 : vector<1x128xf32> to vector<1x1x128xf32>
    %3 = vector.broadcast %2 : vector<1x1x128xf32> to vector<2x8x128xf32>
    %4 = arith.mulf %0, %3 : vector<2x8x128xf32>
    %cst = arith.constant dense<0.000000e+00> : vector<2x8xf32>
    %5 = vector.multi_reduction <add>, %4, %cst [2] : vector<2x8x128xf32> to vector<2x8xf32>
    %6 = vector.shape_cast %5 : vector<2x8xf32> to vector<2x8x1xf32>
    %c0_4 = arith.constant 0 : index
    %c0_5 = arith.constant 0 : index
    %7 = vector.load %arg3[%c0_4, %c0_5] : memref<1x1xf32, #tpu.memory_space<vmem>>, vector<1x1xf32>
    %8 = vector.shape_cast %7 : vector<1x1xf32> to vector<1x1x1xf32>
    %9 = vector.broadcast %8 : vector<1x1x1xf32> to vector<2x8x1xf32>
    %10 = arith.addf %6, %9 : vector<2x8x1xf32>
    %c0_6 = arith.constant 0 : index
    %c0_7 = arith.constant 0 : index
    %c0_8 = arith.constant 0 : index
    %11 = vector.load %arg4[%c0_6, %c0_7, %c0_8] : memref<2x8x1xf32, #tpu.memory_space<vmem>>, vector<2x8x1xf32>
    tpu.vector_store %arg4[%c0_6, %c0_7, %c0_8], %10 {strides = array<i32>} : memref<2x8x1xf32, #tpu.memory_space<vmem>>, vector<2x8x1xf32>,
    return
  }
  func.func @transform_0(%arg0: i32) -> (i32, i32, i32) {
    %c0_i32 = arith.constant 0 : i32
    %c0_i32_0 = arith.constant 0 : i32
    %c0_i32_1 = arith.constant 0 : i32
    %c0_i32_2 = arith.constant 0 : i32
    return %c0_i32, %c0_i32_0, %c0_i32_1 : i32, i32, i32
  }
  func.func @transform_1(%arg0: i32) -> (i32, i32) {
    %c0_i32 = arith.constant 0 : i32
    %c0_i32_0 = arith.constant 0 : i32
    %c0_i32_1 = arith.constant 0 : i32
    return %c0_i32, %c0_i32_0 : i32, i32
  }
  func.func @transform_2(%arg0: i32) -> (i32, i32) {
    %c0_i32 = arith.constant 0 : i32
    %c0_i32_0 = arith.constant 0 : i32
    %c0_i32_1 = arith.constant 0 : i32
    return %c0_i32, %c0_i32_0 : i32, i32
  }
  func.func @transform_3(%arg0: i32) -> (i32, i32, i32) {
    %c0_i32 = arith.constant 0 : i32
    %c0_i32_0 = arith.constant 0 : i32
    %c0_i32_1 = arith.constant 0 : i32
    %c0_i32_2 = arith.constant 0 : i32
    return %c0_i32, %c0_i32_0, %c0_i32_1 : i32, i32, i32
  }
}

module attributes {stable_mosaic.version = 11 : i64} {
  func.func @_decoder_layer_kernel(%arg0: i32, %arg1: memref<1x8x128xf32, #tpu.memory_space<vmem>>, %arg2: memref<1x8x128xf32, #tpu.memory_space<vmem>>, %arg3: memref<8x8xf32, #tpu.memory_space<vmem>>, %arg4: memref<128x384xf32, #tpu.memory_space<vmem>>, %arg5: memref<1x384xf32, #tpu.memory_space<vmem>>, %arg6: memref<128x128xf32, #tpu.memory_space<vmem>>, %arg7: memref<1x128xf32, #tpu.memory_space<vmem>>, %arg8: memref<128x128xf32, #tpu.memory_space<vmem>>, %arg9: memref<1x128xf32, #tpu.memory_space<vmem>>, %arg10: memref<128x256xf32, #tpu.memory_space<vmem>>, %arg11: memref<1x256xf32, #tpu.memory_space<vmem>>, %arg12: memref<128x128xf32, #tpu.memory_space<vmem>>, %arg13: memref<1x128xf32, #tpu.memory_space<vmem>>, %arg14: memref<1x128xf32, #tpu.memory_space<vmem>>, %arg15: memref<1x128xf32, #tpu.memory_space<vmem>>, %arg16: memref<128x64xf32, #tpu.memory_space<vmem>>, %arg17: memref<1x64xf32, #tpu.memory_space<vmem>>, %arg18: memref<64x128xf32, #tpu.memory_space<vmem>>, %arg19: memref<1x128xf32, #tpu.memory_space<vmem>>, %arg20: memref<1x8x128xf32, #tpu.memory_space<vmem>>) attributes {dimension_semantics = [#tpu.dimension_semantics<parallel>], iteration_bounds = array<i64: 2>, scalar_prefetch = 0 : i64, scratch_operands = 0 : i64, tpu.core_type = #tpu.core_type<tc>, window_params = [{transform_indices = @transform_0, window_bounds = array<i64: 1, 8, 128>}, {transform_indices = @transform_1, window_bounds = array<i64: 1, 8, 128>}, {pipeline_mode = #tpu.pipeline_mode<synchronous>, transform_indices = @transform_2, window_bounds = array<i64: 8, 8>}, {pipeline_mode = #tpu.pipeline_mode<synchronous>, transform_indices = @transform_3, window_bounds = array<i64: 128, 384>}, {pipeline_mode = #tpu.pipeline_mode<synchronous>, transform_indices = @transform_4, window_bounds = array<i64: 1, 384>}, {pipeline_mode = #tpu.pipeline_mode<synchronous>, transform_indices = @transform_5, window_bounds = array<i64: 128, 128>}, {pipeline_mode = #tpu.pipeline_mode<synchronous>, transform_indices = @transform_6, window_bounds = array<i64: 1, 128>}, {pipeline_mode = #tpu.pipeline_mode<synchronous>, transform_indices = @transform_7, window_bounds = array<i64: 128, 128>}, {pipeline_mode = #tpu.pipeline_mode<synchronous>, transform_indices = @transform_8, window_bounds = array<i64: 1, 128>}, {pipeline_mode = #tpu.pipeline_mode<synchronous>, transform_indices = @transform_9, window_bounds = array<i64: 128, 256>}, {pipeline_mode = #tpu.pipeline_mode<synchronous>, transform_indices = @transform_10, window_bounds = array<i64: 1, 256>}, {pipeline_mode = #tpu.pipeline_mode<synchronous>, transform_indices = @transform_11, window_bounds = array<i64: 128, 128>}, {pipeline_mode = #tpu.pipeline_mode<synchronous>, transform_indices = @transform_12, window_bounds = array<i64: 1, 128>}, {pipeline_mode = #tpu.pipeline_mode<synchronous>, transform_indices = @transform_13, window_bounds = array<i64: 1, 128>}, {pipeline_mode = #tpu.pipeline_mode<synchronous>, transform_indices = @transform_14, window_bounds = array<i64: 1, 128>}, {pipeline_mode = #tpu.pipeline_mode<synchronous>, transform_indices = @transform_15, window_bounds = array<i64: 128, 64>}, {pipeline_mode = #tpu.pipeline_mode<synchronous>, transform_indices = @transform_16, window_bounds = array<i64: 1, 64>}, {pipeline_mode = #tpu.pipeline_mode<synchronous>, transform_indices = @transform_17, window_bounds = array<i64: 64, 128>}, {pipeline_mode = #tpu.pipeline_mode<synchronous>, transform_indices = @transform_18, window_bounds = array<i64: 1, 128>}, {transform_indices = @transform_19, window_bounds = array<i64: 1, 8, 128>}]} {
    %c0 = arith.constant 0 : index
    %c0_0 = arith.constant 0 : index
    %c0_1 = arith.constant 0 : index
    %0 = vector.load %arg1[%c0, %c0_0, %c0_1] : memref<1x8x128xf32, #tpu.memory_space<vmem>>, vector<1x8x128xf32>
    %1 = vector.shape_cast %0 : vector<1x8x128xf32> to vector<8x128xf32>
    %c0_2 = arith.constant 0 : index
    %c0_3 = arith.constant 0 : index
    %c0_4 = arith.constant 0 : index
    %2 = vector.load %arg2[%c0_2, %c0_3, %c0_4] : memref<1x8x128xf32, #tpu.memory_space<vmem>>, vector<1x8x128xf32>
    %3 = vector.shape_cast %2 : vector<1x8x128xf32> to vector<8x128xf32>
    %c0_5 = arith.constant 0 : index
    %c0_6 = arith.constant 0 : index
    %4 = vector.load %arg3[%c0_5, %c0_6] : memref<8x8xf32, #tpu.memory_space<vmem>>, vector<8x8xf32>
    %c0_7 = arith.constant 0 : index
    %c0_8 = arith.constant 0 : index
    %5 = vector.load %arg14[%c0_7, %c0_8] : memref<1x128xf32, #tpu.memory_space<vmem>>, vector<1x128xf32>
    %c0_9 = arith.constant 0 : index
    %c0_10 = arith.constant 0 : index
    %6 = vector.load %arg15[%c0_9, %c0_10] : memref<1x128xf32, #tpu.memory_space<vmem>>, vector<1x128xf32>
    %7 = tpu.iota {dimensions = array<i32: 1>} : vector<1x128xi32>
    %c0_11 = arith.constant 0 : index
    %c0_12 = arith.constant 0 : index
    %8 = vector.load %arg4[%c0_11, %c0_12] : memref<128x384xf32, #tpu.memory_space<vmem>>, vector<128x384xf32>
    %cst = arith.constant dense<0.000000e+00> : vector<8x384xf32>
    %9 = tpu.matmul %1, %8, %cst {dimension_numbers = #tpu.dot_dimension_numbers<[1], [0], [0], [1], [0, 0, 1, 1], [], []>} : vector<8x128xf32>, vector<128x384xf32>, vector<8x384xf32> -> vector<8x384xf32>
    %c0_13 = arith.constant 0 : index
    %c0_14 = arith.constant 0 : index
    %10 = vector.load %arg5[%c0_13, %c0_14] : memref<1x384xf32, #tpu.memory_space<vmem>>, vector<1x384xf32>
    %11 = vector.broadcast %10 : vector<1x384xf32> to vector<8x384xf32>
    %12 = arith.addf %9, %11 : vector<8x384xf32>
    %13 = vector.extract_strided_slice %12 {offsets = [0, 0], sizes = [8, 128], strides = [1, 1]} : vector<8x384xf32> to vector<8x128xf32>
    %14 = vector.extract_strided_slice %12 {offsets = [0, 128], sizes = [8, 128], strides = [1, 1]} : vector<8x384xf32> to vector<8x128xf32>
    %15 = vector.extract_strided_slice %12 {offsets = [0, 256], sizes = [8, 128], strides = [1, 1]} : vector<8x384xf32> to vector<8x128xf32>
    %cst_15 = arith.constant 0.000000e+00 : f32
    %16 = vector.broadcast %cst_15 : f32 to vector<8x128xf32>
    %c0_i32 = arith.constant 0 : i32
    %17 = vector.broadcast %c0_i32 : i32 to vector<1x128xi32>
    %18 = arith.cmpi sge, %7, %17 : vector<1x128xi32>
    %c32_i32 = arith.constant 32 : i32
    %19 = vector.broadcast %c32_i32 : i32 to vector<1x128xi32>
    %20 = arith.cmpi slt, %7, %19 : vector<1x128xi32>
    %21 = arith.andi %18, %20 : vector<1x128xi1>
    %cst_16 = arith.constant 0.000000e+00 : f32
    %22 = vector.shape_cast %21 : vector<1x128xi1> to vector<1x128xi1>
    %23 = vector.broadcast %22 : vector<1x128xi1> to vector<8x128xi1>
    %24 = vector.broadcast %cst_16 : f32 to vector<8x128xf32>
    %25 = arith.select %23, %14, %24 : vector<8x128xi1>, vector<8x128xf32>
    %cst_17 = arith.constant 0.000000e+00 : f32
    %26 = vector.shape_cast %21 : vector<1x128xi1> to vector<1x128xi1>
    %27 = vector.broadcast %26 : vector<1x128xi1> to vector<8x128xi1>
    %28 = vector.broadcast %cst_17 : f32 to vector<8x128xf32>
    %29 = arith.select %27, %15, %28 : vector<8x128xi1>, vector<8x128xf32>
    %cst_18 = arith.constant dense<0.000000e+00> : vector<8x8xf32>
    %30 = tpu.matmul %13, %25, %cst_18 {dimension_numbers = #tpu.dot_dimension_numbers<[1], [1], [0], [0], [0, 0, 1, 0], [], []>} : vector<8x128xf32>, vector<8x128xf32>, vector<8x8xf32> -> vector<8x8xf32>
    %cst_19 = arith.constant 0.176776692 : f32
    %31 = vector.broadcast %cst_19 : f32 to vector<8x8xf32>
    %32 = arith.mulf %30, %31 : vector<8x8xf32>
    %33 = arith.addf %32, %4 : vector<8x8xf32>
    %cst_20 = arith.constant dense<0xFF800000> : vector<8xf32>
    %34 = vector.multi_reduction <maximumf>, %33, %cst_20 [1] : vector<8x8xf32> to vector<8xf32>
    %35 = vector.shape_cast %34 : vector<8xf32> to vector<8x1xf32>
    %36 = vector.broadcast %35 : vector<8x1xf32> to vector<8x8xf32>
    %37 = arith.subf %33, %36 : vector<8x8xf32>
    %38 = math.exp %37 : vector<8x8xf32>
    %cst_21 = arith.constant dense<0.000000e+00> : vector<8xf32>
    %39 = vector.multi_reduction <add>, %38, %cst_21 [1] : vector<8x8xf32> to vector<8xf32>
    %40 = vector.shape_cast %39 : vector<8xf32> to vector<8x1xf32>
    %41 = tpu.reciprocal %40 {approx = true} : vector<8x1xf32> -> vector<8x1xf32>
    %42 = vector.broadcast %41 : vector<8x1xf32> to vector<8x8xf32>
    %43 = arith.mulf %38, %42 : vector<8x8xf32>
    %cst_22 = arith.constant dense<0.000000e+00> : vector<8x128xf32>
    %44 = tpu.matmul %43, %29, %cst_22 {dimension_numbers = #tpu.dot_dimension_numbers<[1], [0], [0], [1], [0, 0, 1, 1], [], []>} : vector<8x8xf32>, vector<8x128xf32>, vector<8x128xf32> -> vector<8x128xf32>
    %45 = arith.addf %16, %44 : vector<8x128xf32>
    %c32_i32_23 = arith.constant 32 : i32
    %46 = vector.broadcast %c32_i32_23 : i32 to vector<1x128xi32>
    %47 = arith.cmpi sge, %7, %46 : vector<1x128xi32>
    %c64_i32 = arith.constant 64 : i32
    %48 = vector.broadcast %c64_i32 : i32 to vector<1x128xi32>
    %49 = arith.cmpi slt, %7, %48 : vector<1x128xi32>
    %50 = arith.andi %47, %49 : vector<1x128xi1>
    %cst_24 = arith.constant 0.000000e+00 : f32
    %51 = vector.shape_cast %50 : vector<1x128xi1> to vector<1x128xi1>
    %52 = vector.broadcast %51 : vector<1x128xi1> to vector<8x128xi1>
    %53 = vector.broadcast %cst_24 : f32 to vector<8x128xf32>
    %54 = arith.select %52, %14, %53 : vector<8x128xi1>, vector<8x128xf32>
    %cst_25 = arith.constant 0.000000e+00 : f32
    %55 = vector.shape_cast %50 : vector<1x128xi1> to vector<1x128xi1>
    %56 = vector.broadcast %55 : vector<1x128xi1> to vector<8x128xi1>
    %57 = vector.broadcast %cst_25 : f32 to vector<8x128xf32>
    %58 = arith.select %56, %15, %57 : vector<8x128xi1>, vector<8x128xf32>
    %cst_26 = arith.constant dense<0.000000e+00> : vector<8x8xf32>
    %59 = tpu.matmul %13, %54, %cst_26 {dimension_numbers = #tpu.dot_dimension_numbers<[1], [1], [0], [0], [0, 0, 1, 0], [], []>} : vector<8x128xf32>, vector<8x128xf32>, vector<8x8xf32> -> vector<8x8xf32>
    %cst_27 = arith.constant 0.176776692 : f32
    %60 = vector.broadcast %cst_27 : f32 to vector<8x8xf32>
    %61 = arith.mulf %59, %60 : vector<8x8xf32>
    %62 = arith.addf %61, %4 : vector<8x8xf32>
    %cst_28 = arith.constant dense<0xFF800000> : vector<8xf32>
    %63 = vector.multi_reduction <maximumf>, %62, %cst_28 [1] : vector<8x8xf32> to vector<8xf32>
    %64 = vector.shape_cast %63 : vector<8xf32> to vector<8x1xf32>
    %65 = vector.broadcast %64 : vector<8x1xf32> to vector<8x8xf32>
    %66 = arith.subf %62, %65 : vector<8x8xf32>
    %67 = math.exp %66 : vector<8x8xf32>
    %cst_29 = arith.constant dense<0.000000e+00> : vector<8xf32>
    %68 = vector.multi_reduction <add>, %67, %cst_29 [1] : vector<8x8xf32> to vector<8xf32>
    %69 = vector.shape_cast %68 : vector<8xf32> to vector<8x1xf32>
    %70 = tpu.reciprocal %69 {approx = true} : vector<8x1xf32> -> vector<8x1xf32>
    %71 = vector.broadcast %70 : vector<8x1xf32> to vector<8x8xf32>
    %72 = arith.mulf %67, %71 : vector<8x8xf32>
    %cst_30 = arith.constant dense<0.000000e+00> : vector<8x128xf32>
    %73 = tpu.matmul %72, %58, %cst_30 {dimension_numbers = #tpu.dot_dimension_numbers<[1], [0], [0], [1], [0, 0, 1, 1], [], []>} : vector<8x8xf32>, vector<8x128xf32>, vector<8x128xf32> -> vector<8x128xf32>
    %74 = arith.addf %45, %73 : vector<8x128xf32>
    %c64_i32_31 = arith.constant 64 : i32
    %75 = vector.broadcast %c64_i32_31 : i32 to vector<1x128xi32>
    %76 = arith.cmpi sge, %7, %75 : vector<1x128xi32>
    %c96_i32 = arith.constant 96 : i32
    %77 = vector.broadcast %c96_i32 : i32 to vector<1x128xi32>
    %78 = arith.cmpi slt, %7, %77 : vector<1x128xi32>
    %79 = arith.andi %76, %78 : vector<1x128xi1>
    %cst_32 = arith.constant 0.000000e+00 : f32
    %80 = vector.shape_cast %79 : vector<1x128xi1> to vector<1x128xi1>
    %81 = vector.broadcast %80 : vector<1x128xi1> to vector<8x128xi1>
    %82 = vector.broadcast %cst_32 : f32 to vector<8x128xf32>
    %83 = arith.select %81, %14, %82 : vector<8x128xi1>, vector<8x128xf32>
    %cst_33 = arith.constant 0.000000e+00 : f32
    %84 = vector.shape_cast %79 : vector<1x128xi1> to vector<1x128xi1>
    %85 = vector.broadcast %84 : vector<1x128xi1> to vector<8x128xi1>
    %86 = vector.broadcast %cst_33 : f32 to vector<8x128xf32>
    %87 = arith.select %85, %15, %86 : vector<8x128xi1>, vector<8x128xf32>
    %cst_34 = arith.constant dense<0.000000e+00> : vector<8x8xf32>
    %88 = tpu.matmul %13, %83, %cst_34 {dimension_numbers = #tpu.dot_dimension_numbers<[1], [1], [0], [0], [0, 0, 1, 0], [], []>} : vector<8x128xf32>, vector<8x128xf32>, vector<8x8xf32> -> vector<8x8xf32>
    %cst_35 = arith.constant 0.176776692 : f32
    %89 = vector.broadcast %cst_35 : f32 to vector<8x8xf32>
    %90 = arith.mulf %88, %89 : vector<8x8xf32>
    %91 = arith.addf %90, %4 : vector<8x8xf32>
    %cst_36 = arith.constant dense<0xFF800000> : vector<8xf32>
    %92 = vector.multi_reduction <maximumf>, %91, %cst_36 [1] : vector<8x8xf32> to vector<8xf32>
    %93 = vector.shape_cast %92 : vector<8xf32> to vector<8x1xf32>
    %94 = vector.broadcast %93 : vector<8x1xf32> to vector<8x8xf32>
    %95 = arith.subf %91, %94 : vector<8x8xf32>
    %96 = math.exp %95 : vector<8x8xf32>
    %cst_37 = arith.constant dense<0.000000e+00> : vector<8xf32>
    %97 = vector.multi_reduction <add>, %96, %cst_37 [1] : vector<8x8xf32> to vector<8xf32>
    %98 = vector.shape_cast %97 : vector<8xf32> to vector<8x1xf32>
    %99 = tpu.reciprocal %98 {approx = true} : vector<8x1xf32> -> vector<8x1xf32>
    %100 = vector.broadcast %99 : vector<8x1xf32> to vector<8x8xf32>
    %101 = arith.mulf %96, %100 : vector<8x8xf32>
    %cst_38 = arith.constant dense<0.000000e+00> : vector<8x128xf32>
    %102 = tpu.matmul %101, %87, %cst_38 {dimension_numbers = #tpu.dot_dimension_numbers<[1], [0], [0], [1], [0, 0, 1, 1], [], []>} : vector<8x8xf32>, vector<8x128xf32>, vector<8x128xf32> -> vector<8x128xf32>
    %103 = arith.addf %74, %102 : vector<8x128xf32>
    %c96_i32_39 = arith.constant 96 : i32
    %104 = vector.broadcast %c96_i32_39 : i32 to vector<1x128xi32>
    %105 = arith.cmpi sge, %7, %104 : vector<1x128xi32>
    %c128_i32 = arith.constant 128 : i32
    %106 = vector.broadcast %c128_i32 : i32 to vector<1x128xi32>
    %107 = arith.cmpi slt, %7, %106 : vector<1x128xi32>
    %108 = arith.andi %105, %107 : vector<1x128xi1>
    %cst_40 = arith.constant 0.000000e+00 : f32
    %109 = vector.shape_cast %108 : vector<1x128xi1> to vector<1x128xi1>
    %110 = vector.broadcast %109 : vector<1x128xi1> to vector<8x128xi1>
    %111 = vector.broadcast %cst_40 : f32 to vector<8x128xf32>
    %112 = arith.select %110, %14, %111 : vector<8x128xi1>, vector<8x128xf32>
    %cst_41 = arith.constant 0.000000e+00 : f32
    %113 = vector.shape_cast %108 : vector<1x128xi1> to vector<1x128xi1>
    %114 = vector.broadcast %113 : vector<1x128xi1> to vector<8x128xi1>
    %115 = vector.broadcast %cst_41 : f32 to vector<8x128xf32>
    %116 = arith.select %114, %15, %115 : vector<8x128xi1>, vector<8x128xf32>
    %cst_42 = arith.constant dense<0.000000e+00> : vector<8x8xf32>
    %117 = tpu.matmul %13, %112, %cst_42 {dimension_numbers = #tpu.dot_dimension_numbers<[1], [1], [0], [0], [0, 0, 1, 0], [], []>} : vector<8x128xf32>, vector<8x128xf32>, vector<8x8xf32> -> vector<8x8xf32>
    %cst_43 = arith.constant 0.176776692 : f32
    %118 = vector.broadcast %cst_43 : f32 to vector<8x8xf32>
    %119 = arith.mulf %117, %118 : vector<8x8xf32>
    %120 = arith.addf %119, %4 : vector<8x8xf32>
    %cst_44 = arith.constant dense<0xFF800000> : vector<8xf32>
    %121 = vector.multi_reduction <maximumf>, %120, %cst_44 [1] : vector<8x8xf32> to vector<8xf32>
    %122 = vector.shape_cast %121 : vector<8xf32> to vector<8x1xf32>
    %123 = vector.broadcast %122 : vector<8x1xf32> to vector<8x8xf32>
    %124 = arith.subf %120, %123 : vector<8x8xf32>
    %125 = math.exp %124 : vector<8x8xf32>
    %cst_45 = arith.constant dense<0.000000e+00> : vector<8xf32>
    %126 = vector.multi_reduction <add>, %125, %cst_45 [1] : vector<8x8xf32> to vector<8xf32>
    %127 = vector.shape_cast %126 : vector<8xf32> to vector<8x1xf32>
    %128 = tpu.reciprocal %127 {approx = true} : vector<8x1xf32> -> vector<8x1xf32>
    %129 = vector.broadcast %128 : vector<8x1xf32> to vector<8x8xf32>
    %130 = arith.mulf %125, %129 : vector<8x8xf32>
    %cst_46 = arith.constant dense<0.000000e+00> : vector<8x128xf32>
    %131 = tpu.matmul %130, %116, %cst_46 {dimension_numbers = #tpu.dot_dimension_numbers<[1], [0], [0], [1], [0, 0, 1, 1], [], []>} : vector<8x8xf32>, vector<8x128xf32>, vector<8x128xf32> -> vector<8x128xf32>
    %132 = arith.addf %103, %131 : vector<8x128xf32>
    %c0_47 = arith.constant 0 : index
    %c0_48 = arith.constant 0 : index
    %133 = vector.load %arg6[%c0_47, %c0_48] : memref<128x128xf32, #tpu.memory_space<vmem>>, vector<128x128xf32>
    %cst_49 = arith.constant dense<0.000000e+00> : vector<8x128xf32>
    %134 = tpu.matmul %132, %133, %cst_49 {dimension_numbers = #tpu.dot_dimension_numbers<[1], [0], [0], [1], [0, 0, 1, 1], [], []>} : vector<8x128xf32>, vector<128x128xf32>, vector<8x128xf32> -> vector<8x128xf32>
    %c0_50 = arith.constant 0 : index
    %c0_51 = arith.constant 0 : index
    %135 = vector.load %arg7[%c0_50, %c0_51] : memref<1x128xf32, #tpu.memory_space<vmem>>, vector<1x128xf32>
    %136 = vector.broadcast %135 : vector<1x128xf32> to vector<8x128xf32>
    %137 = arith.addf %134, %136 : vector<8x128xf32>
    %138 = arith.addf %1, %137 : vector<8x128xf32>
    %cst_52 = arith.constant dense<0.000000e+00> : vector<8xf32>
    %139 = vector.multi_reduction <add>, %138, %cst_52 [1] : vector<8x128xf32> to vector<8xf32>
    %140 = vector.shape_cast %139 : vector<8xf32> to vector<8x1xf32>
    %cst_53 = arith.constant 1.280000e+02 : f32
    %141 = vector.broadcast %cst_53 : f32 to vector<8x1xf32>
    %142 = arith.divf %140, %141 : vector<8x1xf32>
    %143 = vector.broadcast %142 : vector<8x1xf32> to vector<8x128xf32>
    %144 = arith.subf %138, %143 : vector<8x128xf32>
    %145 = arith.mulf %144, %144 : vector<8x128xf32>
    %cst_54 = arith.constant dense<0.000000e+00> : vector<8xf32>
    %146 = vector.multi_reduction <add>, %145, %cst_54 [1] : vector<8x128xf32> to vector<8xf32>
    %147 = vector.shape_cast %146 : vector<8xf32> to vector<8x1xf32>
    %cst_55 = arith.constant 1.280000e+02 : f32
    %148 = vector.broadcast %cst_55 : f32 to vector<8x1xf32>
    %149 = arith.divf %147, %148 : vector<8x1xf32>
    %cst_56 = arith.constant 9.99999974E-6 : f32
    %150 = vector.broadcast %cst_56 : f32 to vector<8x1xf32>
    %151 = arith.addf %149, %150 : vector<8x1xf32>
    %152 = math.rsqrt %151 : vector<8x1xf32>
    %153 = vector.broadcast %152 : vector<8x1xf32> to vector<8x128xf32>
    %154 = arith.mulf %144, %153 : vector<8x128xf32>
    %155 = vector.broadcast %5 : vector<1x128xf32> to vector<8x128xf32>
    %156 = arith.mulf %154, %155 : vector<8x128xf32>
    %157 = vector.broadcast %6 : vector<1x128xf32> to vector<8x128xf32>
    %158 = arith.addf %156, %157 : vector<8x128xf32>
    %c0_57 = arith.constant 0 : index
    %c0_58 = arith.constant 0 : index
    %159 = vector.load %arg8[%c0_57, %c0_58] : memref<128x128xf32, #tpu.memory_space<vmem>>, vector<128x128xf32>
    %cst_59 = arith.constant dense<0.000000e+00> : vector<8x128xf32>
    %160 = tpu.matmul %158, %159, %cst_59 {dimension_numbers = #tpu.dot_dimension_numbers<[1], [0], [0], [1], [0, 0, 1, 1], [], []>} : vector<8x128xf32>, vector<128x128xf32>, vector<8x128xf32> -> vector<8x128xf32>
    %c0_60 = arith.constant 0 : index
    %c0_61 = arith.constant 0 : index
    %161 = vector.load %arg9[%c0_60, %c0_61] : memref<1x128xf32, #tpu.memory_space<vmem>>, vector<1x128xf32>
    %162 = vector.broadcast %161 : vector<1x128xf32> to vector<8x128xf32>
    %163 = arith.addf %160, %162 : vector<8x128xf32>
    %c0_62 = arith.constant 0 : index
    %c0_63 = arith.constant 0 : index
    %164 = vector.load %arg10[%c0_62, %c0_63] : memref<128x256xf32, #tpu.memory_space<vmem>>, vector<128x256xf32>
    %cst_64 = arith.constant dense<0.000000e+00> : vector<8x256xf32>
    %165 = tpu.matmul %3, %164, %cst_64 {dimension_numbers = #tpu.dot_dimension_numbers<[1], [0], [0], [1], [0, 0, 1, 1], [], []>} : vector<8x128xf32>, vector<128x256xf32>, vector<8x256xf32> -> vector<8x256xf32>
    %c0_65 = arith.constant 0 : index
    %c0_66 = arith.constant 0 : index
    %166 = vector.load %arg11[%c0_65, %c0_66] : memref<1x256xf32, #tpu.memory_space<vmem>>, vector<1x256xf32>
    %167 = vector.broadcast %166 : vector<1x256xf32> to vector<8x256xf32>
    %168 = arith.addf %165, %167 : vector<8x256xf32>
    %169 = vector.extract_strided_slice %168 {offsets = [0, 0], sizes = [8, 128], strides = [1, 1]} : vector<8x256xf32> to vector<8x128xf32>
    %170 = vector.extract_strided_slice %168 {offsets = [0, 128], sizes = [8, 128], strides = [1, 1]} : vector<8x256xf32> to vector<8x128xf32>
    %cst_67 = arith.constant 0.000000e+00 : f32
    %171 = vector.broadcast %cst_67 : f32 to vector<8x128xf32>
    %c0_i32_68 = arith.constant 0 : i32
    %172 = vector.broadcast %c0_i32_68 : i32 to vector<1x128xi32>
    %173 = arith.cmpi sge, %7, %172 : vector<1x128xi32>
    %c32_i32_69 = arith.constant 32 : i32
    %174 = vector.broadcast %c32_i32_69 : i32 to vector<1x128xi32>
    %175 = arith.cmpi slt, %7, %174 : vector<1x128xi32>
    %176 = arith.andi %173, %175 : vector<1x128xi1>
    %cst_70 = arith.constant 0.000000e+00 : f32
    %177 = vector.shape_cast %176 : vector<1x128xi1> to vector<1x128xi1>
    %178 = vector.broadcast %177 : vector<1x128xi1> to vector<8x128xi1>
    %179 = vector.broadcast %cst_70 : f32 to vector<8x128xf32>
    %180 = arith.select %178, %169, %179 : vector<8x128xi1>, vector<8x128xf32>
    %cst_71 = arith.constant 0.000000e+00 : f32
    %181 = vector.shape_cast %176 : vector<1x128xi1> to vector<1x128xi1>
    %182 = vector.broadcast %181 : vector<1x128xi1> to vector<8x128xi1>
    %183 = vector.broadcast %cst_71 : f32 to vector<8x128xf32>
    %184 = arith.select %182, %170, %183 : vector<8x128xi1>, vector<8x128xf32>
    %cst_72 = arith.constant dense<0.000000e+00> : vector<8x8xf32>
    %185 = tpu.matmul %163, %180, %cst_72 {dimension_numbers = #tpu.dot_dimension_numbers<[1], [1], [0], [0], [0, 0, 1, 0], [], []>} : vector<8x128xf32>, vector<8x128xf32>, vector<8x8xf32> -> vector<8x8xf32>
    %cst_73 = arith.constant 0.176776692 : f32
    %186 = vector.broadcast %cst_73 : f32 to vector<8x8xf32>
    %187 = arith.mulf %185, %186 : vector<8x8xf32>
    %cst_74 = arith.constant dense<0xFF800000> : vector<8xf32>
    %188 = vector.multi_reduction <maximumf>, %187, %cst_74 [1] : vector<8x8xf32> to vector<8xf32>
    %189 = vector.shape_cast %188 : vector<8xf32> to vector<8x1xf32>
    %190 = vector.broadcast %189 : vector<8x1xf32> to vector<8x8xf32>
    %191 = arith.subf %187, %190 : vector<8x8xf32>
    %192 = math.exp %191 : vector<8x8xf32>
    %cst_75 = arith.constant dense<0.000000e+00> : vector<8xf32>
    %193 = vector.multi_reduction <add>, %192, %cst_75 [1] : vector<8x8xf32> to vector<8xf32>
    %194 = vector.shape_cast %193 : vector<8xf32> to vector<8x1xf32>
    %195 = tpu.reciprocal %194 {approx = true} : vector<8x1xf32> -> vector<8x1xf32>
    %196 = vector.broadcast %195 : vector<8x1xf32> to vector<8x8xf32>
    %197 = arith.mulf %192, %196 : vector<8x8xf32>
    %cst_76 = arith.constant dense<0.000000e+00> : vector<8x128xf32>
    %198 = tpu.matmul %197, %184, %cst_76 {dimension_numbers = #tpu.dot_dimension_numbers<[1], [0], [0], [1], [0, 0, 1, 1], [], []>} : vector<8x8xf32>, vector<8x128xf32>, vector<8x128xf32> -> vector<8x128xf32>
    %199 = arith.addf %171, %198 : vector<8x128xf32>
    %c32_i32_77 = arith.constant 32 : i32
    %200 = vector.broadcast %c32_i32_77 : i32 to vector<1x128xi32>
    %201 = arith.cmpi sge, %7, %200 : vector<1x128xi32>
    %c64_i32_78 = arith.constant 64 : i32
    %202 = vector.broadcast %c64_i32_78 : i32 to vector<1x128xi32>
    %203 = arith.cmpi slt, %7, %202 : vector<1x128xi32>
    %204 = arith.andi %201, %203 : vector<1x128xi1>
    %cst_79 = arith.constant 0.000000e+00 : f32
    %205 = vector.shape_cast %204 : vector<1x128xi1> to vector<1x128xi1>
    %206 = vector.broadcast %205 : vector<1x128xi1> to vector<8x128xi1>
    %207 = vector.broadcast %cst_79 : f32 to vector<8x128xf32>
    %208 = arith.select %206, %169, %207 : vector<8x128xi1>, vector<8x128xf32>
    %cst_80 = arith.constant 0.000000e+00 : f32
    %209 = vector.shape_cast %204 : vector<1x128xi1> to vector<1x128xi1>
    %210 = vector.broadcast %209 : vector<1x128xi1> to vector<8x128xi1>
    %211 = vector.broadcast %cst_80 : f32 to vector<8x128xf32>
    %212 = arith.select %210, %170, %211 : vector<8x128xi1>, vector<8x128xf32>
    %cst_81 = arith.constant dense<0.000000e+00> : vector<8x8xf32>
    %213 = tpu.matmul %163, %208, %cst_81 {dimension_numbers = #tpu.dot_dimension_numbers<[1], [1], [0], [0], [0, 0, 1, 0], [], []>} : vector<8x128xf32>, vector<8x128xf32>, vector<8x8xf32> -> vector<8x8xf32>
    %cst_82 = arith.constant 0.176776692 : f32
    %214 = vector.broadcast %cst_82 : f32 to vector<8x8xf32>
    %215 = arith.mulf %213, %214 : vector<8x8xf32>
    %cst_83 = arith.constant dense<0xFF800000> : vector<8xf32>
    %216 = vector.multi_reduction <maximumf>, %215, %cst_83 [1] : vector<8x8xf32> to vector<8xf32>
    %217 = vector.shape_cast %216 : vector<8xf32> to vector<8x1xf32>
    %218 = vector.broadcast %217 : vector<8x1xf32> to vector<8x8xf32>
    %219 = arith.subf %215, %218 : vector<8x8xf32>
    %220 = math.exp %219 : vector<8x8xf32>
    %cst_84 = arith.constant dense<0.000000e+00> : vector<8xf32>
    %221 = vector.multi_reduction <add>, %220, %cst_84 [1] : vector<8x8xf32> to vector<8xf32>
    %222 = vector.shape_cast %221 : vector<8xf32> to vector<8x1xf32>
    %223 = tpu.reciprocal %222 {approx = true} : vector<8x1xf32> -> vector<8x1xf32>
    %224 = vector.broadcast %223 : vector<8x1xf32> to vector<8x8xf32>
    %225 = arith.mulf %220, %224 : vector<8x8xf32>
    %cst_85 = arith.constant dense<0.000000e+00> : vector<8x128xf32>
    %226 = tpu.matmul %225, %212, %cst_85 {dimension_numbers = #tpu.dot_dimension_numbers<[1], [0], [0], [1], [0, 0, 1, 1], [], []>} : vector<8x8xf32>, vector<8x128xf32>, vector<8x128xf32> -> vector<8x128xf32>
    %227 = arith.addf %199, %226 : vector<8x128xf32>
    %c64_i32_86 = arith.constant 64 : i32
    %228 = vector.broadcast %c64_i32_86 : i32 to vector<1x128xi32>
    %229 = arith.cmpi sge, %7, %228 : vector<1x128xi32>
    %c96_i32_87 = arith.constant 96 : i32
    %230 = vector.broadcast %c96_i32_87 : i32 to vector<1x128xi32>
    %231 = arith.cmpi slt, %7, %230 : vector<1x128xi32>
    %232 = arith.andi %229, %231 : vector<1x128xi1>
    %cst_88 = arith.constant 0.000000e+00 : f32
    %233 = vector.shape_cast %232 : vector<1x128xi1> to vector<1x128xi1>
    %234 = vector.broadcast %233 : vector<1x128xi1> to vector<8x128xi1>
    %235 = vector.broadcast %cst_88 : f32 to vector<8x128xf32>
    %236 = arith.select %234, %169, %235 : vector<8x128xi1>, vector<8x128xf32>
    %cst_89 = arith.constant 0.000000e+00 : f32
    %237 = vector.shape_cast %232 : vector<1x128xi1> to vector<1x128xi1>
    %238 = vector.broadcast %237 : vector<1x128xi1> to vector<8x128xi1>
    %239 = vector.broadcast %cst_89 : f32 to vector<8x128xf32>
    %240 = arith.select %238, %170, %239 : vector<8x128xi1>, vector<8x128xf32>
    %cst_90 = arith.constant dense<0.000000e+00> : vector<8x8xf32>
    %241 = tpu.matmul %163, %236, %cst_90 {dimension_numbers = #tpu.dot_dimension_numbers<[1], [1], [0], [0], [0, 0, 1, 0], [], []>} : vector<8x128xf32>, vector<8x128xf32>, vector<8x8xf32> -> vector<8x8xf32>
    %cst_91 = arith.constant 0.176776692 : f32
    %242 = vector.broadcast %cst_91 : f32 to vector<8x8xf32>
    %243 = arith.mulf %241, %242 : vector<8x8xf32>
    %cst_92 = arith.constant dense<0xFF800000> : vector<8xf32>
    %244 = vector.multi_reduction <maximumf>, %243, %cst_92 [1] : vector<8x8xf32> to vector<8xf32>
    %245 = vector.shape_cast %244 : vector<8xf32> to vector<8x1xf32>
    %246 = vector.broadcast %245 : vector<8x1xf32> to vector<8x8xf32>
    %247 = arith.subf %243, %246 : vector<8x8xf32>
    %248 = math.exp %247 : vector<8x8xf32>
    %cst_93 = arith.constant dense<0.000000e+00> : vector<8xf32>
    %249 = vector.multi_reduction <add>, %248, %cst_93 [1] : vector<8x8xf32> to vector<8xf32>
    %250 = vector.shape_cast %249 : vector<8xf32> to vector<8x1xf32>
    %251 = tpu.reciprocal %250 {approx = true} : vector<8x1xf32> -> vector<8x1xf32>
    %252 = vector.broadcast %251 : vector<8x1xf32> to vector<8x8xf32>
    %253 = arith.mulf %248, %252 : vector<8x8xf32>
    %cst_94 = arith.constant dense<0.000000e+00> : vector<8x128xf32>
    %254 = tpu.matmul %253, %240, %cst_94 {dimension_numbers = #tpu.dot_dimension_numbers<[1], [0], [0], [1], [0, 0, 1, 1], [], []>} : vector<8x8xf32>, vector<8x128xf32>, vector<8x128xf32> -> vector<8x128xf32>
    %255 = arith.addf %227, %254 : vector<8x128xf32>
    %c96_i32_95 = arith.constant 96 : i32
    %256 = vector.broadcast %c96_i32_95 : i32 to vector<1x128xi32>
    %257 = arith.cmpi sge, %7, %256 : vector<1x128xi32>
    %c128_i32_96 = arith.constant 128 : i32
    %258 = vector.broadcast %c128_i32_96 : i32 to vector<1x128xi32>
    %259 = arith.cmpi slt, %7, %258 : vector<1x128xi32>
    %260 = arith.andi %257, %259 : vector<1x128xi1>
    %cst_97 = arith.constant 0.000000e+00 : f32
    %261 = vector.shape_cast %260 : vector<1x128xi1> to vector<1x128xi1>
    %262 = vector.broadcast %261 : vector<1x128xi1> to vector<8x128xi1>
    %263 = vector.broadcast %cst_97 : f32 to vector<8x128xf32>
    %264 = arith.select %262, %169, %263 : vector<8x128xi1>, vector<8x128xf32>
    %cst_98 = arith.constant 0.000000e+00 : f32
    %265 = vector.shape_cast %260 : vector<1x128xi1> to vector<1x128xi1>
    %266 = vector.broadcast %265 : vector<1x128xi1> to vector<8x128xi1>
    %267 = vector.broadcast %cst_98 : f32 to vector<8x128xf32>
    %268 = arith.select %266, %170, %267 : vector<8x128xi1>, vector<8x128xf32>
    %cst_99 = arith.constant dense<0.000000e+00> : vector<8x8xf32>
    %269 = tpu.matmul %163, %264, %cst_99 {dimension_numbers = #tpu.dot_dimension_numbers<[1], [1], [0], [0], [0, 0, 1, 0], [], []>} : vector<8x128xf32>, vector<8x128xf32>, vector<8x8xf32> -> vector<8x8xf32>
    %cst_100 = arith.constant 0.176776692 : f32
    %270 = vector.broadcast %cst_100 : f32 to vector<8x8xf32>
    %271 = arith.mulf %269, %270 : vector<8x8xf32>
    %cst_101 = arith.constant dense<0xFF800000> : vector<8xf32>
    %272 = vector.multi_reduction <maximumf>, %271, %cst_101 [1] : vector<8x8xf32> to vector<8xf32>
    %273 = vector.shape_cast %272 : vector<8xf32> to vector<8x1xf32>
    %274 = vector.broadcast %273 : vector<8x1xf32> to vector<8x8xf32>
    %275 = arith.subf %271, %274 : vector<8x8xf32>
    %276 = math.exp %275 : vector<8x8xf32>
    %cst_102 = arith.constant dense<0.000000e+00> : vector<8xf32>
    %277 = vector.multi_reduction <add>, %276, %cst_102 [1] : vector<8x8xf32> to vector<8xf32>
    %278 = vector.shape_cast %277 : vector<8xf32> to vector<8x1xf32>
    %279 = tpu.reciprocal %278 {approx = true} : vector<8x1xf32> -> vector<8x1xf32>
    %280 = vector.broadcast %279 : vector<8x1xf32> to vector<8x8xf32>
    %281 = arith.mulf %276, %280 : vector<8x8xf32>
    %cst_103 = arith.constant dense<0.000000e+00> : vector<8x128xf32>
    %282 = tpu.matmul %281, %268, %cst_103 {dimension_numbers = #tpu.dot_dimension_numbers<[1], [0], [0], [1], [0, 0, 1, 1], [], []>} : vector<8x8xf32>, vector<8x128xf32>, vector<8x128xf32> -> vector<8x128xf32>
    %283 = arith.addf %255, %282 : vector<8x128xf32>
    %c0_104 = arith.constant 0 : index
    %c0_105 = arith.constant 0 : index
    %284 = vector.load %arg12[%c0_104, %c0_105] : memref<128x128xf32, #tpu.memory_space<vmem>>, vector<128x128xf32>
    %cst_106 = arith.constant dense<0.000000e+00> : vector<8x128xf32>
    %285 = tpu.matmul %283, %284, %cst_106 {dimension_numbers = #tpu.dot_dimension_numbers<[1], [0], [0], [1], [0, 0, 1, 1], [], []>} : vector<8x128xf32>, vector<128x128xf32>, vector<8x128xf32> -> vector<8x128xf32>
    %c0_107 = arith.constant 0 : index
    %c0_108 = arith.constant 0 : index
    %286 = vector.load %arg13[%c0_107, %c0_108] : memref<1x128xf32, #tpu.memory_space<vmem>>, vector<1x128xf32>
    %287 = vector.broadcast %286 : vector<1x128xf32> to vector<8x128xf32>
    %288 = arith.addf %285, %287 : vector<8x128xf32>
    %289 = arith.addf %288, %158 : vector<8x128xf32>
    %cst_109 = arith.constant dense<0.000000e+00> : vector<8xf32>
    %290 = vector.multi_reduction <add>, %289, %cst_109 [1] : vector<8x128xf32> to vector<8xf32>
    %291 = vector.shape_cast %290 : vector<8xf32> to vector<8x1xf32>
    %cst_110 = arith.constant 1.280000e+02 : f32
    %292 = vector.broadcast %cst_110 : f32 to vector<8x1xf32>
    %293 = arith.divf %291, %292 : vector<8x1xf32>
    %294 = vector.broadcast %293 : vector<8x1xf32> to vector<8x128xf32>
    %295 = arith.subf %289, %294 : vector<8x128xf32>
    %296 = arith.mulf %295, %295 : vector<8x128xf32>
    %cst_111 = arith.constant dense<0.000000e+00> : vector<8xf32>
    %297 = vector.multi_reduction <add>, %296, %cst_111 [1] : vector<8x128xf32> to vector<8xf32>
    %298 = vector.shape_cast %297 : vector<8xf32> to vector<8x1xf32>
    %cst_112 = arith.constant 1.280000e+02 : f32
    %299 = vector.broadcast %cst_112 : f32 to vector<8x1xf32>
    %300 = arith.divf %298, %299 : vector<8x1xf32>
    %cst_113 = arith.constant 9.99999974E-6 : f32
    %301 = vector.broadcast %cst_113 : f32 to vector<8x1xf32>
    %302 = arith.addf %300, %301 : vector<8x1xf32>
    %303 = math.rsqrt %302 : vector<8x1xf32>
    %304 = vector.broadcast %303 : vector<8x1xf32> to vector<8x128xf32>
    %305 = arith.mulf %295, %304 : vector<8x128xf32>
    %306 = vector.broadcast %5 : vector<1x128xf32> to vector<8x128xf32>
    %307 = arith.mulf %305, %306 : vector<8x128xf32>
    %308 = vector.broadcast %6 : vector<1x128xf32> to vector<8x128xf32>
    %309 = arith.addf %307, %308 : vector<8x128xf32>
    %c0_114 = arith.constant 0 : index
    %c0_115 = arith.constant 0 : index
    %310 = vector.load %arg16[%c0_114, %c0_115] : memref<128x64xf32, #tpu.memory_space<vmem>>, vector<128x64xf32>
    %cst_116 = arith.constant dense<0.000000e+00> : vector<8x64xf32>
    %311 = tpu.matmul %309, %310, %cst_116 {dimension_numbers = #tpu.dot_dimension_numbers<[1], [0], [0], [1], [0, 0, 1, 1], [], []>} : vector<8x128xf32>, vector<128x64xf32>, vector<8x64xf32> -> vector<8x64xf32>
    %c0_117 = arith.constant 0 : index
    %c0_118 = arith.constant 0 : index
    %312 = vector.load %arg17[%c0_117, %c0_118] : memref<1x64xf32, #tpu.memory_space<vmem>>, vector<1x64xf32>
    %313 = vector.broadcast %312 : vector<1x64xf32> to vector<8x64xf32>
    %314 = arith.addf %311, %313 : vector<8x64xf32>
    %cst_119 = arith.constant 0.000000e+00 : f32
    %315 = vector.broadcast %cst_119 : f32 to vector<8x64xf32>
    %316 = arith.maximumf %314, %315 : vector<8x64xf32>
    %c0_120 = arith.constant 0 : index
    %c0_121 = arith.constant 0 : index
    %317 = vector.load %arg18[%c0_120, %c0_121] : memref<64x128xf32, #tpu.memory_space<vmem>>, vector<64x128xf32>
    %cst_122 = arith.constant dense<0.000000e+00> : vector<8x128xf32>
    %318 = tpu.matmul %316, %317, %cst_122 {dimension_numbers = #tpu.dot_dimension_numbers<[1], [0], [0], [1], [0, 0, 1, 1], [], []>} : vector<8x64xf32>, vector<64x128xf32>, vector<8x128xf32> -> vector<8x128xf32>
    %c0_123 = arith.constant 0 : index
    %c0_124 = arith.constant 0 : index
    %319 = vector.load %arg19[%c0_123, %c0_124] : memref<1x128xf32, #tpu.memory_space<vmem>>, vector<1x128xf32>
    %320 = vector.broadcast %319 : vector<1x128xf32> to vector<8x128xf32>
    %321 = arith.addf %318, %320 : vector<8x128xf32>
    %322 = arith.addf %321, %309 : vector<8x128xf32>
    %cst_125 = arith.constant dense<0.000000e+00> : vector<8xf32>
    %323 = vector.multi_reduction <add>, %322, %cst_125 [1] : vector<8x128xf32> to vector<8xf32>
    %324 = vector.shape_cast %323 : vector<8xf32> to vector<8x1xf32>
    %cst_126 = arith.constant 1.280000e+02 : f32
    %325 = vector.broadcast %cst_126 : f32 to vector<8x1xf32>
    %326 = arith.divf %324, %325 : vector<8x1xf32>
    %327 = vector.broadcast %326 : vector<8x1xf32> to vector<8x128xf32>
    %328 = arith.subf %322, %327 : vector<8x128xf32>
    %329 = arith.mulf %328, %328 : vector<8x128xf32>
    %cst_127 = arith.constant dense<0.000000e+00> : vector<8xf32>
    %330 = vector.multi_reduction <add>, %329, %cst_127 [1] : vector<8x128xf32> to vector<8xf32>
    %331 = vector.shape_cast %330 : vector<8xf32> to vector<8x1xf32>
    %cst_128 = arith.constant 1.280000e+02 : f32
    %332 = vector.broadcast %cst_128 : f32 to vector<8x1xf32>
    %333 = arith.divf %331, %332 : vector<8x1xf32>
    %cst_129 = arith.constant 9.99999974E-6 : f32
    %334 = vector.broadcast %cst_129 : f32 to vector<8x1xf32>
    %335 = arith.addf %333, %334 : vector<8x1xf32>
    %336 = math.rsqrt %335 : vector<8x1xf32>
    %337 = vector.broadcast %336 : vector<8x1xf32> to vector<8x128xf32>
    %338 = arith.mulf %328, %337 : vector<8x128xf32>
    %339 = vector.broadcast %5 : vector<1x128xf32> to vector<8x128xf32>
    %340 = arith.mulf %338, %339 : vector<8x128xf32>
    %341 = vector.broadcast %6 : vector<1x128xf32> to vector<8x128xf32>
    %342 = arith.addf %340, %341 : vector<8x128xf32>
    %c0_130 = arith.constant 0 : index
    %c0_131 = arith.constant 0 : index
    %c0_132 = arith.constant 0 : index
    %343 = vector.load %arg20[%c0_130, %c0_131, %c0_132] : memref<1x8x128xf32, #tpu.memory_space<vmem>>, vector<1x8x128xf32>
    %344 = vector.shape_cast %343 : vector<1x8x128xf32> to vector<8x128xf32>
    %345 = vector.shape_cast %342 : vector<8x128xf32> to vector<1x8x128xf32>
    tpu.vector_store %arg20[%c0_130, %c0_131, %c0_132], %345 {strides = array<i32>} : memref<1x8x128xf32, #tpu.memory_space<vmem>>, vector<1x8x128xf32>,
    return
  }
  func.func @transform_0(%arg0: i32) -> (i32, i32, i32) {
    %c0_i32 = arith.constant 0 : i32
    %c0_i32_0 = arith.constant 0 : i32
    %c0_i32_1 = arith.constant 0 : i32
    return %arg0, %c0_i32, %c0_i32_0 : i32, i32, i32
  }
  func.func @transform_1(%arg0: i32) -> (i32, i32, i32) {
    %c0_i32 = arith.constant 0 : i32
    %c0_i32_0 = arith.constant 0 : i32
    %c0_i32_1 = arith.constant 0 : i32
    return %arg0, %c0_i32, %c0_i32_0 : i32, i32, i32
  }
  func.func @transform_2(%arg0: i32) -> (i32, i32) {
    %c0_i32 = arith.constant 0 : i32
    %c0_i32_0 = arith.constant 0 : i32
    %c0_i32_1 = arith.constant 0 : i32
    return %c0_i32, %c0_i32_0 : i32, i32
  }
  func.func @transform_3(%arg0: i32) -> (i32, i32) {
    %c0_i32 = arith.constant 0 : i32
    %c0_i32_0 = arith.constant 0 : i32
    %c0_i32_1 = arith.constant 0 : i32
    return %c0_i32, %c0_i32_0 : i32, i32
  }
  func.func @transform_4(%arg0: i32) -> (i32, i32) {
    %c0_i32 = arith.constant 0 : i32
    %c0_i32_0 = arith.constant 0 : i32
    %c0_i32_1 = arith.constant 0 : i32
    return %c0_i32, %c0_i32_0 : i32, i32
  }
  func.func @transform_5(%arg0: i32) -> (i32, i32) {
    %c0_i32 = arith.constant 0 : i32
    %c0_i32_0 = arith.constant 0 : i32
    %c0_i32_1 = arith.constant 0 : i32
    return %c0_i32, %c0_i32_0 : i32, i32
  }
  func.func @transform_6(%arg0: i32) -> (i32, i32) {
    %c0_i32 = arith.constant 0 : i32
    %c0_i32_0 = arith.constant 0 : i32
    %c0_i32_1 = arith.constant 0 : i32
    return %c0_i32, %c0_i32_0 : i32, i32
  }
  func.func @transform_7(%arg0: i32) -> (i32, i32) {
    %c0_i32 = arith.constant 0 : i32
    %c0_i32_0 = arith.constant 0 : i32
    %c0_i32_1 = arith.constant 0 : i32
    return %c0_i32, %c0_i32_0 : i32, i32
  }
  func.func @transform_8(%arg0: i32) -> (i32, i32) {
    %c0_i32 = arith.constant 0 : i32
    %c0_i32_0 = arith.constant 0 : i32
    %c0_i32_1 = arith.constant 0 : i32
    return %c0_i32, %c0_i32_0 : i32, i32
  }
  func.func @transform_9(%arg0: i32) -> (i32, i32) {
    %c0_i32 = arith.constant 0 : i32
    %c0_i32_0 = arith.constant 0 : i32
    %c0_i32_1 = arith.constant 0 : i32
    return %c0_i32, %c0_i32_0 : i32, i32
  }
  func.func @transform_10(%arg0: i32) -> (i32, i32) {
    %c0_i32 = arith.constant 0 : i32
    %c0_i32_0 = arith.constant 0 : i32
    %c0_i32_1 = arith.constant 0 : i32
    return %c0_i32, %c0_i32_0 : i32, i32
  }
  func.func @transform_11(%arg0: i32) -> (i32, i32) {
    %c0_i32 = arith.constant 0 : i32
    %c0_i32_0 = arith.constant 0 : i32
    %c0_i32_1 = arith.constant 0 : i32
    return %c0_i32, %c0_i32_0 : i32, i32
  }
  func.func @transform_12(%arg0: i32) -> (i32, i32) {
    %c0_i32 = arith.constant 0 : i32
    %c0_i32_0 = arith.constant 0 : i32
    %c0_i32_1 = arith.constant 0 : i32
    return %c0_i32, %c0_i32_0 : i32, i32
  }
  func.func @transform_13(%arg0: i32) -> (i32, i32) {
    %c0_i32 = arith.constant 0 : i32
    %c0_i32_0 = arith.constant 0 : i32
    %c0_i32_1 = arith.constant 0 : i32
    return %c0_i32, %c0_i32_0 : i32, i32
  }
  func.func @transform_14(%arg0: i32) -> (i32, i32) {
    %c0_i32 = arith.constant 0 : i32
    %c0_i32_0 = arith.constant 0 : i32
    %c0_i32_1 = arith.constant 0 : i32
    return %c0_i32, %c0_i32_0 : i32, i32
  }
  func.func @transform_15(%arg0: i32) -> (i32, i32) {
    %c0_i32 = arith.constant 0 : i32
    %c0_i32_0 = arith.constant 0 : i32
    %c0_i32_1 = arith.constant 0 : i32
    return %c0_i32, %c0_i32_0 : i32, i32
  }
  func.func @transform_16(%arg0: i32) -> (i32, i32) {
    %c0_i32 = arith.constant 0 : i32
    %c0_i32_0 = arith.constant 0 : i32
    %c0_i32_1 = arith.constant 0 : i32
    return %c0_i32, %c0_i32_0 : i32, i32
  }
  func.func @transform_17(%arg0: i32) -> (i32, i32) {
    %c0_i32 = arith.constant 0 : i32
    %c0_i32_0 = arith.constant 0 : i32
    %c0_i32_1 = arith.constant 0 : i32
    return %c0_i32, %c0_i32_0 : i32, i32
  }
  func.func @transform_18(%arg0: i32) -> (i32, i32) {
    %c0_i32 = arith.constant 0 : i32
    %c0_i32_0 = arith.constant 0 : i32
    %c0_i32_1 = arith.constant 0 : i32
    return %c0_i32, %c0_i32_0 : i32, i32
  }
  func.func @transform_19(%arg0: i32) -> (i32, i32, i32) {
    %c0_i32 = arith.constant 0 : i32
    %c0_i32_0 = arith.constant 0 : i32
    %c0_i32_1 = arith.constant 0 : i32
    return %arg0, %c0_i32, %c0_i32_0 : i32, i32, i32
  }
}

module attributes {stable_mosaic.version = 11 : i64} {
  func.func @_decoder_layer_kernel(%arg0: i32, %arg1: memref<1x8x128xf32, #tpu.memory_space<vmem>>, %arg2: memref<1x8x128xf32, #tpu.memory_space<vmem>>, %arg3: memref<8x8xf32, #tpu.memory_space<vmem>>, %arg4: memref<128x384xf32, #tpu.memory_space<vmem>>, %arg5: memref<1x384xf32, #tpu.memory_space<vmem>>, %arg6: memref<128x128xf32, #tpu.memory_space<vmem>>, %arg7: memref<1x128xf32, #tpu.memory_space<vmem>>, %arg8: memref<128x128xf32, #tpu.memory_space<vmem>>, %arg9: memref<1x128xf32, #tpu.memory_space<vmem>>, %arg10: memref<128x256xf32, #tpu.memory_space<vmem>>, %arg11: memref<1x256xf32, #tpu.memory_space<vmem>>, %arg12: memref<128x128xf32, #tpu.memory_space<vmem>>, %arg13: memref<1x128xf32, #tpu.memory_space<vmem>>, %arg14: memref<1x128xf32, #tpu.memory_space<vmem>>, %arg15: memref<1x128xf32, #tpu.memory_space<vmem>>, %arg16: memref<128x64xf32, #tpu.memory_space<vmem>>, %arg17: memref<1x64xf32, #tpu.memory_space<vmem>>, %arg18: memref<64x128xf32, #tpu.memory_space<vmem>>, %arg19: memref<1x128xf32, #tpu.memory_space<vmem>>, %arg20: memref<1x8x128xf32, #tpu.memory_space<vmem>>) attributes {dimension_semantics = [#tpu.dimension_semantics<parallel>], iteration_bounds = array<i64: 2>, scalar_prefetch = 0 : i64, scratch_operands = 0 : i64, tpu.core_type = #tpu.core_type<tc>, window_params = [{transform_indices = @transform_0, window_bounds = array<i64: 1, 8, 128>}, {transform_indices = @transform_1, window_bounds = array<i64: 1, 8, 128>}, {pipeline_mode = #tpu.pipeline_mode<synchronous>, transform_indices = @transform_2, window_bounds = array<i64: 8, 8>}, {pipeline_mode = #tpu.pipeline_mode<synchronous>, transform_indices = @transform_3, window_bounds = array<i64: 128, 384>}, {pipeline_mode = #tpu.pipeline_mode<synchronous>, transform_indices = @transform_4, window_bounds = array<i64: 1, 384>}, {pipeline_mode = #tpu.pipeline_mode<synchronous>, transform_indices = @transform_5, window_bounds = array<i64: 128, 128>}, {pipeline_mode = #tpu.pipeline_mode<synchronous>, transform_indices = @transform_6, window_bounds = array<i64: 1, 128>}, {pipeline_mode = #tpu.pipeline_mode<synchronous>, transform_indices = @transform_7, window_bounds = array<i64: 128, 128>}, {pipeline_mode = #tpu.pipeline_mode<synchronous>, transform_indices = @transform_8, window_bounds = array<i64: 1, 128>}, {pipeline_mode = #tpu.pipeline_mode<synchronous>, transform_indices = @transform_9, window_bounds = array<i64: 128, 256>}, {pipeline_mode = #tpu.pipeline_mode<synchronous>, transform_indices = @transform_10, window_bounds = array<i64: 1, 256>}, {pipeline_mode = #tpu.pipeline_mode<synchronous>, transform_indices = @transform_11, window_bounds = array<i64: 128, 128>}, {pipeline_mode = #tpu.pipeline_mode<synchronous>, transform_indices = @transform_12, window_bounds = array<i64: 1, 128>}, {pipeline_mode = #tpu.pipeline_mode<synchronous>, transform_indices = @transform_13, window_bounds = array<i64: 1, 128>}, {pipeline_mode = #tpu.pipeline_mode<synchronous>, transform_indices = @transform_14, window_bounds = array<i64: 1, 128>}, {pipeline_mode = #tpu.pipeline_mode<synchronous>, transform_indices = @transform_15, window_bounds = array<i64: 128, 64>}, {pipeline_mode = #tpu.pipeline_mode<synchronous>, transform_indices = @transform_16, window_bounds = array<i64: 1, 64>}, {pipeline_mode = #tpu.pipeline_mode<synchronous>, transform_indices = @transform_17, window_bounds = array<i64: 64, 128>}, {pipeline_mode = #tpu.pipeline_mode<synchronous>, transform_indices = @transform_18, window_bounds = array<i64: 1, 128>}, {transform_indices = @transform_19, window_bounds = array<i64: 1, 8, 128>}]} {
    %c0 = arith.constant 0 : index
    %c0_0 = arith.constant 0 : index
    %c0_1 = arith.constant 0 : index
    %0 = vector.load %arg1[%c0, %c0_0, %c0_1] : memref<1x8x128xf32, #tpu.memory_space<vmem>>, vector<1x8x128xf32>
    %1 = vector.shape_cast %0 : vector<1x8x128xf32> to vector<8x128xf32>
    %c0_2 = arith.constant 0 : index
    %c0_3 = arith.constant 0 : index
    %c0_4 = arith.constant 0 : index
    %2 = vector.load %arg2[%c0_2, %c0_3, %c0_4] : memref<1x8x128xf32, #tpu.memory_space<vmem>>, vector<1x8x128xf32>
    %3 = vector.shape_cast %2 : vector<1x8x128xf32> to vector<8x128xf32>
    %c0_5 = arith.constant 0 : index
    %c0_6 = arith.constant 0 : index
    %4 = vector.load %arg3[%c0_5, %c0_6] : memref<8x8xf32, #tpu.memory_space<vmem>>, vector<8x8xf32>
    %c0_7 = arith.constant 0 : index
    %c0_8 = arith.constant 0 : index
    %5 = vector.load %arg14[%c0_7, %c0_8] : memref<1x128xf32, #tpu.memory_space<vmem>>, vector<1x128xf32>
    %c0_9 = arith.constant 0 : index
    %c0_10 = arith.constant 0 : index
    %6 = vector.load %arg15[%c0_9, %c0_10] : memref<1x128xf32, #tpu.memory_space<vmem>>, vector<1x128xf32>
    %7 = tpu.iota {dimensions = array<i32: 1>} : vector<1x128xi32>
    %c0_11 = arith.constant 0 : index
    %c0_12 = arith.constant 0 : index
    %8 = vector.load %arg4[%c0_11, %c0_12] : memref<128x384xf32, #tpu.memory_space<vmem>>, vector<128x384xf32>
    %cst = arith.constant dense<0.000000e+00> : vector<8x384xf32>
    %9 = tpu.matmul %1, %8, %cst {dimension_numbers = #tpu.dot_dimension_numbers<[1], [0], [0], [1], [0, 0, 1, 1], [], []>} : vector<8x128xf32>, vector<128x384xf32>, vector<8x384xf32> -> vector<8x384xf32>
    %c0_13 = arith.constant 0 : index
    %c0_14 = arith.constant 0 : index
    %10 = vector.load %arg5[%c0_13, %c0_14] : memref<1x384xf32, #tpu.memory_space<vmem>>, vector<1x384xf32>
    %11 = vector.broadcast %10 : vector<1x384xf32> to vector<8x384xf32>
    %12 = arith.addf %9, %11 : vector<8x384xf32>
    %13 = vector.extract_strided_slice %12 {offsets = [0, 0], sizes = [8, 128], strides = [1, 1]} : vector<8x384xf32> to vector<8x128xf32>
    %14 = vector.extract_strided_slice %12 {offsets = [0, 128], sizes = [8, 128], strides = [1, 1]} : vector<8x384xf32> to vector<8x128xf32>
    %15 = vector.extract_strided_slice %12 {offsets = [0, 256], sizes = [8, 128], strides = [1, 1]} : vector<8x384xf32> to vector<8x128xf32>
    %cst_15 = arith.constant 0.000000e+00 : f32
    %16 = vector.broadcast %cst_15 : f32 to vector<8x128xf32>
    %c0_i32 = arith.constant 0 : i32
    %17 = vector.broadcast %c0_i32 : i32 to vector<1x128xi32>
    %18 = arith.cmpi sge, %7, %17 : vector<1x128xi32>
    %c32_i32 = arith.constant 32 : i32
    %19 = vector.broadcast %c32_i32 : i32 to vector<1x128xi32>
    %20 = arith.cmpi slt, %7, %19 : vector<1x128xi32>
    %21 = arith.andi %18, %20 : vector<1x128xi1>
    %cst_16 = arith.constant 0.000000e+00 : f32
    %22 = vector.shape_cast %21 : vector<1x128xi1> to vector<1x128xi1>
    %23 = vector.broadcast %22 : vector<1x128xi1> to vector<8x128xi1>
    %24 = vector.broadcast %cst_16 : f32 to vector<8x128xf32>
    %25 = arith.select %23, %14, %24 : vector<8x128xi1>, vector<8x128xf32>
    %cst_17 = arith.constant 0.000000e+00 : f32
    %26 = vector.shape_cast %21 : vector<1x128xi1> to vector<1x128xi1>
    %27 = vector.broadcast %26 : vector<1x128xi1> to vector<8x128xi1>
    %28 = vector.broadcast %cst_17 : f32 to vector<8x128xf32>
    %29 = arith.select %27, %15, %28 : vector<8x128xi1>, vector<8x128xf32>
    %cst_18 = arith.constant dense<0.000000e+00> : vector<8x8xf32>
    %30 = tpu.matmul %13, %25, %cst_18 {dimension_numbers = #tpu.dot_dimension_numbers<[1], [1], [0], [0], [0, 0, 1, 0], [], []>} : vector<8x128xf32>, vector<8x128xf32>, vector<8x8xf32> -> vector<8x8xf32>
    %cst_19 = arith.constant 0.176776692 : f32
    %31 = vector.broadcast %cst_19 : f32 to vector<8x8xf32>
    %32 = arith.mulf %30, %31 : vector<8x8xf32>
    %33 = arith.addf %32, %4 : vector<8x8xf32>
    %cst_20 = arith.constant dense<0xFF800000> : vector<8xf32>
    %34 = vector.multi_reduction <maximumf>, %33, %cst_20 [1] : vector<8x8xf32> to vector<8xf32>
    %35 = vector.shape_cast %34 : vector<8xf32> to vector<8x1xf32>
    %36 = vector.broadcast %35 : vector<8x1xf32> to vector<8x8xf32>
    %37 = arith.subf %33, %36 : vector<8x8xf32>
    %38 = math.exp %37 : vector<8x8xf32>
    %cst_21 = arith.constant dense<0.000000e+00> : vector<8xf32>
    %39 = vector.multi_reduction <add>, %38, %cst_21 [1] : vector<8x8xf32> to vector<8xf32>
    %40 = vector.shape_cast %39 : vector<8xf32> to vector<8x1xf32>
    %41 = tpu.reciprocal %40 {approx = true} : vector<8x1xf32> -> vector<8x1xf32>
    %42 = vector.broadcast %41 : vector<8x1xf32> to vector<8x8xf32>
    %43 = arith.mulf %38, %42 : vector<8x8xf32>
    %cst_22 = arith.constant dense<0.000000e+00> : vector<8x128xf32>
    %44 = tpu.matmul %43, %29, %cst_22 {dimension_numbers = #tpu.dot_dimension_numbers<[1], [0], [0], [1], [0, 0, 1, 1], [], []>} : vector<8x8xf32>, vector<8x128xf32>, vector<8x128xf32> -> vector<8x128xf32>
    %45 = arith.addf %16, %44 : vector<8x128xf32>
    %c32_i32_23 = arith.constant 32 : i32
    %46 = vector.broadcast %c32_i32_23 : i32 to vector<1x128xi32>
    %47 = arith.cmpi sge, %7, %46 : vector<1x128xi32>
    %c64_i32 = arith.constant 64 : i32
    %48 = vector.broadcast %c64_i32 : i32 to vector<1x128xi32>
    %49 = arith.cmpi slt, %7, %48 : vector<1x128xi32>
    %50 = arith.andi %47, %49 : vector<1x128xi1>
    %cst_24 = arith.constant 0.000000e+00 : f32
    %51 = vector.shape_cast %50 : vector<1x128xi1> to vector<1x128xi1>
    %52 = vector.broadcast %51 : vector<1x128xi1> to vector<8x128xi1>
    %53 = vector.broadcast %cst_24 : f32 to vector<8x128xf32>
    %54 = arith.select %52, %14, %53 : vector<8x128xi1>, vector<8x128xf32>
    %cst_25 = arith.constant 0.000000e+00 : f32
    %55 = vector.shape_cast %50 : vector<1x128xi1> to vector<1x128xi1>
    %56 = vector.broadcast %55 : vector<1x128xi1> to vector<8x128xi1>
    %57 = vector.broadcast %cst_25 : f32 to vector<8x128xf32>
    %58 = arith.select %56, %15, %57 : vector<8x128xi1>, vector<8x128xf32>
    %cst_26 = arith.constant dense<0.000000e+00> : vector<8x8xf32>
    %59 = tpu.matmul %13, %54, %cst_26 {dimension_numbers = #tpu.dot_dimension_numbers<[1], [1], [0], [0], [0, 0, 1, 0], [], []>} : vector<8x128xf32>, vector<8x128xf32>, vector<8x8xf32> -> vector<8x8xf32>
    %cst_27 = arith.constant 0.176776692 : f32
    %60 = vector.broadcast %cst_27 : f32 to vector<8x8xf32>
    %61 = arith.mulf %59, %60 : vector<8x8xf32>
    %62 = arith.addf %61, %4 : vector<8x8xf32>
    %cst_28 = arith.constant dense<0xFF800000> : vector<8xf32>
    %63 = vector.multi_reduction <maximumf>, %62, %cst_28 [1] : vector<8x8xf32> to vector<8xf32>
    %64 = vector.shape_cast %63 : vector<8xf32> to vector<8x1xf32>
    %65 = vector.broadcast %64 : vector<8x1xf32> to vector<8x8xf32>
    %66 = arith.subf %62, %65 : vector<8x8xf32>
    %67 = math.exp %66 : vector<8x8xf32>
    %cst_29 = arith.constant dense<0.000000e+00> : vector<8xf32>
    %68 = vector.multi_reduction <add>, %67, %cst_29 [1] : vector<8x8xf32> to vector<8xf32>
    %69 = vector.shape_cast %68 : vector<8xf32> to vector<8x1xf32>
    %70 = tpu.reciprocal %69 {approx = true} : vector<8x1xf32> -> vector<8x1xf32>
    %71 = vector.broadcast %70 : vector<8x1xf32> to vector<8x8xf32>
    %72 = arith.mulf %67, %71 : vector<8x8xf32>
    %cst_30 = arith.constant dense<0.000000e+00> : vector<8x128xf32>
    %73 = tpu.matmul %72, %58, %cst_30 {dimension_numbers = #tpu.dot_dimension_numbers<[1], [0], [0], [1], [0, 0, 1, 1], [], []>} : vector<8x8xf32>, vector<8x128xf32>, vector<8x128xf32> -> vector<8x128xf32>
    %74 = arith.addf %45, %73 : vector<8x128xf32>
    %c64_i32_31 = arith.constant 64 : i32
    %75 = vector.broadcast %c64_i32_31 : i32 to vector<1x128xi32>
    %76 = arith.cmpi sge, %7, %75 : vector<1x128xi32>
    %c96_i32 = arith.constant 96 : i32
    %77 = vector.broadcast %c96_i32 : i32 to vector<1x128xi32>
    %78 = arith.cmpi slt, %7, %77 : vector<1x128xi32>
    %79 = arith.andi %76, %78 : vector<1x128xi1>
    %cst_32 = arith.constant 0.000000e+00 : f32
    %80 = vector.shape_cast %79 : vector<1x128xi1> to vector<1x128xi1>
    %81 = vector.broadcast %80 : vector<1x128xi1> to vector<8x128xi1>
    %82 = vector.broadcast %cst_32 : f32 to vector<8x128xf32>
    %83 = arith.select %81, %14, %82 : vector<8x128xi1>, vector<8x128xf32>
    %cst_33 = arith.constant 0.000000e+00 : f32
    %84 = vector.shape_cast %79 : vector<1x128xi1> to vector<1x128xi1>
    %85 = vector.broadcast %84 : vector<1x128xi1> to vector<8x128xi1>
    %86 = vector.broadcast %cst_33 : f32 to vector<8x128xf32>
    %87 = arith.select %85, %15, %86 : vector<8x128xi1>, vector<8x128xf32>
    %cst_34 = arith.constant dense<0.000000e+00> : vector<8x8xf32>
    %88 = tpu.matmul %13, %83, %cst_34 {dimension_numbers = #tpu.dot_dimension_numbers<[1], [1], [0], [0], [0, 0, 1, 0], [], []>} : vector<8x128xf32>, vector<8x128xf32>, vector<8x8xf32> -> vector<8x8xf32>
    %cst_35 = arith.constant 0.176776692 : f32
    %89 = vector.broadcast %cst_35 : f32 to vector<8x8xf32>
    %90 = arith.mulf %88, %89 : vector<8x8xf32>
    %91 = arith.addf %90, %4 : vector<8x8xf32>
    %cst_36 = arith.constant dense<0xFF800000> : vector<8xf32>
    %92 = vector.multi_reduction <maximumf>, %91, %cst_36 [1] : vector<8x8xf32> to vector<8xf32>
    %93 = vector.shape_cast %92 : vector<8xf32> to vector<8x1xf32>
    %94 = vector.broadcast %93 : vector<8x1xf32> to vector<8x8xf32>
    %95 = arith.subf %91, %94 : vector<8x8xf32>
    %96 = math.exp %95 : vector<8x8xf32>
    %cst_37 = arith.constant dense<0.000000e+00> : vector<8xf32>
    %97 = vector.multi_reduction <add>, %96, %cst_37 [1] : vector<8x8xf32> to vector<8xf32>
    %98 = vector.shape_cast %97 : vector<8xf32> to vector<8x1xf32>
    %99 = tpu.reciprocal %98 {approx = true} : vector<8x1xf32> -> vector<8x1xf32>
    %100 = vector.broadcast %99 : vector<8x1xf32> to vector<8x8xf32>
    %101 = arith.mulf %96, %100 : vector<8x8xf32>
    %cst_38 = arith.constant dense<0.000000e+00> : vector<8x128xf32>
    %102 = tpu.matmul %101, %87, %cst_38 {dimension_numbers = #tpu.dot_dimension_numbers<[1], [0], [0], [1], [0, 0, 1, 1], [], []>} : vector<8x8xf32>, vector<8x128xf32>, vector<8x128xf32> -> vector<8x128xf32>
    %103 = arith.addf %74, %102 : vector<8x128xf32>
    %c96_i32_39 = arith.constant 96 : i32
    %104 = vector.broadcast %c96_i32_39 : i32 to vector<1x128xi32>
    %105 = arith.cmpi sge, %7, %104 : vector<1x128xi32>
    %c128_i32 = arith.constant 128 : i32
    %106 = vector.broadcast %c128_i32 : i32 to vector<1x128xi32>
    %107 = arith.cmpi slt, %7, %106 : vector<1x128xi32>
    %108 = arith.andi %105, %107 : vector<1x128xi1>
    %cst_40 = arith.constant 0.000000e+00 : f32
    %109 = vector.shape_cast %108 : vector<1x128xi1> to vector<1x128xi1>
    %110 = vector.broadcast %109 : vector<1x128xi1> to vector<8x128xi1>
    %111 = vector.broadcast %cst_40 : f32 to vector<8x128xf32>
    %112 = arith.select %110, %14, %111 : vector<8x128xi1>, vector<8x128xf32>
    %cst_41 = arith.constant 0.000000e+00 : f32
    %113 = vector.shape_cast %108 : vector<1x128xi1> to vector<1x128xi1>
    %114 = vector.broadcast %113 : vector<1x128xi1> to vector<8x128xi1>
    %115 = vector.broadcast %cst_41 : f32 to vector<8x128xf32>
    %116 = arith.select %114, %15, %115 : vector<8x128xi1>, vector<8x128xf32>
    %cst_42 = arith.constant dense<0.000000e+00> : vector<8x8xf32>
    %117 = tpu.matmul %13, %112, %cst_42 {dimension_numbers = #tpu.dot_dimension_numbers<[1], [1], [0], [0], [0, 0, 1, 0], [], []>} : vector<8x128xf32>, vector<8x128xf32>, vector<8x8xf32> -> vector<8x8xf32>
    %cst_43 = arith.constant 0.176776692 : f32
    %118 = vector.broadcast %cst_43 : f32 to vector<8x8xf32>
    %119 = arith.mulf %117, %118 : vector<8x8xf32>
    %120 = arith.addf %119, %4 : vector<8x8xf32>
    %cst_44 = arith.constant dense<0xFF800000> : vector<8xf32>
    %121 = vector.multi_reduction <maximumf>, %120, %cst_44 [1] : vector<8x8xf32> to vector<8xf32>
    %122 = vector.shape_cast %121 : vector<8xf32> to vector<8x1xf32>
    %123 = vector.broadcast %122 : vector<8x1xf32> to vector<8x8xf32>
    %124 = arith.subf %120, %123 : vector<8x8xf32>
    %125 = math.exp %124 : vector<8x8xf32>
    %cst_45 = arith.constant dense<0.000000e+00> : vector<8xf32>
    %126 = vector.multi_reduction <add>, %125, %cst_45 [1] : vector<8x8xf32> to vector<8xf32>
    %127 = vector.shape_cast %126 : vector<8xf32> to vector<8x1xf32>
    %128 = tpu.reciprocal %127 {approx = true} : vector<8x1xf32> -> vector<8x1xf32>
    %129 = vector.broadcast %128 : vector<8x1xf32> to vector<8x8xf32>
    %130 = arith.mulf %125, %129 : vector<8x8xf32>
    %cst_46 = arith.constant dense<0.000000e+00> : vector<8x128xf32>
    %131 = tpu.matmul %130, %116, %cst_46 {dimension_numbers = #tpu.dot_dimension_numbers<[1], [0], [0], [1], [0, 0, 1, 1], [], []>} : vector<8x8xf32>, vector<8x128xf32>, vector<8x128xf32> -> vector<8x128xf32>
    %132 = arith.addf %103, %131 : vector<8x128xf32>
    %c0_47 = arith.constant 0 : index
    %c0_48 = arith.constant 0 : index
    %133 = vector.load %arg6[%c0_47, %c0_48] : memref<128x128xf32, #tpu.memory_space<vmem>>, vector<128x128xf32>
    %cst_49 = arith.constant dense<0.000000e+00> : vector<8x128xf32>
    %134 = tpu.matmul %132, %133, %cst_49 {dimension_numbers = #tpu.dot_dimension_numbers<[1], [0], [0], [1], [0, 0, 1, 1], [], []>} : vector<8x128xf32>, vector<128x128xf32>, vector<8x128xf32> -> vector<8x128xf32>
    %c0_50 = arith.constant 0 : index
    %c0_51 = arith.constant 0 : index
    %135 = vector.load %arg7[%c0_50, %c0_51] : memref<1x128xf32, #tpu.memory_space<vmem>>, vector<1x128xf32>
    %136 = vector.broadcast %135 : vector<1x128xf32> to vector<8x128xf32>
    %137 = arith.addf %134, %136 : vector<8x128xf32>
    %138 = arith.addf %1, %137 : vector<8x128xf32>
    %cst_52 = arith.constant dense<0.000000e+00> : vector<8xf32>
    %139 = vector.multi_reduction <add>, %138, %cst_52 [1] : vector<8x128xf32> to vector<8xf32>
    %140 = vector.shape_cast %139 : vector<8xf32> to vector<8x1xf32>
    %cst_53 = arith.constant 1.280000e+02 : f32
    %141 = vector.broadcast %cst_53 : f32 to vector<8x1xf32>
    %142 = arith.divf %140, %141 : vector<8x1xf32>
    %143 = vector.broadcast %142 : vector<8x1xf32> to vector<8x128xf32>
    %144 = arith.subf %138, %143 : vector<8x128xf32>
    %145 = arith.mulf %144, %144 : vector<8x128xf32>
    %cst_54 = arith.constant dense<0.000000e+00> : vector<8xf32>
    %146 = vector.multi_reduction <add>, %145, %cst_54 [1] : vector<8x128xf32> to vector<8xf32>
    %147 = vector.shape_cast %146 : vector<8xf32> to vector<8x1xf32>
    %cst_55 = arith.constant 1.280000e+02 : f32
    %148 = vector.broadcast %cst_55 : f32 to vector<8x1xf32>
    %149 = arith.divf %147, %148 : vector<8x1xf32>
    %cst_56 = arith.constant 9.99999974E-6 : f32
    %150 = vector.broadcast %cst_56 : f32 to vector<8x1xf32>
    %151 = arith.addf %149, %150 : vector<8x1xf32>
    %152 = math.rsqrt %151 : vector<8x1xf32>
    %153 = vector.broadcast %152 : vector<8x1xf32> to vector<8x128xf32>
    %154 = arith.mulf %144, %153 : vector<8x128xf32>
    %155 = vector.broadcast %5 : vector<1x128xf32> to vector<8x128xf32>
    %156 = arith.mulf %154, %155 : vector<8x128xf32>
    %157 = vector.broadcast %6 : vector<1x128xf32> to vector<8x128xf32>
    %158 = arith.addf %156, %157 : vector<8x128xf32>
    %c0_57 = arith.constant 0 : index
    %c0_58 = arith.constant 0 : index
    %159 = vector.load %arg8[%c0_57, %c0_58] : memref<128x128xf32, #tpu.memory_space<vmem>>, vector<128x128xf32>
    %cst_59 = arith.constant dense<0.000000e+00> : vector<8x128xf32>
    %160 = tpu.matmul %158, %159, %cst_59 {dimension_numbers = #tpu.dot_dimension_numbers<[1], [0], [0], [1], [0, 0, 1, 1], [], []>} : vector<8x128xf32>, vector<128x128xf32>, vector<8x128xf32> -> vector<8x128xf32>
    %c0_60 = arith.constant 0 : index
    %c0_61 = arith.constant 0 : index
    %161 = vector.load %arg9[%c0_60, %c0_61] : memref<1x128xf32, #tpu.memory_space<vmem>>, vector<1x128xf32>
    %162 = vector.broadcast %161 : vector<1x128xf32> to vector<8x128xf32>
    %163 = arith.addf %160, %162 : vector<8x128xf32>
    %c0_62 = arith.constant 0 : index
    %c0_63 = arith.constant 0 : index
    %164 = vector.load %arg10[%c0_62, %c0_63] : memref<128x256xf32, #tpu.memory_space<vmem>>, vector<128x256xf32>
    %cst_64 = arith.constant dense<0.000000e+00> : vector<8x256xf32>
    %165 = tpu.matmul %3, %164, %cst_64 {dimension_numbers = #tpu.dot_dimension_numbers<[1], [0], [0], [1], [0, 0, 1, 1], [], []>} : vector<8x128xf32>, vector<128x256xf32>, vector<8x256xf32> -> vector<8x256xf32>
    %c0_65 = arith.constant 0 : index
    %c0_66 = arith.constant 0 : index
    %166 = vector.load %arg11[%c0_65, %c0_66] : memref<1x256xf32, #tpu.memory_space<vmem>>, vector<1x256xf32>
    %167 = vector.broadcast %166 : vector<1x256xf32> to vector<8x256xf32>
    %168 = arith.addf %165, %167 : vector<8x256xf32>
    %169 = vector.extract_strided_slice %168 {offsets = [0, 0], sizes = [8, 128], strides = [1, 1]} : vector<8x256xf32> to vector<8x128xf32>
    %170 = vector.extract_strided_slice %168 {offsets = [0, 128], sizes = [8, 128], strides = [1, 1]} : vector<8x256xf32> to vector<8x128xf32>
    %cst_67 = arith.constant 0.000000e+00 : f32
    %171 = vector.broadcast %cst_67 : f32 to vector<8x128xf32>
    %c0_i32_68 = arith.constant 0 : i32
    %172 = vector.broadcast %c0_i32_68 : i32 to vector<1x128xi32>
    %173 = arith.cmpi sge, %7, %172 : vector<1x128xi32>
    %c32_i32_69 = arith.constant 32 : i32
    %174 = vector.broadcast %c32_i32_69 : i32 to vector<1x128xi32>
    %175 = arith.cmpi slt, %7, %174 : vector<1x128xi32>
    %176 = arith.andi %173, %175 : vector<1x128xi1>
    %cst_70 = arith.constant 0.000000e+00 : f32
    %177 = vector.shape_cast %176 : vector<1x128xi1> to vector<1x128xi1>
    %178 = vector.broadcast %177 : vector<1x128xi1> to vector<8x128xi1>
    %179 = vector.broadcast %cst_70 : f32 to vector<8x128xf32>
    %180 = arith.select %178, %169, %179 : vector<8x128xi1>, vector<8x128xf32>
    %cst_71 = arith.constant 0.000000e+00 : f32
    %181 = vector.shape_cast %176 : vector<1x128xi1> to vector<1x128xi1>
    %182 = vector.broadcast %181 : vector<1x128xi1> to vector<8x128xi1>
    %183 = vector.broadcast %cst_71 : f32 to vector<8x128xf32>
    %184 = arith.select %182, %170, %183 : vector<8x128xi1>, vector<8x128xf32>
    %cst_72 = arith.constant dense<0.000000e+00> : vector<8x8xf32>
    %185 = tpu.matmul %163, %180, %cst_72 {dimension_numbers = #tpu.dot_dimension_numbers<[1], [1], [0], [0], [0, 0, 1, 0], [], []>} : vector<8x128xf32>, vector<8x128xf32>, vector<8x8xf32> -> vector<8x8xf32>
    %cst_73 = arith.constant 0.176776692 : f32
    %186 = vector.broadcast %cst_73 : f32 to vector<8x8xf32>
    %187 = arith.mulf %185, %186 : vector<8x8xf32>
    %cst_74 = arith.constant dense<0xFF800000> : vector<8xf32>
    %188 = vector.multi_reduction <maximumf>, %187, %cst_74 [1] : vector<8x8xf32> to vector<8xf32>
    %189 = vector.shape_cast %188 : vector<8xf32> to vector<8x1xf32>
    %190 = vector.broadcast %189 : vector<8x1xf32> to vector<8x8xf32>
    %191 = arith.subf %187, %190 : vector<8x8xf32>
    %192 = math.exp %191 : vector<8x8xf32>
    %cst_75 = arith.constant dense<0.000000e+00> : vector<8xf32>
    %193 = vector.multi_reduction <add>, %192, %cst_75 [1] : vector<8x8xf32> to vector<8xf32>
    %194 = vector.shape_cast %193 : vector<8xf32> to vector<8x1xf32>
    %195 = tpu.reciprocal %194 {approx = true} : vector<8x1xf32> -> vector<8x1xf32>
    %196 = vector.broadcast %195 : vector<8x1xf32> to vector<8x8xf32>
    %197 = arith.mulf %192, %196 : vector<8x8xf32>
    %cst_76 = arith.constant dense<0.000000e+00> : vector<8x128xf32>
    %198 = tpu.matmul %197, %184, %cst_76 {dimension_numbers = #tpu.dot_dimension_numbers<[1], [0], [0], [1], [0, 0, 1, 1], [], []>} : vector<8x8xf32>, vector<8x128xf32>, vector<8x128xf32> -> vector<8x128xf32>
    %199 = arith.addf %171, %198 : vector<8x128xf32>
    %c32_i32_77 = arith.constant 32 : i32
    %200 = vector.broadcast %c32_i32_77 : i32 to vector<1x128xi32>
    %201 = arith.cmpi sge, %7, %200 : vector<1x128xi32>
    %c64_i32_78 = arith.constant 64 : i32
    %202 = vector.broadcast %c64_i32_78 : i32 to vector<1x128xi32>
    %203 = arith.cmpi slt, %7, %202 : vector<1x128xi32>
    %204 = arith.andi %201, %203 : vector<1x128xi1>
    %cst_79 = arith.constant 0.000000e+00 : f32
    %205 = vector.shape_cast %204 : vector<1x128xi1> to vector<1x128xi1>
    %206 = vector.broadcast %205 : vector<1x128xi1> to vector<8x128xi1>
    %207 = vector.broadcast %cst_79 : f32 to vector<8x128xf32>
    %208 = arith.select %206, %169, %207 : vector<8x128xi1>, vector<8x128xf32>
    %cst_80 = arith.constant 0.000000e+00 : f32
    %209 = vector.shape_cast %204 : vector<1x128xi1> to vector<1x128xi1>
    %210 = vector.broadcast %209 : vector<1x128xi1> to vector<8x128xi1>
    %211 = vector.broadcast %cst_80 : f32 to vector<8x128xf32>
    %212 = arith.select %210, %170, %211 : vector<8x128xi1>, vector<8x128xf32>
    %cst_81 = arith.constant dense<0.000000e+00> : vector<8x8xf32>
    %213 = tpu.matmul %163, %208, %cst_81 {dimension_numbers = #tpu.dot_dimension_numbers<[1], [1], [0], [0], [0, 0, 1, 0], [], []>} : vector<8x128xf32>, vector<8x128xf32>, vector<8x8xf32> -> vector<8x8xf32>
    %cst_82 = arith.constant 0.176776692 : f32
    %214 = vector.broadcast %cst_82 : f32 to vector<8x8xf32>
    %215 = arith.mulf %213, %214 : vector<8x8xf32>
    %cst_83 = arith.constant dense<0xFF800000> : vector<8xf32>
    %216 = vector.multi_reduction <maximumf>, %215, %cst_83 [1] : vector<8x8xf32> to vector<8xf32>
    %217 = vector.shape_cast %216 : vector<8xf32> to vector<8x1xf32>
    %218 = vector.broadcast %217 : vector<8x1xf32> to vector<8x8xf32>
    %219 = arith.subf %215, %218 : vector<8x8xf32>
    %220 = math.exp %219 : vector<8x8xf32>
    %cst_84 = arith.constant dense<0.000000e+00> : vector<8xf32>
    %221 = vector.multi_reduction <add>, %220, %cst_84 [1] : vector<8x8xf32> to vector<8xf32>
    %222 = vector.shape_cast %221 : vector<8xf32> to vector<8x1xf32>
    %223 = tpu.reciprocal %222 {approx = true} : vector<8x1xf32> -> vector<8x1xf32>
    %224 = vector.broadcast %223 : vector<8x1xf32> to vector<8x8xf32>
    %225 = arith.mulf %220, %224 : vector<8x8xf32>
    %cst_85 = arith.constant dense<0.000000e+00> : vector<8x128xf32>
    %226 = tpu.matmul %225, %212, %cst_85 {dimension_numbers = #tpu.dot_dimension_numbers<[1], [0], [0], [1], [0, 0, 1, 1], [], []>} : vector<8x8xf32>, vector<8x128xf32>, vector<8x128xf32> -> vector<8x128xf32>
    %227 = arith.addf %199, %226 : vector<8x128xf32>
    %c64_i32_86 = arith.constant 64 : i32
    %228 = vector.broadcast %c64_i32_86 : i32 to vector<1x128xi32>
    %229 = arith.cmpi sge, %7, %228 : vector<1x128xi32>
    %c96_i32_87 = arith.constant 96 : i32
    %230 = vector.broadcast %c96_i32_87 : i32 to vector<1x128xi32>
    %231 = arith.cmpi slt, %7, %230 : vector<1x128xi32>
    %232 = arith.andi %229, %231 : vector<1x128xi1>
    %cst_88 = arith.constant 0.000000e+00 : f32
    %233 = vector.shape_cast %232 : vector<1x128xi1> to vector<1x128xi1>
    %234 = vector.broadcast %233 : vector<1x128xi1> to vector<8x128xi1>
    %235 = vector.broadcast %cst_88 : f32 to vector<8x128xf32>
    %236 = arith.select %234, %169, %235 : vector<8x128xi1>, vector<8x128xf32>
    %cst_89 = arith.constant 0.000000e+00 : f32
    %237 = vector.shape_cast %232 : vector<1x128xi1> to vector<1x128xi1>
    %238 = vector.broadcast %237 : vector<1x128xi1> to vector<8x128xi1>
    %239 = vector.broadcast %cst_89 : f32 to vector<8x128xf32>
    %240 = arith.select %238, %170, %239 : vector<8x128xi1>, vector<8x128xf32>
    %cst_90 = arith.constant dense<0.000000e+00> : vector<8x8xf32>
    %241 = tpu.matmul %163, %236, %cst_90 {dimension_numbers = #tpu.dot_dimension_numbers<[1], [1], [0], [0], [0, 0, 1, 0], [], []>} : vector<8x128xf32>, vector<8x128xf32>, vector<8x8xf32> -> vector<8x8xf32>
    %cst_91 = arith.constant 0.176776692 : f32
    %242 = vector.broadcast %cst_91 : f32 to vector<8x8xf32>
    %243 = arith.mulf %241, %242 : vector<8x8xf32>
    %cst_92 = arith.constant dense<0xFF800000> : vector<8xf32>
    %244 = vector.multi_reduction <maximumf>, %243, %cst_92 [1] : vector<8x8xf32> to vector<8xf32>
    %245 = vector.shape_cast %244 : vector<8xf32> to vector<8x1xf32>
    %246 = vector.broadcast %245 : vector<8x1xf32> to vector<8x8xf32>
    %247 = arith.subf %243, %246 : vector<8x8xf32>
    %248 = math.exp %247 : vector<8x8xf32>
    %cst_93 = arith.constant dense<0.000000e+00> : vector<8xf32>
    %249 = vector.multi_reduction <add>, %248, %cst_93 [1] : vector<8x8xf32> to vector<8xf32>
    %250 = vector.shape_cast %249 : vector<8xf32> to vector<8x1xf32>
    %251 = tpu.reciprocal %250 {approx = true} : vector<8x1xf32> -> vector<8x1xf32>
    %252 = vector.broadcast %251 : vector<8x1xf32> to vector<8x8xf32>
    %253 = arith.mulf %248, %252 : vector<8x8xf32>
    %cst_94 = arith.constant dense<0.000000e+00> : vector<8x128xf32>
    %254 = tpu.matmul %253, %240, %cst_94 {dimension_numbers = #tpu.dot_dimension_numbers<[1], [0], [0], [1], [0, 0, 1, 1], [], []>} : vector<8x8xf32>, vector<8x128xf32>, vector<8x128xf32> -> vector<8x128xf32>
    %255 = arith.addf %227, %254 : vector<8x128xf32>
    %c96_i32_95 = arith.constant 96 : i32
    %256 = vector.broadcast %c96_i32_95 : i32 to vector<1x128xi32>
    %257 = arith.cmpi sge, %7, %256 : vector<1x128xi32>
    %c128_i32_96 = arith.constant 128 : i32
    %258 = vector.broadcast %c128_i32_96 : i32 to vector<1x128xi32>
    %259 = arith.cmpi slt, %7, %258 : vector<1x128xi32>
    %260 = arith.andi %257, %259 : vector<1x128xi1>
    %cst_97 = arith.constant 0.000000e+00 : f32
    %261 = vector.shape_cast %260 : vector<1x128xi1> to vector<1x128xi1>
    %262 = vector.broadcast %261 : vector<1x128xi1> to vector<8x128xi1>
    %263 = vector.broadcast %cst_97 : f32 to vector<8x128xf32>
    %264 = arith.select %262, %169, %263 : vector<8x128xi1>, vector<8x128xf32>
    %cst_98 = arith.constant 0.000000e+00 : f32
    %265 = vector.shape_cast %260 : vector<1x128xi1> to vector<1x128xi1>
    %266 = vector.broadcast %265 : vector<1x128xi1> to vector<8x128xi1>
    %267 = vector.broadcast %cst_98 : f32 to vector<8x128xf32>
    %268 = arith.select %266, %170, %267 : vector<8x128xi1>, vector<8x128xf32>
    %cst_99 = arith.constant dense<0.000000e+00> : vector<8x8xf32>
    %269 = tpu.matmul %163, %264, %cst_99 {dimension_numbers = #tpu.dot_dimension_numbers<[1], [1], [0], [0], [0, 0, 1, 0], [], []>} : vector<8x128xf32>, vector<8x128xf32>, vector<8x8xf32> -> vector<8x8xf32>
    %cst_100 = arith.constant 0.176776692 : f32
    %270 = vector.broadcast %cst_100 : f32 to vector<8x8xf32>
    %271 = arith.mulf %269, %270 : vector<8x8xf32>
    %cst_101 = arith.constant dense<0xFF800000> : vector<8xf32>
    %272 = vector.multi_reduction <maximumf>, %271, %cst_101 [1] : vector<8x8xf32> to vector<8xf32>
    %273 = vector.shape_cast %272 : vector<8xf32> to vector<8x1xf32>
    %274 = vector.broadcast %273 : vector<8x1xf32> to vector<8x8xf32>
    %275 = arith.subf %271, %274 : vector<8x8xf32>
    %276 = math.exp %275 : vector<8x8xf32>
    %cst_102 = arith.constant dense<0.000000e+00> : vector<8xf32>
    %277 = vector.multi_reduction <add>, %276, %cst_102 [1] : vector<8x8xf32> to vector<8xf32>
    %278 = vector.shape_cast %277 : vector<8xf32> to vector<8x1xf32>
    %279 = tpu.reciprocal %278 {approx = true} : vector<8x1xf32> -> vector<8x1xf32>
    %280 = vector.broadcast %279 : vector<8x1xf32> to vector<8x8xf32>
    %281 = arith.mulf %276, %280 : vector<8x8xf32>
    %cst_103 = arith.constant dense<0.000000e+00> : vector<8x128xf32>
    %282 = tpu.matmul %281, %268, %cst_103 {dimension_numbers = #tpu.dot_dimension_numbers<[1], [0], [0], [1], [0, 0, 1, 1], [], []>} : vector<8x8xf32>, vector<8x128xf32>, vector<8x128xf32> -> vector<8x128xf32>
    %283 = arith.addf %255, %282 : vector<8x128xf32>
    %c0_104 = arith.constant 0 : index
    %c0_105 = arith.constant 0 : index
    %284 = vector.load %arg12[%c0_104, %c0_105] : memref<128x128xf32, #tpu.memory_space<vmem>>, vector<128x128xf32>
    %cst_106 = arith.constant dense<0.000000e+00> : vector<8x128xf32>
    %285 = tpu.matmul %283, %284, %cst_106 {dimension_numbers = #tpu.dot_dimension_numbers<[1], [0], [0], [1], [0, 0, 1, 1], [], []>} : vector<8x128xf32>, vector<128x128xf32>, vector<8x128xf32> -> vector<8x128xf32>
    %c0_107 = arith.constant 0 : index
    %c0_108 = arith.constant 0 : index
    %286 = vector.load %arg13[%c0_107, %c0_108] : memref<1x128xf32, #tpu.memory_space<vmem>>, vector<1x128xf32>
    %287 = vector.broadcast %286 : vector<1x128xf32> to vector<8x128xf32>
    %288 = arith.addf %285, %287 : vector<8x128xf32>
    %289 = arith.addf %288, %158 : vector<8x128xf32>
    %cst_109 = arith.constant dense<0.000000e+00> : vector<8xf32>
    %290 = vector.multi_reduction <add>, %289, %cst_109 [1] : vector<8x128xf32> to vector<8xf32>
    %291 = vector.shape_cast %290 : vector<8xf32> to vector<8x1xf32>
    %cst_110 = arith.constant 1.280000e+02 : f32
    %292 = vector.broadcast %cst_110 : f32 to vector<8x1xf32>
    %293 = arith.divf %291, %292 : vector<8x1xf32>
    %294 = vector.broadcast %293 : vector<8x1xf32> to vector<8x128xf32>
    %295 = arith.subf %289, %294 : vector<8x128xf32>
    %296 = arith.mulf %295, %295 : vector<8x128xf32>
    %cst_111 = arith.constant dense<0.000000e+00> : vector<8xf32>
    %297 = vector.multi_reduction <add>, %296, %cst_111 [1] : vector<8x128xf32> to vector<8xf32>
    %298 = vector.shape_cast %297 : vector<8xf32> to vector<8x1xf32>
    %cst_112 = arith.constant 1.280000e+02 : f32
    %299 = vector.broadcast %cst_112 : f32 to vector<8x1xf32>
    %300 = arith.divf %298, %299 : vector<8x1xf32>
    %cst_113 = arith.constant 9.99999974E-6 : f32
    %301 = vector.broadcast %cst_113 : f32 to vector<8x1xf32>
    %302 = arith.addf %300, %301 : vector<8x1xf32>
    %303 = math.rsqrt %302 : vector<8x1xf32>
    %304 = vector.broadcast %303 : vector<8x1xf32> to vector<8x128xf32>
    %305 = arith.mulf %295, %304 : vector<8x128xf32>
    %306 = vector.broadcast %5 : vector<1x128xf32> to vector<8x128xf32>
    %307 = arith.mulf %305, %306 : vector<8x128xf32>
    %308 = vector.broadcast %6 : vector<1x128xf32> to vector<8x128xf32>
    %309 = arith.addf %307, %308 : vector<8x128xf32>
    %c0_114 = arith.constant 0 : index
    %c0_115 = arith.constant 0 : index
    %310 = vector.load %arg16[%c0_114, %c0_115] : memref<128x64xf32, #tpu.memory_space<vmem>>, vector<128x64xf32>
    %cst_116 = arith.constant dense<0.000000e+00> : vector<8x64xf32>
    %311 = tpu.matmul %309, %310, %cst_116 {dimension_numbers = #tpu.dot_dimension_numbers<[1], [0], [0], [1], [0, 0, 1, 1], [], []>} : vector<8x128xf32>, vector<128x64xf32>, vector<8x64xf32> -> vector<8x64xf32>
    %c0_117 = arith.constant 0 : index
    %c0_118 = arith.constant 0 : index
    %312 = vector.load %arg17[%c0_117, %c0_118] : memref<1x64xf32, #tpu.memory_space<vmem>>, vector<1x64xf32>
    %313 = vector.broadcast %312 : vector<1x64xf32> to vector<8x64xf32>
    %314 = arith.addf %311, %313 : vector<8x64xf32>
    %cst_119 = arith.constant 0.000000e+00 : f32
    %315 = vector.broadcast %cst_119 : f32 to vector<8x64xf32>
    %316 = arith.maximumf %314, %315 : vector<8x64xf32>
    %c0_120 = arith.constant 0 : index
    %c0_121 = arith.constant 0 : index
    %317 = vector.load %arg18[%c0_120, %c0_121] : memref<64x128xf32, #tpu.memory_space<vmem>>, vector<64x128xf32>
    %cst_122 = arith.constant dense<0.000000e+00> : vector<8x128xf32>
    %318 = tpu.matmul %316, %317, %cst_122 {dimension_numbers = #tpu.dot_dimension_numbers<[1], [0], [0], [1], [0, 0, 1, 1], [], []>} : vector<8x64xf32>, vector<64x128xf32>, vector<8x128xf32> -> vector<8x128xf32>
    %c0_123 = arith.constant 0 : index
    %c0_124 = arith.constant 0 : index
    %319 = vector.load %arg19[%c0_123, %c0_124] : memref<1x128xf32, #tpu.memory_space<vmem>>, vector<1x128xf32>
    %320 = vector.broadcast %319 : vector<1x128xf32> to vector<8x128xf32>
    %321 = arith.addf %318, %320 : vector<8x128xf32>
    %322 = arith.addf %321, %309 : vector<8x128xf32>
    %cst_125 = arith.constant dense<0.000000e+00> : vector<8xf32>
    %323 = vector.multi_reduction <add>, %322, %cst_125 [1] : vector<8x128xf32> to vector<8xf32>
    %324 = vector.shape_cast %323 : vector<8xf32> to vector<8x1xf32>
    %cst_126 = arith.constant 1.280000e+02 : f32
    %325 = vector.broadcast %cst_126 : f32 to vector<8x1xf32>
    %326 = arith.divf %324, %325 : vector<8x1xf32>
    %327 = vector.broadcast %326 : vector<8x1xf32> to vector<8x128xf32>
    %328 = arith.subf %322, %327 : vector<8x128xf32>
    %329 = arith.mulf %328, %328 : vector<8x128xf32>
    %cst_127 = arith.constant dense<0.000000e+00> : vector<8xf32>
    %330 = vector.multi_reduction <add>, %329, %cst_127 [1] : vector<8x128xf32> to vector<8xf32>
    %331 = vector.shape_cast %330 : vector<8xf32> to vector<8x1xf32>
    %cst_128 = arith.constant 1.280000e+02 : f32
    %332 = vector.broadcast %cst_128 : f32 to vector<8x1xf32>
    %333 = arith.divf %331, %332 : vector<8x1xf32>
    %cst_129 = arith.constant 9.99999974E-6 : f32
    %334 = vector.broadcast %cst_129 : f32 to vector<8x1xf32>
    %335 = arith.addf %333, %334 : vector<8x1xf32>
    %336 = math.rsqrt %335 : vector<8x1xf32>
    %337 = vector.broadcast %336 : vector<8x1xf32> to vector<8x128xf32>
    %338 = arith.mulf %328, %337 : vector<8x128xf32>
    %339 = vector.broadcast %5 : vector<1x128xf32> to vector<8x128xf32>
    %340 = arith.mulf %338, %339 : vector<8x128xf32>
    %341 = vector.broadcast %6 : vector<1x128xf32> to vector<8x128xf32>
    %342 = arith.addf %340, %341 : vector<8x128xf32>
    %c0_130 = arith.constant 0 : index
    %c0_131 = arith.constant 0 : index
    %c0_132 = arith.constant 0 : index
    %343 = vector.load %arg20[%c0_130, %c0_131, %c0_132] : memref<1x8x128xf32, #tpu.memory_space<vmem>>, vector<1x8x128xf32>
    %344 = vector.shape_cast %343 : vector<1x8x128xf32> to vector<8x128xf32>
    %345 = vector.shape_cast %342 : vector<8x128xf32> to vector<1x8x128xf32>
    tpu.vector_store %arg20[%c0_130, %c0_131, %c0_132], %345 {strides = array<i32>} : memref<1x8x128xf32, #tpu.memory_space<vmem>>, vector<1x8x128xf32>,
    return
  }
  func.func @transform_0(%arg0: i32) -> (i32, i32, i32) {
    %c0_i32 = arith.constant 0 : i32
    %c0_i32_0 = arith.constant 0 : i32
    %c0_i32_1 = arith.constant 0 : i32
    return %arg0, %c0_i32, %c0_i32_0 : i32, i32, i32
  }
  func.func @transform_1(%arg0: i32) -> (i32, i32, i32) {
    %c0_i32 = arith.constant 0 : i32
    %c0_i32_0 = arith.constant 0 : i32
    %c0_i32_1 = arith.constant 0 : i32
    return %arg0, %c0_i32, %c0_i32_0 : i32, i32, i32
  }
  func.func @transform_2(%arg0: i32) -> (i32, i32) {
    %c0_i32 = arith.constant 0 : i32
    %c0_i32_0 = arith.constant 0 : i32
    %c0_i32_1 = arith.constant 0 : i32
    return %c0_i32, %c0_i32_0 : i32, i32
  }
  func.func @transform_3(%arg0: i32) -> (i32, i32) {
    %c0_i32 = arith.constant 0 : i32
    %c0_i32_0 = arith.constant 0 : i32
    %c0_i32_1 = arith.constant 0 : i32
    return %c0_i32, %c0_i32_0 : i32, i32
  }
  func.func @transform_4(%arg0: i32) -> (i32, i32) {
    %c0_i32 = arith.constant 0 : i32
    %c0_i32_0 = arith.constant 0 : i32
    %c0_i32_1 = arith.constant 0 : i32
    return %c0_i32, %c0_i32_0 : i32, i32
  }
  func.func @transform_5(%arg0: i32) -> (i32, i32) {
    %c0_i32 = arith.constant 0 : i32
    %c0_i32_0 = arith.constant 0 : i32
    %c0_i32_1 = arith.constant 0 : i32
    return %c0_i32, %c0_i32_0 : i32, i32
  }
  func.func @transform_6(%arg0: i32) -> (i32, i32) {
    %c0_i32 = arith.constant 0 : i32
    %c0_i32_0 = arith.constant 0 : i32
    %c0_i32_1 = arith.constant 0 : i32
    return %c0_i32, %c0_i32_0 : i32, i32
  }
  func.func @transform_7(%arg0: i32) -> (i32, i32) {
    %c0_i32 = arith.constant 0 : i32
    %c0_i32_0 = arith.constant 0 : i32
    %c0_i32_1 = arith.constant 0 : i32
    return %c0_i32, %c0_i32_0 : i32, i32
  }
  func.func @transform_8(%arg0: i32) -> (i32, i32) {
    %c0_i32 = arith.constant 0 : i32
    %c0_i32_0 = arith.constant 0 : i32
    %c0_i32_1 = arith.constant 0 : i32
    return %c0_i32, %c0_i32_0 : i32, i32
  }
  func.func @transform_9(%arg0: i32) -> (i32, i32) {
    %c0_i32 = arith.constant 0 : i32
    %c0_i32_0 = arith.constant 0 : i32
    %c0_i32_1 = arith.constant 0 : i32
    return %c0_i32, %c0_i32_0 : i32, i32
  }
  func.func @transform_10(%arg0: i32) -> (i32, i32) {
    %c0_i32 = arith.constant 0 : i32
    %c0_i32_0 = arith.constant 0 : i32
    %c0_i32_1 = arith.constant 0 : i32
    return %c0_i32, %c0_i32_0 : i32, i32
  }
  func.func @transform_11(%arg0: i32) -> (i32, i32) {
    %c0_i32 = arith.constant 0 : i32
    %c0_i32_0 = arith.constant 0 : i32
    %c0_i32_1 = arith.constant 0 : i32
    return %c0_i32, %c0_i32_0 : i32, i32
  }
  func.func @transform_12(%arg0: i32) -> (i32, i32) {
    %c0_i32 = arith.constant 0 : i32
    %c0_i32_0 = arith.constant 0 : i32
    %c0_i32_1 = arith.constant 0 : i32
    return %c0_i32, %c0_i32_0 : i32, i32
  }
  func.func @transform_13(%arg0: i32) -> (i32, i32) {
    %c0_i32 = arith.constant 0 : i32
    %c0_i32_0 = arith.constant 0 : i32
    %c0_i32_1 = arith.constant 0 : i32
    return %c0_i32, %c0_i32_0 : i32, i32
  }
  func.func @transform_14(%arg0: i32) -> (i32, i32) {
    %c0_i32 = arith.constant 0 : i32
    %c0_i32_0 = arith.constant 0 : i32
    %c0_i32_1 = arith.constant 0 : i32
    return %c0_i32, %c0_i32_0 : i32, i32
  }
  func.func @transform_15(%arg0: i32) -> (i32, i32) {
    %c0_i32 = arith.constant 0 : i32
    %c0_i32_0 = arith.constant 0 : i32
    %c0_i32_1 = arith.constant 0 : i32
    return %c0_i32, %c0_i32_0 : i32, i32
  }
  func.func @transform_16(%arg0: i32) -> (i32, i32) {
    %c0_i32 = arith.constant 0 : i32
    %c0_i32_0 = arith.constant 0 : i32
    %c0_i32_1 = arith.constant 0 : i32
    return %c0_i32, %c0_i32_0 : i32, i32
  }
  func.func @transform_17(%arg0: i32) -> (i32, i32) {
    %c0_i32 = arith.constant 0 : i32
    %c0_i32_0 = arith.constant 0 : i32
    %c0_i32_1 = arith.constant 0 : i32
    return %c0_i32, %c0_i32_0 : i32, i32
  }
  func.func @transform_18(%arg0: i32) -> (i32, i32) {
    %c0_i32 = arith.constant 0 : i32
    %c0_i32_0 = arith.constant 0 : i32
    %c0_i32_1 = arith.constant 0 : i32
    return %c0_i32, %c0_i32_0 : i32, i32
  }
  func.func @transform_19(%arg0: i32) -> (i32, i32, i32) {
    %c0_i32 = arith.constant 0 : i32
    %c0_i32_0 = arith.constant 0 : i32
    %c0_i32_1 = arith.constant 0 : i32
    return %arg0, %c0_i32, %c0_i32_0 : i32, i32, i32
  }
}

</mosaic_0001>

<llo_original>
// kernel: _lambda_.6
$region0: #{_lambda_.6}
  #allocation0 [shape = 'u32[]', space=smem, size = 0x4, offset = 0x4, fixed_abs, tag = 'smem constant byte address 0x4 - core index']
  #allocation1 [shape = 'u32[72,128]{1,0:T(1,128)}', space=vmem, size = 0x9000, scoped, tag = 'internal scratch']
  %s0 = inlined_call_operand.vmem [shape: f32[2,8,1], index: 0, kind: input, shape index: {}]
  %s1 = inlined_call_operand.vmem [shape: f32[1,128], index: 1, kind: input, shape index: {}]
  %s2 = inlined_call_operand.vmem [shape: f32[1,128], index: 2, kind: input, shape index: {}]
  %s3 = inlined_call_operand.vmem [shape: f32[8,128], index: 3, kind: input, shape index: {}]
  %s4 = inlined_call_operand.vmem [shape: f32[2,8,128], index: 4, kind: output, shape index: {}]
  %s5 = sld [smem:[#allocation0]]
  $region26: #{_lambda_.6} parent=0
    _
  %s7 = ssub.s32 1, %s5
  %s8 = scalar_select 0, %s7, %s5
  // Predicated region
  $region2: #{_lambda_.6} parent=0 // pred_check
    _
  $region3: #{_lambda_.6} parent=0 // pred_check_branch
    %10 = sbr.rel (0) target = $region5
  $region4: #{_lambda_.6} parent=0 // pred_region
    _
  $region5: #{_lambda_.6} parent=0 // pred_fallthru
    _
  // Predicated region
  $region6: #{_lambda_.6} parent=0 // pred_check
    _
  $region7: #{_lambda_.6} parent=0 // pred_check_branch
    %12 = sbr.rel (0) target = $region9
  $region8: #{_lambda_.6} parent=0 // pred_region
    _
  $region9: #{_lambda_.6} parent=0 // pred_fallthru
    _
  // Predicated region
  $region10: #{_lambda_.6} parent=0 // pred_check
    _
  $region11: #{_lambda_.6} parent=0 // pred_check_branch
    %14 = sbr.rel (0) target = $region13
  $region12: #{_lambda_.6} parent=0 // pred_region
    _
  $region13: #{_lambda_.6} parent=0 // pred_fallthru
    _
  // Predicated region
  $region14: #{_lambda_.6} parent=0 // pred_check
    _
  $region15: #{_lambda_.6} parent=0 // pred_check_branch
    %16 = sbr.rel (0) target = $region17
  $region16: #{_lambda_.6} parent=0 // pred_region
    _
  $region17: #{_lambda_.6} parent=0 // pred_fallthru
    _
  %v17 = vld [vmem:[%s0] sm:$0xff]
  %v18 = vld [vmem:[%s0 + $0x8] sm:$0xff]
  %v19 = vld [vmem:[%s1] sm:$0x1]
  %21 = vset.pattern.permute.xlu0 0
  %22 = vperm.xlu0 %21, %v17
  %v23 = vpop.permute.xlu0 %22
  %26 = vset.pattern.permute.xlu0 0
  %27 = vperm.xlu0 %26, %v18
  %v28 = vpop.permute.xlu0 %27
  %v31 = vperm.slane %v19, 0
  %v33 = vmul.f32 %v23, %v31
  %v34 = vmul.f32 %v28, %v31
  %v35 = vld [vmem:[%s2] sm:$0x1]
  %v37 = vperm.slane %v35, 0
  %v39 = vadd.f32 %v33, %v37
  %v40 = vadd.f32 %v34, %v37
  %v41 = vld [vmem:[%s3] sm:$0xff]
  %v42 = vadd.f32 %v39, %v41
  %v43 = vadd.f32 %v40, %v41
  %44 = vst [vmem:[%s4] sm:$0xff] %v42
  %45 = vst [vmem:[%s4 + $0x8] sm:$0xff] %v43
  // Predicated region
  $region18: #{_lambda_.6} parent=0 // pred_check
    _
  $region19: #{_lambda_.6} parent=0 // pred_check_branch
    %47 = sbr.rel (0) target = $region21
  $region20: #{_lambda_.6} parent=0 // pred_region
    _
  $region21: #{_lambda_.6} parent=0 // pred_fallthru
    _
  // Predicated region
  $region22: #{_lambda_.6} parent=0 // pred_check
    _
  $region23: #{_lambda_.6} parent=0 // pred_check_branch
    %49 = sbr.rel (0) target = $region25
  $region24: #{_lambda_.6} parent=0 // pred_region
    _
  $region25: #{_lambda_.6} parent=0 // pred_fallthru
    _

// kernel: _lambda_.9
$region0: #{_lambda_.9}
  #allocation0 [shape = 'u32[]', space=smem, size = 0x4, offset = 0x4, fixed_abs, tag = 'smem constant byte address 0x4 - core index']
  #allocation1 [shape = 'u32[72,128]{1,0:T(1,128)}', space=vmem, size = 0x9000, scoped, tag = 'internal scratch']
  #allocation2 [shape = 'f32[1,1]{1,0:T(1,128)S(1)}', space=vmem, size = 0x200, scoped, tag = 'scoped memory for _lambda_.9']
  %s0 = inlined_call_operand.vmem [shape: f32[2,8,128], index: 0, kind: input, shape index: {}]
  %s1 = inlined_call_operand.vmem [shape: f32[1,128], index: 1, kind: input, shape index: {}]
  %s2 = inlined_call_operand.<no memory space> [shape: f32[1,1], index: 2, kind: input, shape index: {}]
  %s3 = inlined_call_operand.vmem [shape: f32[2,8,1], index: 3, kind: output, shape index: {}]
  %s4 = sld [smem:[#allocation0]]
  $region22: #{_lambda_.9} parent=0
    _
  %s6 = ssub.s32 1, %s4
  %s7 = scalar_select 0, %s6, %s4
  %v8 = vstv %s2
  %9 = vst [vmem:[#allocation2] sm:$0x1] %v8
  // Predicated region
  $region2: #{_lambda_.9} parent=0 // pred_check
    _
  $region3: #{_lambda_.9} parent=0 // pred_check_branch
    %11 = sbr.rel (0) target = $region5
  $region4: #{_lambda_.9} parent=0 // pred_region
    _
  $region5: #{_lambda_.9} parent=0 // pred_fallthru
    _
  // Predicated region
  $region6: #{_lambda_.9} parent=0 // pred_check
    _
  $region7: #{_lambda_.9} parent=0 // pred_check_branch
    %13 = sbr.rel (0) target = $region9
  $region8: #{_lambda_.9} parent=0 // pred_region
    _
  $region9: #{_lambda_.9} parent=0 // pred_fallthru
    _
  // Predicated region
  $region10: #{_lambda_.9} parent=0 // pred_check
    _
  $region11: #{_lambda_.9} parent=0 // pred_check_branch
    %15 = sbr.rel (0) target = $region13
  $region12: #{_lambda_.9} parent=0 // pred_region
    _
  $region13: #{_lambda_.9} parent=0 // pred_fallthru
    _
  %v16 = vld [vmem:[%s0] sm:$0xff]
  %v17 = vld [vmem:[%s0 + $0x8] sm:$0xff]
  %v18 = vld [vmem:[%s1] sm:$0x1]
  %v20 = vperm.slane %v18, 0
  %v22 = vmul.f32 %v16, %v20
  %v23 = vmul.f32 %v17, %v20
  %24 = vadd.xlane.f32.xlu0 %v22
  %v25 = vpop.xlane.xlu0 %24
  %26 = vadd.xlane.f32.xlu0 %v23
  %v27 = vpop.xlane.xlu0 %26
  %v28 = vld [vmem:[#allocation2] sm:$0x1]
  %v30 = vperm.slane %v28, 0
  %v32 = vadd.f32 %v25, %v30
  %v33 = vadd.f32 %v27, %v30
  %vm34 = vcmask 7168
  %35 = vst.msk [vmem:[%s3] sm:$0xff] %vm34, %v32
  %36 = vst.msk [vmem:[%s3 + $0x8] sm:$0xff] %vm34, %v33
  // Predicated region
  $region14: #{_lambda_.9} parent=0 // pred_check
    _
  $region15: #{_lambda_.9} parent=0 // pred_check_branch
    %38 = sbr.rel (0) target = $region17
  $region16: #{_lambda_.9} parent=0 // pred_region
    _
  $region17: #{_lambda_.9} parent=0 // pred_fallthru
    _
  // Predicated region
  $region18: #{_lambda_.9} parent=0 // pred_check
    _
  $region19: #{_lambda_.9} parent=0 // pred_check_branch
    %40 = sbr.rel (0) target = $region21
  $region20: #{_lambda_.9} parent=0 // pred_region
    _
  $region21: #{_lambda_.9} parent=0 // pred_fallthru
    _

// kernel: _lambda_.8
$region0: #{_lambda_.8}
  #allocation0 [shape = 'u32[]', space=smem, size = 0x4, offset = 0x4, fixed_abs, tag = 'smem constant byte address 0x4 - core index']
  #allocation1 [shape = 'u32[72,128]{1,0:T(1,128)}', space=vmem, size = 0x9000, scoped, tag = 'internal scratch']
  %s0 = inlined_call_operand.vmem [shape: f32[2,8,128], index: 0, kind: input, shape index: {}]
  %s1 = inlined_call_operand.vmem [shape: f32[2,8,128], index: 1, kind: input, shape index: {}]
  %s2 = inlined_call_operand.vmem [shape: f32[8,8], index: 2, kind: input, shape index: {}]
  %s3 = inlined_call_operand.hbm [shape: f32[128,384], index: 3, kind: input, shape index: {}]
  %s4 = inlined_call_operand.vmem [shape: f32[1,384], index: 4, kind: input, shape index: {}]
  %s5 = inlined_call_operand.hbm [shape: f32[128,128], index: 5, kind: input, shape index: {}]
  %s6 = inlined_call_operand.vmem [shape: f32[1,128], index: 6, kind: input, shape index: {}]
  %s7 = inlined_call_operand.hbm [shape: f32[128,128], index: 7, kind: input, shape index: {}]
  %s8 = inlined_call_operand.hbm [shape: f32[1,128], index: 8, kind: input, shape index: {}]
  %s9 = inlined_call_operand.vmem [shape: f32[128,256], index: 9, kind: input, shape index: {}]
  %s10 = inlined_call_operand.vmem [shape: f32[1,256], index: 10, kind: input, shape index: {}]
  %s11 = inlined_call_operand.hbm [shape: f32[128,128], index: 11, kind: input, shape index: {}]
  %s12 = inlined_call_operand.hbm [shape: f32[1,128], index: 12, kind: input, shape index: {}]
  %s13 = inlined_call_operand.hbm [shape: f32[1,128], index: 13, kind: input, shape index: {}]
  %s14 = inlined_call_operand.hbm [shape: f32[1,128], index: 14, kind: input, shape index: {}]
  %s15 = inlined_call_operand.vmem [shape: f32[128,64], index: 15, kind: input, shape index: {}]
  %s16 = inlined_call_operand.hbm [shape: f32[1,64], index: 16, kind: input, shape index: {}]
  %s17 = inlined_call_operand.hbm [shape: f32[64,128], index: 17, kind: input, shape index: {}]
  %s18 = inlined_call_operand.hbm [shape: f32[1,128], index: 18, kind: input, shape index: {}]
  %s19 = inlined_call_operand.vmem [shape: f32[2,8,128], index: 19, kind: output, shape index: {}]
  %s20 = sld [smem:[#allocation0]]
  $region153: #{_lambda_.8} parent=0
    _
  %s22 = ssub.s32 1, %s20
  %s23 = scalar_select 0, %s22, %s20
  $region1: #{_lambda_.8} parent=0
    #allocation2 [shape = 'u8[196608]{0}', space=vmem, size = 0x30000, scoped, tag = 'input window, operand 3, single buffered']
    #allocation3 [shape = 's32[2]{0}', space=sflag, size = 0x8, scoped, tag = 'scoped memory for _lambda_.8']
    #allocation4 [shape = 'u8[65536]{0}', space=vmem, size = 0x10000, scoped, tag = 'input window, operand 5, single buffered']
    #allocation5 [shape = 's32[1]{0}', space=sflag, size = 0x4, scoped, tag = 'scoped memory for _lambda_.8']
    #allocation6 [shape = 'u8[65536]{0}', space=vmem, size = 0x10000, scoped, tag = 'input window, operand 7, single buffered']
    #allocation7 [shape = 'u8[512]{0}', space=vmem, size = 0x400, scoped, tag = 'input window, operand 8, single buffered']
    #allocation8 [shape = 's32[1]{0}', space=sflag, size = 0x4, scoped, tag = 'scoped memory for _lambda_.8']
    #allocation9 [shape = 'u8[65536]{0}', space=vmem, size = 0x10000, scoped, tag = 'input window, operand 11, single buffered']
    #allocation10 [shape = 'u8[512]{0}', space=vmem, size = 0x400, scoped, tag = 'input window, operand 12, single buffered']
    #allocation11 [shape = 's32[1]{0}', space=sflag, size = 0x4, scoped, tag = 'scoped memory for _lambda_.8']
    #allocation12 [shape = 'u8[512]{0}', space=vmem, size = 0x400, scoped, tag = 'input window, operand 13, single buffered']
    #allocation13 [shape = 'u8[512]{0}', space=vmem, size = 0x400, scoped, tag = 'input window, operand 14, single buffered']
    #allocation14 [shape = 's32[1]{0}', space=sflag, size = 0x4, scoped, tag = 'scoped memory for _lambda_.8']
    #allocation15 [shape = 'u8[512]{0}', space=vmem, size = 0x400, scoped, tag = 'input window, operand 16, single buffered']
    #allocation16 [shape = 'u8[32768]{0}', space=vmem, size = 0x8000, scoped, tag = 'input window, operand 17, single buffered']
    #allocation17 [shape = 's32[1]{0}', space=sflag, size = 0x4, scoped, tag = 'scoped memory for _lambda_.8']
    #allocation18 [shape = 'u8[512]{0}', space=vmem, size = 0x400, scoped, tag = 'input window, operand 18, single buffered']
    %24 = vsyncpa [#allocation3], 0
    %25 = vsyncpa [#allocation5], 0
    %26 = vsyncpa [#allocation8], 0
    %27 = vsyncpa [#allocation11], 0
    %28 = vsyncpa [#allocation14], 0
    %29 = vsyncpa [#allocation17], 0
    loop: start=0, step=1, limit=4
    $region2: #{_lambda_.8} parent=1 // loop_pre_header
      _
    $region3: #{_lambda_.8} parent=1 // loop_header
      %s31 = sphi 0, %s35
      %p32 = scmp.ge.s32.totalorder %s31, 4
      %s41 = sphi 0, %s43
      %s44 = sphi 0, %s41
      %s45 = sphi 0, %s44
      %s61 = sphi 0, %s45
      %s67 = sphi 0, %s69
      %s70 = sphi 0, %s67
      %s71 = sphi 0, %s70
      %s87 = sphi 0, %s71
      %s91 = sphi 0, %s91
      %s93 = sphi 0, %s91
      %s94 = sphi 0, %s93
      %s108 = sphi 0, %s94
      %s112 = sphi 0, %s112
      %s114 = sphi 0, %s112
      %s115 = sphi 0, %s114
      %s129 = sphi 0, %s115
      %s133 = sphi 0, %s133
      %s135 = sphi 0, %s133
      %s136 = sphi 0, %s135
      %s150 = sphi 0, %s136
      %s154 = sphi 0, %s154
      %s156 = sphi 0, %s154
      %s157 = sphi 0, %s156
      %s171 = sphi 0, %s157
      %s175 = sphi 0, %s175
      %s177 = sphi 0, %s175
      %s178 = sphi 0, %s177
      %s192 = sphi 0, %s178
      %s196 = sphi 0, %s196
      %s198 = sphi 0, %s196
      %s199 = sphi 0, %s198
      %s213 = sphi 0, %s199
      %s217 = sphi 0, %s217
      %s219 = sphi 0, %s217
      %s220 = sphi 0, %s219
      %s234 = sphi 0, %s220
      %s238 = sphi 0, %s238
      %s240 = sphi 0, %s238
      %s241 = sphi 0, %s240
      %s255 = sphi 0, %s241
      %s259 = sphi 0, %s259
      %s261 = sphi 0, %s259
      %s262 = sphi 0, %s261
      %s276 = sphi 0, %s262
      %s280 = sphi 0, %s280
      %s282 = sphi 0, %s280
      %s283 = sphi 0, %s282
      %s297 = sphi 0, %s283
      %s301 = sphi 0, %s301
      %s303 = sphi 0, %s301
      %s304 = sphi 0, %s303
      %s318 = sphi 0, %s304
      %s322 = sphi 0, %s322
      %s324 = sphi 0, %s322
      %s325 = sphi 0, %s324
      %s339 = sphi 0, %s325
      %s343 = sphi 0, %s343
      %s345 = sphi 0, %s343
      %s346 = sphi 0, %s345
      %s360 = sphi 0, %s346
      %s364 = sphi 0, %s364
      %s366 = sphi 0, %s364
      %s367 = sphi 0, %s366
      %s381 = sphi 0, %s367
      %s385 = sphi 0, %s385
      %s387 = sphi 0, %s385
      %s388 = sphi 0, %s387
      %s402 = sphi 0, %s388
      %s406 = sphi 0, %s406
      %s408 = sphi 0, %s406
      %s409 = sphi 0, %s408
      %s423 = sphi 0, %s409
      %s427 = sphi 0, %s427
      %s429 = sphi 0, %s427
      %s430 = sphi 0, %s429
      %s444 = sphi 0, %s430
      %s450 = sphi 0, %s452
      %s453 = sphi 0, %s450
      %s454 = sphi 0, %s453
      %s470 = sphi 0, %s454
    $region4: #{_lambda_.8} parent=1 // loop_header_branch
      %34 = sbr.rel (%p32) target = $region8
    $region5: #{_lambda_.8} parent=1 // loop_body
      %s36 = ssub.s32 %s31, 1
      %s37 = ssub.s32 %s31, 2
      %s38 = sadd.s32 %s31, 1
      %s39 = ssub.s32 %s31, %s38
      %p40 = scmp.eq.s32.totalorder %s39, 0
      %s42 = sadd.s32 %s41, 1
      %s43 = scalar_select %p40, %s41, %s42
      %p46 = pneg %p40
      %p47 = scmp.eq.s32.totalorder %s31, 1
      %p48 = por %p46, %p47
      %p49 = scmp.ne.s32.totalorder %s41, %s44
      %p50 = scmp.eq.s32.totalorder %s31, 0
      %p51 = por %p49, %p50
      %p52 = scmp.ne.s32.totalorder %s41, %s44
      %p53 = scmp.eq.s32.totalorder %s36, 1
      %p54 = por %p52, %p53
      %p55 = scmp.ne.s32.totalorder %s44, %s45
      %p56 = scmp.eq.s32.totalorder %s36, 0
      %p57 = por %p55, %p56
      %p58 = scmp.ne.s32.totalorder %s44, %s45
      %p59 = scmp.eq.s32.totalorder %s37, 1
      %p60 = por %p58, %p59
      %p62 = scmp.ne.s32.totalorder %s45, %s61
      %p63 = scmp.eq.s32.totalorder %s37, 0
      %p64 = por %p62, %p63
      %s65 = ssub.s32 %s31, %s38
      %p66 = scmp.eq.s32.totalorder %s65, 0
      %s68 = sadd.s32 %s67, 1
      %s69 = scalar_select %p66, %s67, %s68
      %p72 = pneg %p66
      %p73 = scmp.eq.s32.totalorder %s31, 1
      %p74 = por %p72, %p73
      %p75 = scmp.ne.s32.totalorder %s67, %s70
      %p76 = scmp.eq.s32.totalorder %s31, 0
      %p77 = por %p75, %p76
      %p78 = scmp.ne.s32.totalorder %s67, %s70
      %p79 = scmp.eq.s32.totalorder %s36, 1
      %p80 = por %p78, %p79
      %p81 = scmp.ne.s32.totalorder %s70, %s71
      %p82 = scmp.eq.s32.totalorder %s36, 0
      %p83 = por %p81, %p82
      %p84 = scmp.ne.s32.totalorder %s70, %s71
      %p85 = scmp.eq.s32.totalorder %s37, 1
      %p86 = por %p84, %p85
      %p88 = scmp.ne.s32.totalorder %s71, %s87
      %p89 = scmp.eq.s32.totalorder %s37, 0
      %p90 = por %p88, %p89
      %s92 = sadd.s32 %s91, 1
      %p95 = scmp.eq.s32.totalorder %s31, 1
      %p96 = scmp.ne.s32.totalorder %s91, %s93
      %p97 = scmp.eq.s32.totalorder %s31, 0
      %p98 = por %p96, %p97
      %p99 = scmp.ne.s32.totalorder %s91, %s93
      %p100 = scmp.eq.s32.totalorder %s36, 1
      %p101 = por %p99, %p100
      %p102 = scmp.ne.s32.totalorder %s93, %s94
      %p103 = scmp.eq.s32.totalorder %s36, 0
      %p104 = por %p102, %p103
      %p105 = scmp.ne.s32.totalorder %s93, %s94
      %p106 = scmp.eq.s32.totalorder %s37, 1
      %p107 = por %p105, %p106
      %p109 = scmp.ne.s32.totalorder %s94, %s108
      %p110 = scmp.eq.s32.totalorder %s37, 0
      %p111 = por %p109, %p110
      %s113 = sadd.s32 %s112, 1
      %p116 = scmp.eq.s32.totalorder %s31, 1
      %p117 = scmp.ne.s32.totalorder %s112, %s114
      %p118 = scmp.eq.s32.totalorder %s31, 0
      %p119 = por %p117, %p118
      %p120 = scmp.ne.s32.totalorder %s112, %s114
      %p121 = scmp.eq.s32.totalorder %s36, 1
      %p122 = por %p120, %p121
      %p123 = scmp.ne.s32.totalorder %s114, %s115
      %p124 = scmp.eq.s32.totalorder %s36, 0
      %p125 = por %p123, %p124
      %p126 = scmp.ne.s32.totalorder %s114, %s115
      %p127 = scmp.eq.s32.totalorder %s37, 1
      %p128 = por %p126, %p127
      %p130 = scmp.ne.s32.totalorder %s115, %s129
      %p131 = scmp.eq.s32.totalorder %s37, 0
      %p132 = por %p130, %p131
      %s134 = sadd.s32 %s133, 1
      %p137 = scmp.eq.s32.totalorder %s31, 1
      %p138 = scmp.ne.s32.totalorder %s133, %s135
      %p139 = scmp.eq.s32.totalorder %s31, 0
      %p140 = por %p138, %p139
      %p141 = scmp.ne.s32.totalorder %s133, %s135
      %p142 = scmp.eq.s32.totalorder %s36, 1
      %p143 = por %p141, %p142
      %p144 = scmp.ne.s32.totalorder %s135, %s136
      %p145 = scmp.eq.s32.totalorder %s36, 0
      %p146 = por %p144, %p145
      %p147 = scmp.ne.s32.totalorder %s135, %s136
      %p148 = scmp.eq.s32.totalorder %s37, 1
      %p149 = por %p147, %p148
      %p151 = scmp.ne.s32.totalorder %s136, %s150
      %p152 = scmp.eq.s32.totalorder %s37, 0
      %p153 = por %p151, %p152
      %s155 = sadd.s32 %s154, 1
      %p158 = scmp.eq.s32.totalorder %s31, 1
      %p159 = scmp.ne.s32.totalorder %s154, %s156
      %p160 = scmp.eq.s32.totalorder %s31, 0
      %p161 = por %p159, %p160
      %p162 = scmp.ne.s32.totalorder %s154, %s156
      %p163 = scmp.eq.s32.totalorder %s36, 1
      %p164 = por %p162, %p163
      %p165 = scmp.ne.s32.totalorder %s156, %s157
      %p166 = scmp.eq.s32.totalorder %s36, 0
      %p167 = por %p165, %p166
      %p168 = scmp.ne.s32.totalorder %s156, %s157
      %p169 = scmp.eq.s32.totalorder %s37, 1
      %p170 = por %p168, %p169
      %p172 = scmp.ne.s32.totalorder %s157, %s171
      %p173 = scmp.eq.s32.totalorder %s37, 0
      %p174 = por %p172, %p173
      %s176 = sadd.s32 %s175, 1
      %p179 = scmp.eq.s32.totalorder %s31, 1
      %p180 = scmp.ne.s32.totalorder %s175, %s177
      %p181 = scmp.eq.s32.totalorder %s31, 0
      %p182 = por %p180, %p181
      %p183 = scmp.ne.s32.totalorder %s175, %s177
      %p184 = scmp.eq.s32.totalorder %s36, 1
      %p185 = por %p183, %p184
      %p186 = scmp.ne.s32.totalorder %s177, %s178
      %p187 = scmp.eq.s32.totalorder %s36, 0
      %p188 = por %p186, %p187
      %p189 = scmp.ne.s32.totalorder %s177, %s178
      %p190 = scmp.eq.s32.totalorder %s37, 1
      %p191 = por %p189, %p190
      %p193 = scmp.ne.s32.totalorder %s178, %s192
      %p194 = scmp.eq.s32.totalorder %s37, 0
      %p195 = por %p193, %p194
      %s197 = sadd.s32 %s196, 1
      %p200 = scmp.eq.s32.totalorder %s31, 1
      %p201 = scmp.ne.s32.totalorder %s196, %s198
      %p202 = scmp.eq.s32.totalorder %s31, 0
      %p203 = por %p201, %p202
      %p204 = scmp.ne.s32.totalorder %s196, %s198
      %p205 = scmp.eq.s32.totalorder %s36, 1
      %p206 = por %p204, %p205
      %p207 = scmp.ne.s32.totalorder %s198, %s199
      %p208 = scmp.eq.s32.totalorder %s36, 0
      %p209 = por %p207, %p208
      %p210 = scmp.ne.s32.totalorder %s198, %s199
      %p211 = scmp.eq.s32.totalorder %s37, 1
      %p212 = por %p210, %p211
      %p214 = scmp.ne.s32.totalorder %s199, %s213
      %p215 = scmp.eq.s32.totalorder %s37, 0
      %p216 = por %p214, %p215
      %s218 = sadd.s32 %s217, 1
      %p221 = scmp.eq.s32.totalorder %s31, 1
      %p222 = scmp.ne.s32.totalorder %s217, %s219
      %p223 = scmp.eq.s32.totalorder %s31, 0
      %p224 = por %p222, %p223
      %p225 = scmp.ne.s32.totalorder %s217, %s219
      %p226 = scmp.eq.s32.totalorder %s36, 1
      %p227 = por %p225, %p226
      %p228 = scmp.ne.s32.totalorder %s219, %s220
      %p229 = scmp.eq.s32.totalorder %s36, 0
      %p230 = por %p228, %p229
      %p231 = scmp.ne.s32.totalorder %s219, %s220
      %p232 = scmp.eq.s32.totalorder %s37, 1
      %p233 = por %p231, %p232
      %p235 = scmp.ne.s32.totalorder %s220, %s234
      %p236 = scmp.eq.s32.totalorder %s37, 0
      %p237 = por %p235, %p236
      %s239 = sadd.s32 %s238, 1
      %p242 = scmp.eq.s32.totalorder %s31, 1
      %p243 = scmp.ne.s32.totalorder %s238, %s240
      %p244 = scmp.eq.s32.totalorder %s31, 0
      %p245 = por %p243, %p244
      %p246 = scmp.ne.s32.totalorder %s238, %s240
      %p247 = scmp.eq.s32.totalorder %s36, 1
      %p248 = por %p246, %p247
      %p249 = scmp.ne.s32.totalorder %s240, %s241
      %p250 = scmp.eq.s32.totalorder %s36, 0
      %p251 = por %p249, %p250
      %p252 = scmp.ne.s32.totalorder %s240, %s241
      %p253 = scmp.eq.s32.totalorder %s37, 1
      %p254 = por %p252, %p253
      %p256 = scmp.ne.s32.totalorder %s241, %s255
      %p257 = scmp.eq.s32.totalorder %s37, 0
      %p258 = por %p256, %p257
      %s260 = sadd.s32 %s259, 1
      %p263 = scmp.eq.s32.totalorder %s31, 1
      %p264 = scmp.ne.s32.totalorder %s259, %s261
      %p265 = scmp.eq.s32.totalorder %s31, 0
      %p266 = por %p264, %p265
      %p267 = scmp.ne.s32.totalorder %s259, %s261
      %p268 = scmp.eq.s32.totalorder %s36, 1
      %p269 = por %p267, %p268
      %p270 = scmp.ne.s32.totalorder %s261, %s262
      %p271 = scmp.eq.s32.totalorder %s36, 0
      %p272 = por %p270, %p271
      %p273 = scmp.ne.s32.totalorder %s261, %s262
      %p274 = scmp.eq.s32.totalorder %s37, 1
      %p275 = por %p273, %p274
      %p277 = scmp.ne.s32.totalorder %s262, %s276
      %p278 = scmp.eq.s32.totalorder %s37, 0
      %p279 = por %p277, %p278
      %s281 = sadd.s32 %s280, 1
      %p284 = scmp.eq.s32.totalorder %s31, 1
      %p285 = scmp.ne.s32.totalorder %s280, %s282
      %p286 = scmp.eq.s32.totalorder %s31, 0
      %p287 = por %p285, %p286
      %p288 = scmp.ne.s32.totalorder %s280, %s282
      %p289 = scmp.eq.s32.totalorder %s36, 1
      %p290 = por %p288, %p289
      %p291 = scmp.ne.s32.totalorder %s282, %s283
      %p292 = scmp.eq.s32.totalorder %s36, 0
      %p293 = por %p291, %p292
      %p294 = scmp.ne.s32.totalorder %s282, %s283
      %p295 = scmp.eq.s32.totalorder %s37, 1
      %p296 = por %p294, %p295
      %p298 = scmp.ne.s32.totalorder %s283, %s297
      %p299 = scmp.eq.s32.totalorder %s37, 0
      %p300 = por %p298, %p299
      %s302 = sadd.s32 %s301, 1
      %p305 = scmp.eq.s32.totalorder %s31, 1
      %p306 = scmp.ne.s32.totalorder %s301, %s303
      %p307 = scmp.eq.s32.totalorder %s31, 0
      %p308 = por %p306, %p307
      %p309 = scmp.ne.s32.totalorder %s301, %s303
      %p310 = scmp.eq.s32.totalorder %s36, 1
      %p311 = por %p309, %p310
      %p312 = scmp.ne.s32.totalorder %s303, %s304
      %p313 = scmp.eq.s32.totalorder %s36, 0
      %p314 = por %p312, %p313
      %p315 = scmp.ne.s32.totalorder %s303, %s304
      %p316 = scmp.eq.s32.totalorder %s37, 1
      %p317 = por %p315, %p316
      %p319 = scmp.ne.s32.totalorder %s304, %s318
      %p320 = scmp.eq.s32.totalorder %s37, 0
      %p321 = por %p319, %p320
      %s323 = sadd.s32 %s322, 1
      %p326 = scmp.eq.s32.totalorder %s31, 1
      %p327 = scmp.ne.s32.totalorder %s322, %s324
      %p328 = scmp.eq.s32.totalorder %s31, 0
      %p329 = por %p327, %p328
      %p330 = scmp.ne.s32.totalorder %s322, %s324
      %p331 = scmp.eq.s32.totalorder %s36, 1
      %p332 = por %p330, %p331
      %p333 = scmp.ne.s32.totalorder %s324, %s325
      %p334 = scmp.eq.s32.totalorder %s36, 0
      %p335 = por %p333, %p334
      %p336 = scmp.ne.s32.totalorder %s324, %s325
      %p337 = scmp.eq.s32.totalorder %s37, 1
      %p338 = por %p336, %p337
      %p340 = scmp.ne.s32.totalorder %s325, %s339
      %p341 = scmp.eq.s32.totalorder %s37, 0
      %p342 = por %p340, %p341
      %s344 = sadd.s32 %s343, 1
      %p347 = scmp.eq.s32.totalorder %s31, 1
      %p348 = scmp.ne.s32.totalorder %s343, %s345
      %p349 = scmp.eq.s32.totalorder %s31, 0
      %p350 = por %p348, %p349
      %p351 = scmp.ne.s32.totalorder %s343, %s345
      %p352 = scmp.eq.s32.totalorder %s36, 1
      %p353 = por %p351, %p352
      %p354 = scmp.ne.s32.totalorder %s345, %s346
      %p355 = scmp.eq.s32.totalorder %s36, 0
      %p356 = por %p354, %p355
      %p357 = scmp.ne.s32.totalorder %s345, %s346
      %p358 = scmp.eq.s32.totalorder %s37, 1
      %p359 = por %p357, %p358
      %p361 = scmp.ne.s32.totalorder %s346, %s360
      %p362 = scmp.eq.s32.totalorder %s37, 0
      %p363 = por %p361, %p362
      %s365 = sadd.s32 %s364, 1
      %p368 = scmp.eq.s32.totalorder %s31, 1
      %p369 = scmp.ne.s32.totalorder %s364, %s366
      %p370 = scmp.eq.s32.totalorder %s31, 0
      %p371 = por %p369, %p370
      %p372 = scmp.ne.s32.totalorder %s364, %s366
      %p373 = scmp.eq.s32.totalorder %s36, 1
      %p374 = por %p372, %p373
      %p375 = scmp.ne.s32.totalorder %s366, %s367
      %p376 = scmp.eq.s32.totalorder %s36, 0
      %p377 = por %p375, %p376
      %p378 = scmp.ne.s32.totalorder %s366, %s367
      %p379 = scmp.eq.s32.totalorder %s37, 1
      %p380 = por %p378, %p379
      %p382 = scmp.ne.s32.totalorder %s367, %s381
      %p383 = scmp.eq.s32.totalorder %s37, 0
      %p384 = por %p382, %p383
      %s386 = sadd.s32 %s385, 1
      %p389 = scmp.eq.s32.totalorder %s31, 1
      %p390 = scmp.ne.s32.totalorder %s385, %s387
      %p391 = scmp.eq.s32.totalorder %s31, 0
      %p392 = por %p390, %p391
      %p393 = scmp.ne.s32.totalorder %s385, %s387
      %p394 = scmp.eq.s32.totalorder %s36, 1
      %p395 = por %p393, %p394
      %p396 = scmp.ne.s32.totalorder %s387, %s388
      %p397 = scmp.eq.s32.totalorder %s36, 0
      %p398 = por %p396, %p397
      %p399 = scmp.ne.s32.totalorder %s387, %s388
      %p400 = scmp.eq.s32.totalorder %s37, 1
      %p401 = por %p399, %p400
      %p403 = scmp.ne.s32.totalorder %s388, %s402
      %p404 = scmp.eq.s32.totalorder %s37, 0
      %p405 = por %p403, %p404
      %s407 = sadd.s32 %s406, 1
      %p410 = scmp.eq.s32.totalorder %s31, 1
      %p411 = scmp.ne.s32.totalorder %s406, %s408
      %p412 = scmp.eq.s32.totalorder %s31, 0
      %p413 = por %p411, %p412
      %p414 = scmp.ne.s32.totalorder %s406, %s408
      %p415 = scmp.eq.s32.totalorder %s36, 1
      %p416 = por %p414, %p415
      %p417 = scmp.ne.s32.totalorder %s408, %s409
      %p418 = scmp.eq.s32.totalorder %s36, 0
      %p419 = por %p417, %p418
      %p420 = scmp.ne.s32.totalorder %s408, %s409
      %p421 = scmp.eq.s32.totalorder %s37, 1
      %p422 = por %p420, %p421
      %p424 = scmp.ne.s32.totalorder %s409, %s423
      %p425 = scmp.eq.s32.totalorder %s37, 0
      %p426 = por %p424, %p425
      %s428 = sadd.s32 %s427, 1
      %p431 = scmp.eq.s32.totalorder %s31, 1
      %p432 = scmp.ne.s32.totalorder %s427, %s429
      %p433 = scmp.eq.s32.totalorder %s31, 0
      %p434 = por %p432, %p433
      %p435 = scmp.ne.s32.totalorder %s427, %s429
      %p436 = scmp.eq.s32.totalorder %s36, 1
      %p437 = por %p435, %p436
      %p438 = scmp.ne.s32.totalorder %s429, %s430
      %p439 = scmp.eq.s32.totalorder %s36, 0
      %p440 = por %p438, %p439
      %p441 = scmp.ne.s32.totalorder %s429, %s430
      %p442 = scmp.eq.s32.totalorder %s37, 1
      %p443 = por %p441, %p442
      %p445 = scmp.ne.s32.totalorder %s430, %s444
      %p446 = scmp.eq.s32.totalorder %s37, 0
      %p447 = por %p445, %p446
      %s448 = ssub.s32 %s31, %s38
      %p449 = scmp.eq.s32.totalorder %s448, 0
      %s451 = sadd.s32 %s450, 1
      %s452 = scalar_select %p449, %s450, %s451
      %p455 = pneg %p449
      %p456 = scmp.eq.s32.totalorder %s31, 1
      %p457 = por %p455, %p456
      %p458 = scmp.ne.s32.totalorder %s450, %s453
      %p459 = scmp.eq.s32.totalorder %s31, 0
      %p460 = por %p458, %p459
      %p461 = scmp.ne.s32.totalorder %s450, %s453
      %p462 = scmp.eq.s32.totalorder %s36, 1
      %p463 = por %p461, %p462
      %p464 = scmp.ne.s32.totalorder %s453, %s454
      %p465 = scmp.eq.s32.totalorder %s36, 0
      %p466 = por %p464, %p465
      %p467 = scmp.ne.s32.totalorder %s453, %s454
      %p468 = scmp.eq.s32.totalorder %s37, 1
      %p469 = por %p467, %p468
      %p471 = scmp.ne.s32.totalorder %s454, %s470
      %p472 = scmp.eq.s32.totalorder %s37, 0
      %p473 = por %p471, %p472
      %p474 = scmp.le.s32.totalorder 1, %s31
      %p475 = scmp.lt.s32.totalorder %s31, 3
      %p476 = pnand %p474, %p475
      %p477 = pneg %p476
      // Predicated region
      $region9: #{_lambda_.8} parent=5 // pred_check
        _
      $region10: #{_lambda_.8} parent=5 // pred_check_branch
        %479 = sbr.rel (%p476) target = $region12
      $region11: #{_lambda_.8} parent=5 // pred_region
        %s480 = ssub.s32 %s31, 1
        // Predicated region
        $region13: #{_lambda_.8} parent=11 // pred_check
          %p481 = pneg %p104
        $region14: #{_lambda_.8} parent=11 // pred_check_branch
          %483 = sbr.rel (%p481) target = $region16
        $region15: #{_lambda_.8} parent=11 // pred_region
          _
        $region16: #{_lambda_.8} parent=11 // pred_fallthru
          _
        // Predicated region
        $region17: #{_lambda_.8} parent=11 // pred_check
          %p484 = pneg %p125
        $region18: #{_lambda_.8} parent=11 // pred_check_branch
          %486 = sbr.rel (%p484) target = $region20
        $region19: #{_lambda_.8} parent=11 // pred_region
          %488 = vsyncadd [#allocation3], 0
          %s489 = sshll.u32 %s3, 4
          %s490 = int_to_ptr.hbm [resolvable:$true] %s489
          %s491 = sshll.u32 [#allocation2], 4
          %s492 = int_to_ptr.vmem [resolvable:$true] %s491
          %497 = dma.hbm_to_vmem [thread:$0]  %s490, 6144, %s492, [#allocation3], 384, 384, 24
        $region20: #{_lambda_.8} parent=11 // pred_fallthru
          _
        // Predicated region
        $region21: #{_lambda_.8} parent=11 // pred_check
          %p498 = pneg %p146
        $region22: #{_lambda_.8} parent=11 // pred_check_branch
          %500 = sbr.rel (%p498) target = $region24
        $region23: #{_lambda_.8} parent=11 // pred_region
          _
        $region24: #{_lambda_.8} parent=11 // pred_fallthru
          _
        // Predicated region
        $region25: #{_lambda_.8} parent=11 // pred_check
          %p501 = pneg %p167
        $region26: #{_lambda_.8} parent=11 // pred_check_branch
          %503 = sbr.rel (%p501) target = $region28
        $region27: #{_lambda_.8} parent=11 // pred_region
          %505 = vsyncadd [#allocation5], 0
          %s506 = sshll.u32 %s5, 4
          %s507 = int_to_ptr.hbm [resolvable:$true] %s506
          %s508 = sshll.u32 [#allocation4], 4
          %s509 = int_to_ptr.vmem [resolvable:$true] %s508
          %514 = dma.hbm_to_vmem [thread:$0]  %s507, 2048, %s509, [#allocation5], 128, 128, 8
        $region28: #{_lambda_.8} parent=11 // pred_fallthru
          _
        // Predicated region
        $region29: #{_lambda_.8} parent=11 // pred_check
          %p515 = pneg %p188
        $region30: #{_lambda_.8} parent=11 // pred_check_branch
          %517 = sbr.rel (%p515) target = $region32
        $region31: #{_lambda_.8} parent=11 // pred_region
          _
        $region32: #{_lambda_.8} parent=11 // pred_fallthru
          _
        // Predicated region
        $region33: #{_lambda_.8} parent=11 // pred_check
          %p518 = pneg %p209
        $region34: #{_lambda_.8} parent=11 // pred_check_branch
          %520 = sbr.rel (%p518) target = $region36
        $region35: #{_lambda_.8} parent=11 // pred_region
          %522 = vsyncadd [#allocation5], 0
          %s523 = sshll.u32 %s7, 4
          %s524 = int_to_ptr.hbm [resolvable:$true] %s523
          %s525 = sshll.u32 [#allocation6], 4
          %s526 = int_to_ptr.vmem [resolvable:$true] %s525
          %531 = dma.hbm_to_vmem [thread:$0]  %s524, 2048, %s526, [#allocation5], 128, 128, 8
        $region36: #{_lambda_.8} parent=11 // pred_fallthru
          _
        // Predicated region
        $region37: #{_lambda_.8} parent=11 // pred_check
          %p532 = pneg %p230
        $region38: #{_lambda_.8} parent=11 // pred_check_branch
          %534 = sbr.rel (%p532) target = $region40
        $region39: #{_lambda_.8} parent=11 // pred_region
          %536 = vsyncadd [#allocation8], 0
          %s538 = sshll.u32 %s8, 4
          %s539 = int_to_ptr.hbm [resolvable:$true] %s538
          %s540 = sshll.u32 [#allocation7], 4
          %s541 = int_to_ptr.vmem [resolvable:$true] %s540
          %543 = dma.hbm_to_vmem [thread:$0]  %s539, 16, %s541, [#allocation8]
        $region40: #{_lambda_.8} parent=11 // pred_fallthru
          _
        // Predicated region
        $region41: #{_lambda_.8} parent=11 // pred_check
          %p544 = pneg %p251
        $region42: #{_lambda_.8} parent=11 // pred_check_branch
          %546 = sbr.rel (%p544) target = $region44
        $region43: #{_lambda_.8} parent=11 // pred_region
          _
        $region44: #{_lambda_.8} parent=11 // pred_fallthru
          _
        // Predicated region
        $region45: #{_lambda_.8} parent=11 // pred_check
          %p547 = pneg %p272
        $region46: #{_lambda_.8} parent=11 // pred_check_branch
          %549 = sbr.rel (%p547) target = $region48
        $region47: #{_lambda_.8} parent=11 // pred_region
          _
        $region48: #{_lambda_.8} parent=11 // pred_fallthru
          _
        // Predicated region
        $region49: #{_lambda_.8} parent=11 // pred_check
          %p550 = pneg %p293
        $region50: #{_lambda_.8} parent=11 // pred_check_branch
          %552 = sbr.rel (%p550) target = $region52
        $region51: #{_lambda_.8} parent=11 // pred_region
          %554 = vsyncadd [#allocation8], 0
          %s555 = sshll.u32 %s11, 4
          %s556 = int_to_ptr.hbm [resolvable:$true] %s555
          %s557 = sshll.u32 [#allocation9], 4
          %s558 = int_to_ptr.vmem [resolvable:$true] %s557
          %563 = dma.hbm_to_vmem [thread:$0]  %s556, 2048, %s558, [#allocation8], 128, 128, 8
        $region52: #{_lambda_.8} parent=11 // pred_fallthru
          _
        // Predicated region
        $region53: #{_lambda_.8} parent=11 // pred_check
          %p564 = pneg %p314
        $region54: #{_lambda_.8} parent=11 // pred_check_branch
          %566 = sbr.rel (%p564) target = $region56
        $region55: #{_lambda_.8} parent=11 // pred_region
          %568 = vsyncadd [#allocation11], 0
          %s570 = sshll.u32 %s12, 4
          %s571 = int_to_ptr.hbm [resolvable:$true] %s570
          %s572 = sshll.u32 [#allocation10], 4
          %s573 = int_to_ptr.vmem [resolvable:$true] %s572
          %575 = dma.hbm_to_vmem [thread:$0]  %s571, 16, %s573, [#allocation11]
        $region56: #{_lambda_.8} parent=11 // pred_fallthru
          _
        // Predicated region
        $region57: #{_lambda_.8} parent=11 // pred_check
          %p576 = pneg %p335
        $region58: #{_lambda_.8} parent=11 // pred_check_branch
          %578 = sbr.rel (%p576) target = $region60
        $region59: #{_lambda_.8} parent=11 // pred_region
          %580 = vsyncadd [#allocation11], 0
          %s582 = sshll.u32 %s13, 4
          %s583 = int_to_ptr.hbm [resolvable:$true] %s582
          %s584 = sshll.u32 [#allocation12], 4
          %s585 = int_to_ptr.vmem [resolvable:$true] %s584
          %587 = dma.hbm_to_vmem [thread:$0]  %s583, 16, %s585, [#allocation11]
        $region60: #{_lambda_.8} parent=11 // pred_fallthru
          _
        // Predicated region
        $region61: #{_lambda_.8} parent=11 // pred_check
          %p588 = pneg %p356
        $region62: #{_lambda_.8} parent=11 // pred_check_branch
          %590 = sbr.rel (%p588) target = $region64
        $region63: #{_lambda_.8} parent=11 // pred_region
          %592 = vsyncadd [#allocation14], 0
          %s594 = sshll.u32 %s14, 4
          %s595 = int_to_ptr.hbm [resolvable:$true] %s594
          %s596 = sshll.u32 [#allocation13], 4
          %s597 = int_to_ptr.vmem [resolvable:$true] %s596
          %599 = dma.hbm_to_vmem [thread:$0]  %s595, 16, %s597, [#allocation14]
        $region64: #{_lambda_.8} parent=11 // pred_fallthru
          _
        // Predicated region
        $region65: #{_lambda_.8} parent=11 // pred_check
          %p600 = pneg %p377
        $region66: #{_lambda_.8} parent=11 // pred_check_branch
          %602 = sbr.rel (%p600) target = $region68
        $region67: #{_lambda_.8} parent=11 // pred_region
          _
        $region68: #{_lambda_.8} parent=11 // pred_fallthru
          _
        // Predicated region
        $region69: #{_lambda_.8} parent=11 // pred_check
          %p603 = pneg %p398
        $region70: #{_lambda_.8} parent=11 // pred_check_branch
          %605 = sbr.rel (%p603) target = $region72
        $region71: #{_lambda_.8} parent=11 // pred_region
          %607 = vsyncadd [#allocation14], 0
          %s609 = sshll.u32 %s16, 4
          %s610 = int_to_ptr.hbm [resolvable:$true] %s609
          %s611 = sshll.u32 [#allocation15], 4
          %s612 = int_to_ptr.vmem [resolvable:$true] %s611
          %614 = dma.hbm_to_vmem [thread:$0]  %s610, 16, %s612, [#allocation14]
        $region72: #{_lambda_.8} parent=11 // pred_fallthru
          _
        // Predicated region
        $region73: #{_lambda_.8} parent=11 // pred_check
          %p615 = pneg %p419
        $region74: #{_lambda_.8} parent=11 // pred_check_branch
          %617 = sbr.rel (%p615) target = $region76
        $region75: #{_lambda_.8} parent=11 // pred_region
          %619 = vsyncadd [#allocation17], 0
          %s620 = sshll.u32 %s17, 4
          %s621 = int_to_ptr.hbm [resolvable:$true] %s620
          %s622 = sshll.u32 [#allocation16], 4
          %s623 = int_to_ptr.vmem [resolvable:$true] %s622
          %628 = dma.hbm_to_vmem [thread:$0]  %s621, 1024, %s623, [#allocation17], 128, 128, 8
        $region76: #{_lambda_.8} parent=11 // pred_fallthru
          _
        // Predicated region
        $region77: #{_lambda_.8} parent=11 // pred_check
          %p629 = pneg %p440
        $region78: #{_lambda_.8} parent=11 // pred_check_branch
          %631 = sbr.rel (%p629) target = $region80
        $region79: #{_lambda_.8} parent=11 // pred_region
          %633 = vsyncadd [#allocation17], 0
          %s635 = sshll.u32 %s18, 4
          %s636 = int_to_ptr.hbm [resolvable:$true] %s635
          %s637 = sshll.u32 [#allocation18], 4
          %s638 = int_to_ptr.vmem [resolvable:$true] %s637
          %640 = dma.hbm_to_vmem [thread:$0]  %s636, 16, %s638, [#allocation17]
        $region80: #{_lambda_.8} parent=11 // pred_fallthru
          _
      $region12: #{_lambda_.8} parent=5 // pred_fallthru
        _
      %p641 = scmp.lt.s32.totalorder %s31, 2
      // Predicated region
      $region81: #{_lambda_.8} parent=5 // pred_check
        %p642 = pneg %p641
      $region82: #{_lambda_.8} parent=5 // pred_check_branch
        %644 = sbr.rel (%p642) target = $region84
      $region83: #{_lambda_.8} parent=5 // pred_region
        // Predicated region
        $region85: #{_lambda_.8} parent=83 // pred_check
          %p645 = pneg %p51
        $region86: #{_lambda_.8} parent=83 // pred_check_branch
          %647 = sbr.rel (%p645) target = $region88
        $region87: #{_lambda_.8} parent=83 // pred_region
          %p648 = scmp.lt.s32.totalorder %s31, 1
          %s649 = scalar_select %p648, %s31, 1
          %s650 = smul.addr %s649, 8
          %s651 = scalar_lea.vmem %s0, %s650
        $region88: #{_lambda_.8} parent=83 // pred_fallthru
          _
        // Predicated region
        $region89: #{_lambda_.8} parent=83 // pred_check
          %p652 = pneg %p77
        $region90: #{_lambda_.8} parent=83 // pred_check_branch
          %654 = sbr.rel (%p652) target = $region92
        $region91: #{_lambda_.8} parent=83 // pred_region
          %p655 = scmp.lt.s32.totalorder %s31, 1
          %s656 = scalar_select %p655, %s31, 1
          %s657 = smul.addr %s656, 8
          %s658 = scalar_lea.vmem %s1, %s657
        $region92: #{_lambda_.8} parent=83 // pred_fallthru
          _
      $region84: #{_lambda_.8} parent=5 // pred_fallthru
        _
      %p659 = scmp.le.s32.totalorder 1, %s31
      %p660 = scmp.lt.s32.totalorder %s31, 3
      %p661 = pnand %p659, %p660
      %p662 = pneg %p661
      // Predicated region
      $region93: #{_lambda_.8} parent=5 // pred_check
        _
      $region94: #{_lambda_.8} parent=5 // pred_check_branch
        %664 = sbr.rel (%p661) target = $region96
      $region95: #{_lambda_.8} parent=5 // pred_region
        %s665 = ssub.s32 %s31, 1
        // Predicated region
        $region97: #{_lambda_.8} parent=95 // pred_check
          %p666 = pneg %p125
        $region98: #{_lambda_.8} parent=95 // pred_check_branch
          %668 = sbr.rel (%p666) target = $region100
        $region99: #{_lambda_.8} parent=95 // pred_region
          %670 = dma.done [#allocation3], 6144
        $region100: #{_lambda_.8} parent=95 // pred_fallthru
          _
        // Predicated region
        $region101: #{_lambda_.8} parent=95 // pred_check
          %p671 = pneg %p167
        $region102: #{_lambda_.8} parent=95 // pred_check_branch
          %673 = sbr.rel (%p671) target = $region104
        $region103: #{_lambda_.8} parent=95 // pred_region
          %675 = dma.done [#allocation5], 2048
        $region104: #{_lambda_.8} parent=95 // pred_fallthru
          _
        // Predicated region
        $region105: #{_lambda_.8} parent=95 // pred_check
          %p676 = pneg %p209
        $region106: #{_lambda_.8} parent=95 // pred_check_branch
          %678 = sbr.rel (%p676) target = $region108
        $region107: #{_lambda_.8} parent=95 // pred_region
          %680 = dma.done [#allocation5], 2048
        $region108: #{_lambda_.8} parent=95 // pred_fallthru
          _
        // Predicated region
        $region109: #{_lambda_.8} parent=95 // pred_check
          %p681 = pneg %p230
        $region110: #{_lambda_.8} parent=95 // pred_check_branch
          %683 = sbr.rel (%p681) target = $region112
        $region111: #{_lambda_.8} parent=95 // pred_region
          %685 = dma.done [#allocation8], 16
        $region112: #{_lambda_.8} parent=95 // pred_fallthru
          _
        // Predicated region
        $region113: #{_lambda_.8} parent=95 // pred_check
          %p686 = pneg %p293
        $region114: #{_lambda_.8} parent=95 // pred_check_branch
          %688 = sbr.rel (%p686) target = $region116
        $region115: #{_lambda_.8} parent=95 // pred_region
          %690 = dma.done [#allocation8], 2048
        $region116: #{_lambda_.8} parent=95 // pred_fallthru
          _
        // Predicated region
        $region117: #{_lambda_.8} parent=95 // pred_check
          %p691 = pneg %p314
        $region118: #{_lambda_.8} parent=95 // pred_check_branch
          %693 = sbr.rel (%p691) target = $region120
        $region119: #{_lambda_.8} parent=95 // pred_region
          %695 = dma.done [#allocation11], 16
        $region120: #{_lambda_.8} parent=95 // pred_fallthru
          _
        // Predicated region
        $region121: #{_lambda_.8} parent=95 // pred_check
          %p696 = pneg %p335
        $region122: #{_lambda_.8} parent=95 // pred_check_branch
          %698 = sbr.rel (%p696) target = $region124
        $region123: #{_lambda_.8} parent=95 // pred_region
          %700 = dma.done [#allocation11], 16
        $region124: #{_lambda_.8} parent=95 // pred_fallthru
          _
        // Predicated region
        $region125: #{_lambda_.8} parent=95 // pred_check
          %p701 = pneg %p356
        $region126: #{_lambda_.8} parent=95 // pred_check_branch
          %703 = sbr.rel (%p701) target = $region128
        $region127: #{_lambda_.8} parent=95 // pred_region
          %705 = dma.done [#allocation14], 16
        $region128: #{_lambda_.8} parent=95 // pred_fallthru
          _
        // Predicated region
        $region129: #{_lambda_.8} parent=95 // pred_check
          %p706 = pneg %p398
        $region130: #{_lambda_.8} parent=95 // pred_check_branch
          %708 = sbr.rel (%p706) target = $region132
        $region131: #{_lambda_.8} parent=95 // pred_region
          %710 = dma.done [#allocation14], 16
        $region132: #{_lambda_.8} parent=95 // pred_fallthru
          _
        // Predicated region
        $region133: #{_lambda_.8} parent=95 // pred_check
          %p711 = pneg %p419
        $region134: #{_lambda_.8} parent=95 // pred_check_branch
          %713 = sbr.rel (%p711) target = $region136
        $region135: #{_lambda_.8} parent=95 // pred_region
          %715 = dma.done [#allocation17], 1024
        $region136: #{_lambda_.8} parent=95 // pred_fallthru
          _
        // Predicated region
        $region137: #{_lambda_.8} parent=95 // pred_check
          %p716 = pneg %p440
        $region138: #{_lambda_.8} parent=95 // pred_check_branch
          %718 = sbr.rel (%p716) target = $region140
        $region139: #{_lambda_.8} parent=95 // pred_region
          %720 = dma.done [#allocation17], 16
        $region140: #{_lambda_.8} parent=95 // pred_fallthru
          _
        %p721 = scmp.lt.s32.totalorder %s36, 1
        %s722 = scalar_select %p721, %s36, 1
        %s723 = smul.addr %s722, 8
        %s724 = scalar_lea.vmem %s0, %s723
        %p725 = pneg %p57
        %p726 = pneg %p54
        %p727 = scmp.lt.s32.totalorder %s36, 1
        %s728 = scalar_select %p727, %s36, 1
        %s729 = smul.addr %s728, 8
        %s730 = scalar_lea.vmem %s1, %s729
        %p731 = pneg %p83
        %p732 = pneg %p80
        %p733 = pneg %p104
        %p734 = pneg %p101
        %p735 = pneg %p125
        %p736 = pneg %p122
        %p737 = pneg %p146
        %p738 = pneg %p143
        %p739 = pneg %p167
        %p740 = pneg %p164
        %p741 = pneg %p188
        %p742 = pneg %p185
        %p743 = pneg %p209
        %p744 = pneg %p206
        %p745 = pneg %p230
        %p746 = pneg %p227
        %p747 = pneg %p251
        %p748 = pneg %p248
        %p749 = pneg %p272
        %p750 = pneg %p269
        %p751 = pneg %p293
        %p752 = pneg %p290
        %p753 = pneg %p314
        %p754 = pneg %p311
        %p755 = pneg %p335
        %p756 = pneg %p332
        %p757 = pneg %p356
        %p758 = pneg %p353
        %p759 = pneg %p377
        %p760 = pneg %p374
        %p761 = pneg %p398
        %p762 = pneg %p395
        %p763 = pneg %p419
        %p764 = pneg %p416
        %p765 = pneg %p440
        %p766 = pneg %p437
        %p767 = pneg %p466
        %p768 = pneg %p463
        %p769 = scmp.lt.s32.totalorder %s36, 1
        %s770 = scalar_select %p769, %s36, 1
        %s771 = smul.addr %s770, 8
        %s772 = scalar_lea.vmem %s19, %s771
        %p773 = scmp.lt.s32.totalorder %s36, 1
        %s774 = scalar_select %p773, %s36, 1
        %s775 = smul.addr %s774, 8
        %s776 = scalar_lea.vmem %s0, %s775
        %p777 = scmp.lt.s32.totalorder %s36, 1
        %s778 = scalar_select %p777, %s36, 1
        %s779 = smul.addr %s778, 8
        %s780 = scalar_lea.vmem %s1, %s779
        %p781 = scmp.lt.s32.totalorder %s36, 1
        %s782 = scalar_select %p781, %s36, 1
        %s783 = smul.addr %s782, 8
        %s784 = scalar_lea.vmem %s19, %s783
        %v785 = vld [vmem:[%s776] sm:$0xff]
        %v786 = vld [vmem:[%s780] sm:$0xff]
        %v787 = vld [vmem:[%s2] sm:$0xff]
        %v788 = vld [vmem:[#allocation12] sm:$0x1]
        %v789 = vld [vmem:[#allocation13] sm:$0x1]
        %v790 = vlaneseq
        %v791 = vand.u32 %v790, 127
        %v792 = vld [vmem:[#allocation2] sm:$0xff]
        %v793 = vld [vmem:[#allocation2 + $0x8] sm:$0xff]
        %v794 = vld [vmem:[#allocation2 + $0x10] sm:$0xff]
        %v795 = vld [vmem:[#allocation2 + $0x18] sm:$0xff]
        %v796 = vld [vmem:[#allocation2 + $0x20] sm:$0xff]
        %v797 = vld [vmem:[#allocation2 + $0x28] sm:$0xff]
        %v798 = vld [vmem:[#allocation2 + $0x30] sm:$0xff]
        %v799 = vld [vmem:[#allocation2 + $0x38] sm:$0xff]
        %v800 = vld [vmem:[#allocation2 + $0x40] sm:$0xff]
        %v801 = vld [vmem:[#allocation2 + $0x48] sm:$0xff]
        %v802 = vld [vmem:[#allocation2 + $0x50] sm:$0xff]
        %v803 = vld [vmem:[#allocation2 + $0x58] sm:$0xff]
        %v804 = vld [vmem:[#allocation2 + $0x60] sm:$0xff]
        %v805 = vld [vmem:[#allocation2 + $0x68] sm:$0xff]
        %v806 = vld [vmem:[#allocation2 + $0x70] sm:$0xff]
        %v807 = vld [vmem:[#allocation2 + $0x78] sm:$0xff]
        %v808 = vld [vmem:[#allocation2 + $0x80] sm:$0xff]
        %v809 = vld [vmem:[#allocation2 + $0x88] sm:$0xff]
        %v810 = vld [vmem:[#allocation2 + $0x90] sm:$0xff]
        %v811 = vld [vmem:[#allocation2 + $0x98] sm:$0xff]
        %v812 = vld [vmem:[#allocation2 + $0xa0] sm:$0xff]
        %v813 = vld [vmem:[#allocation2 + $0xa8] sm:$0xff]
        %v814 = vld [vmem:[#allocation2 + $0xb0] sm:$0xff]
        %v815 = vld [vmem:[#allocation2 + $0xb8] sm:$0xff]
        %v816 = vld [vmem:[#allocation2 + $0xc0] sm:$0xff]
        %v817 = vld [vmem:[#allocation2 + $0xc8] sm:$0xff]
        %v818 = vld [vmem:[#allocation2 + $0xd0] sm:$0xff]
        %v819 = vld [vmem:[#allocation2 + $0xd8] sm:$0xff]
        %v820 = vld [vmem:[#allocation2 + $0xe0] sm:$0xff]
        %v821 = vld [vmem:[#allocation2 + $0xe8] sm:$0xff]
        %v822 = vld [vmem:[#allocation2 + $0xf0] sm:$0xff]
        %v823 = vld [vmem:[#allocation2 + $0xf8] sm:$0xff]
        %v824 = vld [vmem:[#allocation2 + $0x100] sm:$0xff]
        %v825 = vld [vmem:[#allocation2 + $0x108] sm:$0xff]
        %v826 = vld [vmem:[#allocation2 + $0x110] sm:$0xff]
        %v827 = vld [vmem:[#allocation2 + $0x118] sm:$0xff]
        %v828 = vld [vmem:[#allocation2 + $0x120] sm:$0xff]
        %v829 = vld [vmem:[#allocation2 + $0x128] sm:$0xff]
        %v830 = vld [vmem:[#allocation2 + $0x130] sm:$0xff]
        %v831 = vld [vmem:[#allocation2 + $0x138] sm:$0xff]
        %v832 = vld [vmem:[#allocation2 + $0x140] sm:$0xff]
        %v833 = vld [vmem:[#allocation2 + $0x148] sm:$0xff]
        %v834 = vld [vmem:[#allocation2 + $0x150] sm:$0xff]
        %v835 = vld [vmem:[#allocation2 + $0x158] sm:$0xff]
        %v836 = vld [vmem:[#allocation2 + $0x160] sm:$0xff]
        %v837 = vld [vmem:[#allocation2 + $0x168] sm:$0xff]
        %v838 = vld [vmem:[#allocation2 + $0x170] sm:$0xff]
        %v839 = vld [vmem:[#allocation2 + $0x178] sm:$0xff]
        %v840 = vld [vmem:[%s4] sm:$0x7]
        %v842 = vperm.slane %v840, 0
        %v843 = vperm.slane %v840, 1
        %v844 = vperm.slane %v840, 2
        %848 = vmatpush.msra.mxu0 %v837
        %849 = vmatpush.msra.mxu0 %v834
        %850 = vmatpush.msra.mxu0 %v831
        %851 = vmatpush.msra.mxu0 %v828
        %852 = vmatpush.msra.mxu0 %v825
        %853 = vmatpush.msra.mxu0 %v822
        %854 = vmatpush.msra.mxu0 %v819
        %855 = vmatpush.msra.mxu0 %v816
        %856 = vmatpush.msra.mxu0 %v813
        %857 = vmatpush.msra.mxu0 %v810
        %858 = vmatpush.msra.mxu0 %v807
        %859 = vmatpush.msra.mxu0 %v804
        %860 = vmatpush.msra.mxu0 %v801
        %861 = vmatpush.msra.mxu0 %v798
        %862 = vmatpush.msra.mxu0 %v795
        %863 = vmatpush.msra.mxu0 %v792
        %864 = vmatmul.f32.gmra.mxu0 %v785
        %v865 = vpop.f32.mrf.mxu0
        %v866 = vadd.f32 %v842, %v865
        %867 = vdwg.mxu0
        %868 = vmatpush.msra.mxu0 %v838
        %869 = vmatpush.msra.mxu0 %v835
        %870 = vmatpush.msra.mxu0 %v832
        %871 = vmatpush.msra.mxu0 %v829
        %872 = vmatpush.msra.mxu0 %v826
        %873 = vmatpush.msra.mxu0 %v823
        %874 = vmatpush.msra.mxu0 %v820
        %875 = vmatpush.msra.mxu0 %v817
        %876 = vmatpush.msra.mxu0 %v814
        %877 = vmatpush.msra.mxu0 %v811
        %878 = vmatpush.msra.mxu0 %v808
        %879 = vmatpush.msra.mxu0 %v805
        %880 = vmatpush.msra.mxu0 %v802
        %881 = vmatpush.msra.mxu0 %v799
        %882 = vmatpush.msra.mxu0 %v796
        %883 = vmatpush.msra.mxu0 %v793
        %884 = vmatmul.f32.gmra.mxu0 %v785
        %v885 = vpop.f32.mrf.mxu0
        %v886 = vadd.f32 %v843, %v885
        %887 = vdwg.mxu0
        %888 = vmatpush.msra.mxu0 %v839
        %889 = vmatpush.msra.mxu0 %v836
        %890 = vmatpush.msra.mxu0 %v833
        %891 = vmatpush.msra.mxu0 %v830
        %892 = vmatpush.msra.mxu0 %v827
        %893 = vmatpush.msra.mxu0 %v824
        %894 = vmatpush.msra.mxu0 %v821
        %895 = vmatpush.msra.mxu0 %v818
        %896 = vmatpush.msra.mxu0 %v815
        %897 = vmatpush.msra.mxu0 %v812
        %898 = vmatpush.msra.mxu0 %v809
        %899 = vmatpush.msra.mxu0 %v806
        %900 = vmatpush.msra.mxu0 %v803
        %901 = vmatpush.msra.mxu0 %v800
        %902 = vmatpush.msra.mxu0 %v797
        %903 = vmatpush.msra.mxu0 %v794
        %904 = vmatmul.f32.gmra.mxu0 %v785
        %v905 = vpop.f32.mrf.mxu0
        %v906 = vadd.f32 %v844, %v905
        %907 = vdwg.mxu0
        %vm908 = vcmp.ge.s32.totalorder %v791, 0
        %vm909 = vcmp.lt.s32.totalorder %v791, 32
        %vm910 = vmand %vm908, %vm909
        %v911 = vsel %vm910, 1, 0
        %vm912 = vcmp.eq.s32.totalorder %v911, 1
        %v913 = vsel %vm912, %v886, 0.0
        %v914 = vsel %vm912, %v906, 0.0
        %915 = vmatpush.xpose.msra.mxu0 0.0
        %916 = vmatpush.xpose.msra.mxu0 0.0
        %917 = vmatpush.xpose.msra.mxu0 0.0
        %918 = vmatpush.xpose.msra.mxu0 0.0
        %919 = vmatpush.xpose.msra.mxu0 0.0
        %920 = vmatpush.xpose.msra.mxu0 0.0
        %921 = vmatpush.xpose.msra.mxu0 0.0
        %922 = vmatpush.xpose.msra.mxu0 0.0
        %923 = vmatpush.xpose.msra.mxu0 0.0
        %924 = vmatpush.xpose.msra.mxu0 0.0
        %925 = vmatpush.xpose.msra.mxu0 0.0
        %926 = vmatpush.xpose.msra.mxu0 0.0
        %927 = vmatpush.xpose.msra.mxu0 0.0
        %928 = vmatpush.xpose.msra.mxu0 0.0
        %929 = vmatpush.xpose.msra.mxu0 0.0
        %930 = vmatpush.xpose.msra.mxu0 %v913
        %931 = vmatmul.f32.gmra.mxu0 %v866
        %v932 = vpop.f32.mrf.mxu0
        %v933 = vadd.f32 0.0, %v932
        %934 = vdwg.mxu0
        %v935 = vmul.f32 %v933, 0.17677669
        %v936 = vadd.f32 %v935, %v787
        %vm937 = vcmask 64512
        %v938 = vsel %vm937, %v936, -inf
        %939 = vmax.xlane.f32.xlu0 %v938
        %v940 = vpop.xlane.xlu0 %939
        %v941 = vsub.f32 %v936, %v940
        %v942 = vmul.f32 %v941, 1.442695
        %v943 = vpow.pop %v942
        %v944 = vsel %vm937, %v943, 0.0
        %945 = vadd.xlane.f32.xlu0 %v944
        %v946 = vpop.xlane.xlu0 %945
        %v947 = vrcp.pop %v946
        %v948 = vmul.f32 %v943, %v947
        %vm949 = vcmp.ge.s32.totalorder %v791, 32
        %vm950 = vcmp.lt.s32.totalorder %v791, 64
        %vm951 = vmand %vm949, %vm950
        %v952 = vsel %vm951, 1, 0
        %vm953 = vcmp.eq.s32.totalorder %v952, 1
        %v954 = vsel %vm953, %v886, 0.0
        %v955 = vsel %vm953, %v906, 0.0
        %956 = vmatpush.xpose.msra.mxu0 0.0
        %957 = vmatpush.xpose.msra.mxu0 0.0
        %958 = vmatpush.xpose.msra.mxu0 0.0
        %959 = vmatpush.xpose.msra.mxu0 0.0
        %960 = vmatpush.xpose.msra.mxu0 0.0
        %961 = vmatpush.xpose.msra.mxu0 0.0
        %962 = vmatpush.xpose.msra.mxu0 0.0
        %963 = vmatpush.xpose.msra.mxu0 0.0
        %964 = vmatpush.xpose.msra.mxu0 0.0
        %965 = vmatpush.xpose.msra.mxu0 0.0
        %966 = vmatpush.xpose.msra.mxu0 0.0
        %967 = vmatpush.xpose.msra.mxu0 0.0
        %968 = vmatpush.xpose.msra.mxu0 0.0
        %969 = vmatpush.xpose.msra.mxu0 0.0
        %970 = vmatpush.xpose.msra.mxu0 0.0
        %971 = vmatpush.xpose.msra.mxu0 %v954
        %972 = vmatmul.f32.gmra.mxu0 %v866
        %v973 = vpop.f32.mrf.mxu0
        %v974 = vadd.f32 0.0, %v973
        %975 = vdwg.mxu0
        %v976 = vmul.f32 %v974, 0.17677669
        %v977 = vadd.f32 %v976, %v787
        %v978 = vsel %vm937, %v977, -inf
        %979 = vmax.xlane.f32.xlu0 %v978
        %v980 = vpop.xlane.xlu0 %979
        %v981 = vsub.f32 %v977, %v980
        %v982 = vmul.f32 %v981, 1.442695
        %v983 = vpow.pop %v982
        %v984 = vsel %vm937, %v983, 0.0
        %985 = vadd.xlane.f32.xlu0 %v984
        %v986 = vpop.xlane.xlu0 %985
        %v987 = vrcp.pop %v986
        %v988 = vmul.f32 %v983, %v987
        %v990 = vsel %vm937, %v988, 0
        %992 = vmatpush.msra.mxu0 0.0
        %993 = vmatpush.msra.mxu0 0.0
        %994 = vmatpush.msra.mxu0 0.0
        %995 = vmatpush.msra.mxu0 0.0
        %996 = vmatpush.msra.mxu0 0.0
        %997 = vmatpush.msra.mxu0 0.0
        %998 = vmatpush.msra.mxu0 0.0
        %999 = vmatpush.msra.mxu0 0.0
        %1000 = vmatpush.msra.mxu0 0.0
        %1001 = vmatpush.msra.mxu0 0.0
        %1002 = vmatpush.msra.mxu0 0.0
        %1003 = vmatpush.msra.mxu0 0.0
        %1004 = vmatpush.msra.mxu0 0.0
        %1005 = vmatpush.msra.mxu0 0.0
        %1006 = vmatpush.msra.mxu0 0.0
        %1007 = vmatpush.msra.mxu0 %v955
        %1008 = vmatmul.f32.gmra.mxu0 %v990
        %v1009 = vpop.f32.mrf.mxu0
        %v1010 = vadd.f32 0.0, %v1009
        %1011 = vdwg.mxu0
        %v1013 = vsel %vm937, %v948, 0
        %1015 = vmatpush.msra.mxu0 0.0
        %1016 = vmatpush.msra.mxu0 0.0
        %1017 = vmatpush.msra.mxu0 0.0
        %1018 = vmatpush.msra.mxu0 0.0
        %1019 = vmatpush.msra.mxu0 0.0
        %1020 = vmatpush.msra.mxu0 0.0
        %1021 = vmatpush.msra.mxu0 0.0
        %1022 = vmatpush.msra.mxu0 0.0
        %1023 = vmatpush.msra.mxu0 0.0
        %1024 = vmatpush.msra.mxu0 0.0
        %1025 = vmatpush.msra.mxu0 0.0
        %1026 = vmatpush.msra.mxu0 0.0
        %1027 = vmatpush.msra.mxu0 0.0
        %1028 = vmatpush.msra.mxu0 0.0
        %1029 = vmatpush.msra.mxu0 0.0
        %1030 = vmatpush.msra.mxu0 %v914
        %1031 = vmatmul.f32.gmra.mxu0 %v1013
        %v1032 = vpop.f32.mrf.mxu0
        %v1033 = vadd.f32 %v1010, %v1032
        %1034 = vdwg.mxu0
        %vm1035 = vcmp.ge.s32.totalorder %v791, 64
        %vm1036 = vcmp.lt.s32.totalorder %v791, 96
        %vm1037 = vmand %vm1035, %vm1036
        %v1038 = vsel %vm1037, 1, 0
        %vm1039 = vcmp.eq.s32.totalorder %v1038, 1
        %v1040 = vsel %vm1039, %v886, 0.0
        %v1041 = vsel %vm1039, %v906, 0.0
        %1042 = vmatpush.xpose.msra.mxu0 0.0
        %1043 = vmatpush.xpose.msra.mxu0 0.0
        %1044 = vmatpush.xpose.msra.mxu0 0.0
        %1045 = vmatpush.xpose.msra.mxu0 0.0
        %1046 = vmatpush.xpose.msra.mxu0 0.0
        %1047 = vmatpush.xpose.msra.mxu0 0.0
        %1048 = vmatpush.xpose.msra.mxu0 0.0
        %1049 = vmatpush.xpose.msra.mxu0 0.0
        %1050 = vmatpush.xpose.msra.mxu0 0.0
        %1051 = vmatpush.xpose.msra.mxu0 0.0
        %1052 = vmatpush.xpose.msra.mxu0 0.0
        %1053 = vmatpush.xpose.msra.mxu0 0.0
        %1054 = vmatpush.xpose.msra.mxu0 0.0
        %1055 = vmatpush.xpose.msra.mxu0 0.0
        %1056 = vmatpush.xpose.msra.mxu0 0.0
        %1057 = vmatpush.xpose.msra.mxu0 %v1040
        %1058 = vmatmul.f32.gmra.mxu0 %v866
        %v1059 = vpop.f32.mrf.mxu0
        %v1060 = vadd.f32 0.0, %v1059
        %1061 = vdwg.mxu0
        %v1062 = vmul.f32 %v1060, 0.17677669
        %v1063 = vadd.f32 %v1062, %v787
        %v1064 = vsel %vm937, %v1063, -inf
        %1065 = vmax.xlane.f32.xlu0 %v1064
        %v1066 = vpop.xlane.xlu0 %1065
        %v1067 = vsub.f32 %v1063, %v1066
        %v1068 = vmul.f32 %v1067, 1.442695
        %v1069 = vpow.pop %v1068
        %v1070 = vsel %vm937, %v1069, 0.0
        %1071 = vadd.xlane.f32.xlu0 %v1070
        %v1072 = vpop.xlane.xlu0 %1071
        %v1073 = vrcp.pop %v1072
        %v1074 = vmul.f32 %v1069, %v1073
        %v1076 = vsel %vm937, %v1074, 0
        %1078 = vmatpush.msra.mxu0 0.0
        %1079 = vmatpush.msra.mxu0 0.0
        %1080 = vmatpush.msra.mxu0 0.0
        %1081 = vmatpush.msra.mxu0 0.0
        %1082 = vmatpush.msra.mxu0 0.0
        %1083 = vmatpush.msra.mxu0 0.0
        %1084 = vmatpush.msra.mxu0 0.0
        %1085 = vmatpush.msra.mxu0 0.0
        %1086 = vmatpush.msra.mxu0 0.0
        %1087 = vmatpush.msra.mxu0 0.0
        %1088 = vmatpush.msra.mxu0 0.0
        %1089 = vmatpush.msra.mxu0 0.0
        %1090 = vmatpush.msra.mxu0 0.0
        %1091 = vmatpush.msra.mxu0 0.0
        %1092 = vmatpush.msra.mxu0 0.0
        %1093 = vmatpush.msra.mxu0 %v1041
        %1094 = vmatmul.f32.gmra.mxu0 %v1076
        %v1095 = vpop.f32.mrf.mxu0
        %v1096 = vadd.f32 0.0, %v1095
        %1097 = vdwg.mxu0
        %v1098 = vadd.f32 %v1033, %v1096
        %vm1099 = vcmp.ge.s32.totalorder %v791, 96
        %vm1100 = vcmp.lt.s32.totalorder %v791, 128
        %vm1101 = vmand %vm1099, %vm1100
        %v1102 = vsel %vm1101, 1, 0
        %vm1103 = vcmp.eq.s32.totalorder %v1102, 1
        %v1104 = vsel %vm1103, %v886, 0.0
        %v1105 = vsel %vm1103, %v906, 0.0
        %1106 = vmatpush.xpose.msra.mxu0 0.0
        %1107 = vmatpush.xpose.msra.mxu0 0.0
        %1108 = vmatpush.xpose.msra.mxu0 0.0
        %1109 = vmatpush.xpose.msra.mxu0 0.0
        %1110 = vmatpush.xpose.msra.mxu0 0.0
        %1111 = vmatpush.xpose.msra.mxu0 0.0
        %1112 = vmatpush.xpose.msra.mxu0 0.0
        %1113 = vmatpush.xpose.msra.mxu0 0.0
        %1114 = vmatpush.xpose.msra.mxu0 0.0
        %1115 = vmatpush.xpose.msra.mxu0 0.0
        %1116 = vmatpush.xpose.msra.mxu0 0.0
        %1117 = vmatpush.xpose.msra.mxu0 0.0
        %1118 = vmatpush.xpose.msra.mxu0 0.0
        %1119 = vmatpush.xpose.msra.mxu0 0.0
        %1120 = vmatpush.xpose.msra.mxu0 0.0
        %1121 = vmatpush.xpose.msra.mxu0 %v1104
        %1122 = vmatmul.f32.gmra.mxu0 %v866
        %v1123 = vpop.f32.mrf.mxu0
        %v1124 = vadd.f32 0.0, %v1123
        %1125 = vdwg.mxu0
        %v1126 = vmul.f32 %v1124, 0.17677669
        %v1127 = vadd.f32 %v1126, %v787
        %v1128 = vsel %vm937, %v1127, -inf
        %1129 = vmax.xlane.f32.xlu0 %v1128
        %v1130 = vpop.xlane.xlu0 %1129
        %v1131 = vsub.f32 %v1127, %v1130
        %v1132 = vmul.f32 %v1131, 1.442695
        %v1133 = vpow.pop %v1132
        %v1134 = vsel %vm937, %v1133, 0.0
        %1135 = vadd.xlane.f32.xlu0 %v1134
        %v1136 = vpop.xlane.xlu0 %1135
        %v1137 = vrcp.pop %v1136
        %v1138 = vmul.f32 %v1133, %v1137
        %v1140 = vsel %vm937, %v1138, 0
        %1142 = vmatpush.msra.mxu0 0.0
        %1143 = vmatpush.msra.mxu0 0.0
        %1144 = vmatpush.msra.mxu0 0.0
        %1145 = vmatpush.msra.mxu0 0.0
        %1146 = vmatpush.msra.mxu0 0.0
        %1147 = vmatpush.msra.mxu0 0.0
        %1148 = vmatpush.msra.mxu0 0.0
        %1149 = vmatpush.msra.mxu0 0.0
        %1150 = vmatpush.msra.mxu0 0.0
        %1151 = vmatpush.msra.mxu0 0.0
        %1152 = vmatpush.msra.mxu0 0.0
        %1153 = vmatpush.msra.mxu0 0.0
        %1154 = vmatpush.msra.mxu0 0.0
        %1155 = vmatpush.msra.mxu0 0.0
        %1156 = vmatpush.msra.mxu0 0.0
        %1157 = vmatpush.msra.mxu0 %v1105
        %1158 = vmatmul.f32.gmra.mxu0 %v1140
        %v1159 = vpop.f32.mrf.mxu0
        %v1160 = vadd.f32 0.0, %v1159
        %1161 = vdwg.mxu0
        %v1162 = vadd.f32 %v1098, %v1160
        %v1163 = vld [vmem:[#allocation4] sm:$0xff]
        %v1164 = vld [vmem:[#allocation4 + $0x8] sm:$0xff]
        %v1165 = vld [vmem:[#allocation4 + $0x10] sm:$0xff]
        %v1166 = vld [vmem:[#allocation4 + $0x18] sm:$0xff]
        %v1167 = vld [vmem:[#allocation4 + $0x20] sm:$0xff]
        %v1168 = vld [vmem:[#allocation4 + $0x28] sm:$0xff]
        %v1169 = vld [vmem:[#allocation4 + $0x30] sm:$0xff]
        %v1170 = vld [vmem:[#allocation4 + $0x38] sm:$0xff]
        %v1171 = vld [vmem:[#allocation4 + $0x40] sm:$0xff]
        %v1172 = vld [vmem:[#allocation4 + $0x48] sm:$0xff]
        %v1173 = vld [vmem:[#allocation4 + $0x50] sm:$0xff]
        %v1174 = vld [vmem:[#allocation4 + $0x58] sm:$0xff]
        %v1175 = vld [vmem:[#allocation4 + $0x60] sm:$0xff]
        %v1176 = vld [vmem:[#allocation4 + $0x68] sm:$0xff]
        %v1177 = vld [vmem:[#allocation4 + $0x70] sm:$0xff]
        %v1178 = vld [vmem:[#allocation4 + $0x78] sm:$0xff]
        %v1179 = vld [vmem:[%s6] sm:$0x1]
        %v1181 = vperm.slane %v1179, 0
        %1183 = vmatpush.msra.mxu0 %v1178
        %1184 = vmatpush.msra.mxu0 %v1177
        %1185 = vmatpush.msra.mxu0 %v1176
        %1186 = vmatpush.msra.mxu0 %v1175
        %1187 = vmatpush.msra.mxu0 %v1174
        %1188 = vmatpush.msra.mxu0 %v1173
        %1189 = vmatpush.msra.mxu0 %v1172
        %1190 = vmatpush.msra.mxu0 %v1171
        %1191 = vmatpush.msra.mxu0 %v1170
        %1192 = vmatpush.msra.mxu0 %v1169
        %1193 = vmatpush.msra.mxu0 %v1168
        %1194 = vmatpush.msra.mxu0 %v1167
        %1195 = vmatpush.msra.mxu0 %v1166
        %1196 = vmatpush.msra.mxu0 %v1165
        %1197 = vmatpush.msra.mxu0 %v1164
        %1198 = vmatpush.msra.mxu0 %v1163
        %1199 = vmatmul.f32.gmra.mxu0 %v1162
        %v1200 = vpop.f32.mrf.mxu0
        %v1201 = vadd.f32 %v1181, %v1200
        %1202 = vdwg.mxu0
        %v1203 = vadd.f32 %v785, %v1201
        %1204 = vadd.xlane.f32.xlu0 %v1203
        %v1205 = vpop.xlane.xlu0 %1204
        %v1206 = vrcp.pop 128.0
        %v1207 = vmul.f32 128.0, %v1206
        %v1208 = vsub.f32 1.0, %v1207
        %v1209 = vmul.f32 %v1206, %v1208
        %v1210 = vadd.f32 %v1206, %v1209
        %vm1211 = vweird.f32 %v1206
        %v1212 = vsel %vm1211, %v1206, %v1210
        %v1213 = vmul.f32 %v1205, %v1212
        %v1214 = vsub.f32 %v1203, %v1213
        %v1215 = vmul.f32 %v1214, %v1214
        %1216 = vadd.xlane.f32.xlu0 %v1215
        %v1217 = vpop.xlane.xlu0 %1216
        %v1218 = vmul.f32 %v1217, %v1212
        %v1219 = vadd.f32 %v1218, 1e-05
        %v1220 = vrsqrt.pop %v1219
        %v1221 = vmul.f32 %v1220, %v1219
        %v1222 = vmul.f32 %v1221, %v1220
        %v1223 = vmul.f32 0.5, %v1222
        %v1224 = vsub.f32 1.5, %v1223
        %v1225 = vmul.f32 %v1220, %v1224
        %vm1226 = vweird.f32 %v1219
        %vm1227 = vweird.f32 %v1220
        %vm1228 = vmor %vm1226, %vm1227
        %v1229 = vsel %vm1228, %v1220, %v1225
        %v1230 = vmul.f32 %v1214, %v1229
        %v1232 = vperm.slane %v788, 0
        %v1234 = vmul.f32 %v1230, %v1232
        %v1236 = vperm.slane %v789, 0
        %v1238 = vadd.f32 %v1234, %v1236
        %v1239 = vld [vmem:[#allocation6] sm:$0xff]
        %v1240 = vld [vmem:[#allocation6 + $0x8] sm:$0xff]
        %v1241 = vld [vmem:[#allocation6 + $0x10] sm:$0xff]
        %v1242 = vld [vmem:[#allocation6 + $0x18] sm:$0xff]
        %v1243 = vld [vmem:[#allocation6 + $0x20] sm:$0xff]
        %v1244 = vld [vmem:[#allocation6 + $0x28] sm:$0xff]
        %v1245 = vld [vmem:[#allocation6 + $0x30] sm:$0xff]
        %v1246 = vld [vmem:[#allocation6 + $0x38] sm:$0xff]
        %v1247 = vld [vmem:[#allocation6 + $0x40] sm:$0xff]
        %v1248 = vld [vmem:[#allocation6 + $0x48] sm:$0xff]
        %v1249 = vld [vmem:[#allocation6 + $0x50] sm:$0xff]
        %v1250 = vld [vmem:[#allocation6 + $0x58] sm:$0xff]
        %v1251 = vld [vmem:[#allocation6 + $0x60] sm:$0xff]
        %v1252 = vld [vmem:[#allocation6 + $0x68] sm:$0xff]
        %v1253 = vld [vmem:[#allocation6 + $0x70] sm:$0xff]
        %v1254 = vld [vmem:[#allocation6 + $0x78] sm:$0xff]
        %v1255 = vld [vmem:[#allocation7] sm:$0x1]
        %v1257 = vperm.slane %v1255, 0
        %1259 = vmatpush.msra.mxu0 %v1254
        %1260 = vmatpush.msra.mxu0 %v1253
        %1261 = vmatpush.msra.mxu0 %v1252
        %1262 = vmatpush.msra.mxu0 %v1251
        %1263 = vmatpush.msra.mxu0 %v1250
        %1264 = vmatpush.msra.mxu0 %v1249
        %1265 = vmatpush.msra.mxu0 %v1248
        %1266 = vmatpush.msra.mxu0 %v1247
        %1267 = vmatpush.msra.mxu0 %v1246
        %1268 = vmatpush.msra.mxu0 %v1245
        %1269 = vmatpush.msra.mxu0 %v1244
        %1270 = vmatpush.msra.mxu0 %v1243
        %1271 = vmatpush.msra.mxu0 %v1242
        %1272 = vmatpush.msra.mxu0 %v1241
        %1273 = vmatpush.msra.mxu0 %v1240
        %1274 = vmatpush.msra.mxu0 %v1239
        %1275 = vmatmul.f32.gmra.mxu0 %v1238
        %v1276 = vpop.f32.mrf.mxu0
        %v1277 = vadd.f32 %v1257, %v1276
        %1278 = vdwg.mxu0
        %v1279 = vld [vmem:[%s9] sm:$0xff]
        %v1280 = vld [vmem:[%s9 + $0x8] sm:$0xff]
        %v1281 = vld [vmem:[%s9 + $0x10] sm:$0xff]
        %v1282 = vld [vmem:[%s9 + $0x18] sm:$0xff]
        %v1283 = vld [vmem:[%s9 + $0x20] sm:$0xff]
        %v1284 = vld [vmem:[%s9 + $0x28] sm:$0xff]
        %v1285 = vld [vmem:[%s9 + $0x30] sm:$0xff]
        %v1286 = vld [vmem:[%s9 + $0x38] sm:$0xff]
        %v1287 = vld [vmem:[%s9 + $0x40] sm:$0xff]
        %v1288 = vld [vmem:[%s9 + $0x48] sm:$0xff]
        %v1289 = vld [vmem:[%s9 + $0x50] sm:$0xff]
        %v1290 = vld [vmem:[%s9 + $0x58] sm:$0xff]
        %v1291 = vld [vmem:[%s9 + $0x60] sm:$0xff]
        %v1292 = vld [vmem:[%s9 + $0x68] sm:$0xff]
        %v1293 = vld [vmem:[%s9 + $0x70] sm:$0xff]
        %v1294 = vld [vmem:[%s9 + $0x78] sm:$0xff]
        %v1295 = vld [vmem:[%s9 + $0x80] sm:$0xff]
        %v1296 = vld [vmem:[%s9 + $0x88] sm:$0xff]
        %v1297 = vld [vmem:[%s9 + $0x90] sm:$0xff]
        %v1298 = vld [vmem:[%s9 + $0x98] sm:$0xff]
        %v1299 = vld [vmem:[%s9 + $0xa0] sm:$0xff]
        %v1300 = vld [vmem:[%s9 + $0xa8] sm:$0xff]
        %v1301 = vld [vmem:[%s9 + $0xb0] sm:$0xff]
        %v1302 = vld [vmem:[%s9 + $0xb8] sm:$0xff]
        %v1303 = vld [vmem:[%s9 + $0xc0] sm:$0xff]
        %v1304 = vld [vmem:[%s9 + $0xc8] sm:$0xff]
        %v1305 = vld [vmem:[%s9 + $0xd0] sm:$0xff]
        %v1306 = vld [vmem:[%s9 + $0xd8] sm:$0xff]
        %v1307 = vld [vmem:[%s9 + $0xe0] sm:$0xff]
        %v1308 = vld [vmem:[%s9 + $0xe8] sm:$0xff]
        %v1309 = vld [vmem:[%s9 + $0xf0] sm:$0xff]
        %v1310 = vld [vmem:[%s9 + $0xf8] sm:$0xff]
        %v1311 = vld [vmem:[%s10] sm:$0x3]
        %v1313 = vperm.slane %v1311, 0
        %v1314 = vperm.slane %v1311, 1
        %1317 = vmatpush.msra.mxu0 %v1309
        %1318 = vmatpush.msra.mxu0 %v1307
        %1319 = vmatpush.msra.mxu0 %v1305
        %1320 = vmatpush.msra.mxu0 %v1303
        %1321 = vmatpush.msra.mxu0 %v1301
        %1322 = vmatpush.msra.mxu0 %v1299
        %1323 = vmatpush.msra.mxu0 %v1297
        %1324 = vmatpush.msra.mxu0 %v1295
        %1325 = vmatpush.msra.mxu0 %v1293
        %1326 = vmatpush.msra.mxu0 %v1291
        %1327 = vmatpush.msra.mxu0 %v1289
        %1328 = vmatpush.msra.mxu0 %v1287
        %1329 = vmatpush.msra.mxu0 %v1285
        %1330 = vmatpush.msra.mxu0 %v1283
        %1331 = vmatpush.msra.mxu0 %v1281
        %1332 = vmatpush.msra.mxu0 %v1279
        %1333 = vmatmul.f32.gmra.mxu0 %v786
        %v1334 = vpop.f32.mrf.mxu0
        %v1335 = vadd.f32 %v1313, %v1334
        %1336 = vdwg.mxu0
        %1337 = vmatpush.msra.mxu0 %v1310
        %1338 = vmatpush.msra.mxu0 %v1308
        %1339 = vmatpush.msra.mxu0 %v1306
        %1340 = vmatpush.msra.mxu0 %v1304
        %1341 = vmatpush.msra.mxu0 %v1302
        %1342 = vmatpush.msra.mxu0 %v1300
        %1343 = vmatpush.msra.mxu0 %v1298
        %1344 = vmatpush.msra.mxu0 %v1296
        %1345 = vmatpush.msra.mxu0 %v1294
        %1346 = vmatpush.msra.mxu0 %v1292
        %1347 = vmatpush.msra.mxu0 %v1290
        %1348 = vmatpush.msra.mxu0 %v1288
        %1349 = vmatpush.msra.mxu0 %v1286
        %1350 = vmatpush.msra.mxu0 %v1284
        %1351 = vmatpush.msra.mxu0 %v1282
        %1352 = vmatpush.msra.mxu0 %v1280
        %1353 = vmatmul.f32.gmra.mxu0 %v786
        %v1354 = vpop.f32.mrf.mxu0
        %v1355 = vadd.f32 %v1314, %v1354
        %1356 = vdwg.mxu0
        %v1357 = vsel %vm912, %v1335, 0.0
        %v1358 = vsel %vm912, %v1355, 0.0
        %1359 = vmatpush.xpose.msra.mxu0 0.0
        %1360 = vmatpush.xpose.msra.mxu0 0.0
        %1361 = vmatpush.xpose.msra.mxu0 0.0
        %1362 = vmatpush.xpose.msra.mxu0 0.0
        %1363 = vmatpush.xpose.msra.mxu0 0.0
        %1364 = vmatpush.xpose.msra.mxu0 0.0
        %1365 = vmatpush.xpose.msra.mxu0 0.0
        %1366 = vmatpush.xpose.msra.mxu0 0.0
        %1367 = vmatpush.xpose.msra.mxu0 0.0
        %1368 = vmatpush.xpose.msra.mxu0 0.0
        %1369 = vmatpush.xpose.msra.mxu0 0.0
        %1370 = vmatpush.xpose.msra.mxu0 0.0
        %1371 = vmatpush.xpose.msra.mxu0 0.0
        %1372 = vmatpush.xpose.msra.mxu0 0.0
        %1373 = vmatpush.xpose.msra.mxu0 0.0
        %1374 = vmatpush.xpose.msra.mxu0 %v1357
        %1375 = vmatmul.f32.gmra.mxu0 %v1277
        %v1376 = vpop.f32.mrf.mxu0
        %v1377 = vadd.f32 0.0, %v1376
        %1378 = vdwg.mxu0
        %v1379 = vmul.f32 %v1377, 0.17677669
        %v1380 = vsel %vm937, %v1379, -inf
        %1381 = vmax.xlane.f32.xlu0 %v1380
        %v1382 = vpop.xlane.xlu0 %1381
        %v1383 = vsub.f32 %v1379, %v1382
        %v1384 = vmul.f32 %v1383, 1.442695
        %v1385 = vpow.pop %v1384
        %v1386 = vsel %vm937, %v1385, 0.0
        %1387 = vadd.xlane.f32.xlu0 %v1386
        %v1388 = vpop.xlane.xlu0 %1387
        %v1389 = vrcp.pop %v1388
        %v1390 = vmul.f32 %v1385, %v1389
        %v1391 = vsel %vm953, %v1335, 0.0
        %v1392 = vsel %vm953, %v1355, 0.0
        %1393 = vmatpush.xpose.msra.mxu0 0.0
        %1394 = vmatpush.xpose.msra.mxu0 0.0
        %1395 = vmatpush.xpose.msra.mxu0 0.0
        %1396 = vmatpush.xpose.msra.mxu0 0.0
        %1397 = vmatpush.xpose.msra.mxu0 0.0
        %1398 = vmatpush.xpose.msra.mxu0 0.0
        %1399 = vmatpush.xpose.msra.mxu0 0.0
        %1400 = vmatpush.xpose.msra.mxu0 0.0
        %1401 = vmatpush.xpose.msra.mxu0 0.0
        %1402 = vmatpush.xpose.msra.mxu0 0.0
        %1403 = vmatpush.xpose.msra.mxu0 0.0
        %1404 = vmatpush.xpose.msra.mxu0 0.0
        %1405 = vmatpush.xpose.msra.mxu0 0.0
        %1406 = vmatpush.xpose.msra.mxu0 0.0
        %1407 = vmatpush.xpose.msra.mxu0 0.0
        %1408 = vmatpush.xpose.msra.mxu0 %v1391
        %1409 = vmatmul.f32.gmra.mxu0 %v1277
        %v1410 = vpop.f32.mrf.mxu0
        %v1411 = vadd.f32 0.0, %v1410
        %1412 = vdwg.mxu0
        %v1413 = vmul.f32 %v1411, 0.17677669
        %v1414 = vsel %vm937, %v1413, -inf
        %1415 = vmax.xlane.f32.xlu0 %v1414
        %v1416 = vpop.xlane.xlu0 %1415
        %v1417 = vsub.f32 %v1413, %v1416
        %v1418 = vmul.f32 %v1417, 1.442695
        %v1419 = vpow.pop %v1418
        %v1420 = vsel %vm937, %v1419, 0.0
        %1421 = vadd.xlane.f32.xlu0 %v1420
        %v1422 = vpop.xlane.xlu0 %1421
        %v1423 = vrcp.pop %v1422
        %v1424 = vmul.f32 %v1419, %v1423
        %v1426 = vsel %vm937, %v1424, 0
        %1428 = vmatpush.msra.mxu0 0.0
        %1429 = vmatpush.msra.mxu0 0.0
        %1430 = vmatpush.msra.mxu0 0.0
        %1431 = vmatpush.msra.mxu0 0.0
        %1432 = vmatpush.msra.mxu0 0.0
        %1433 = vmatpush.msra.mxu0 0.0
        %1434 = vmatpush.msra.mxu0 0.0
        %1435 = vmatpush.msra.mxu0 0.0
        %1436 = vmatpush.msra.mxu0 0.0
        %1437 = vmatpush.msra.mxu0 0.0
        %1438 = vmatpush.msra.mxu0 0.0
        %1439 = vmatpush.msra.mxu0 0.0
        %1440 = vmatpush.msra.mxu0 0.0
        %1441 = vmatpush.msra.mxu0 0.0
        %1442 = vmatpush.msra.mxu0 0.0
        %1443 = vmatpush.msra.mxu0 %v1392
        %1444 = vmatmul.f32.gmra.mxu0 %v1426
        %v1445 = vpop.f32.mrf.mxu0
        %v1446 = vadd.f32 0.0, %v1445
        %1447 = vdwg.mxu0
        %v1449 = vsel %vm937, %v1390, 0
        %1451 = vmatpush.msra.mxu0 0.0
        %1452 = vmatpush.msra.mxu0 0.0
        %1453 = vmatpush.msra.mxu0 0.0
        %1454 = vmatpush.msra.mxu0 0.0
        %1455 = vmatpush.msra.mxu0 0.0
        %1456 = vmatpush.msra.mxu0 0.0
        %1457 = vmatpush.msra.mxu0 0.0
        %1458 = vmatpush.msra.mxu0 0.0
        %1459 = vmatpush.msra.mxu0 0.0
        %1460 = vmatpush.msra.mxu0 0.0
        %1461 = vmatpush.msra.mxu0 0.0
        %1462 = vmatpush.msra.mxu0 0.0
        %1463 = vmatpush.msra.mxu0 0.0
        %1464 = vmatpush.msra.mxu0 0.0
        %1465 = vmatpush.msra.mxu0 0.0
        %1466 = vmatpush.msra.mxu0 %v1358
        %1467 = vmatmul.f32.gmra.mxu0 %v1449
        %v1468 = vpop.f32.mrf.mxu0
        %v1469 = vadd.f32 %v1446, %v1468
        %1470 = vdwg.mxu0
        %v1471 = vsel %vm1039, %v1335, 0.0
        %v1472 = vsel %vm1039, %v1355, 0.0
        %1473 = vmatpush.xpose.msra.mxu0 0.0
        %1474 = vmatpush.xpose.msra.mxu0 0.0
        %1475 = vmatpush.xpose.msra.mxu0 0.0
        %1476 = vmatpush.xpose.msra.mxu0 0.0
        %1477 = vmatpush.xpose.msra.mxu0 0.0
        %1478 = vmatpush.xpose.msra.mxu0 0.0
        %1479 = vmatpush.xpose.msra.mxu0 0.0
        %1480 = vmatpush.xpose.msra.mxu0 0.0
        %1481 = vmatpush.xpose.msra.mxu0 0.0
        %1482 = vmatpush.xpose.msra.mxu0 0.0
        %1483 = vmatpush.xpose.msra.mxu0 0.0
        %1484 = vmatpush.xpose.msra.mxu0 0.0
        %1485 = vmatpush.xpose.msra.mxu0 0.0
        %1486 = vmatpush.xpose.msra.mxu0 0.0
        %1487 = vmatpush.xpose.msra.mxu0 0.0
        %1488 = vmatpush.xpose.msra.mxu0 %v1471
        %1489 = vmatmul.f32.gmra.mxu0 %v1277
        %v1490 = vpop.f32.mrf.mxu0
        %v1491 = vadd.f32 0.0, %v1490
        %1492 = vdwg.mxu0
        %v1493 = vmul.f32 %v1491, 0.17677669
        %v1494 = vsel %vm937, %v1493, -inf
        %1495 = vmax.xlane.f32.xlu0 %v1494
        %v1496 = vpop.xlane.xlu0 %1495
        %v1497 = vsub.f32 %v1493, %v1496
        %v1498 = vmul.f32 %v1497, 1.442695
        %v1499 = vpow.pop %v1498
        %v1500 = vsel %vm937, %v1499, 0.0
        %1501 = vadd.xlane.f32.xlu0 %v1500
        %v1502 = vpop.xlane.xlu0 %1501
        %v1503 = vrcp.pop %v1502
        %v1504 = vmul.f32 %v1499, %v1503
        %v1506 = vsel %vm937, %v1504, 0
        %1508 = vmatpush.msra.mxu0 0.0
        %1509 = vmatpush.msra.mxu0 0.0
        %1510 = vmatpush.msra.mxu0 0.0
        %1511 = vmatpush.msra.mxu0 0.0
        %1512 = vmatpush.msra.mxu0 0.0
        %1513 = vmatpush.msra.mxu0 0.0
        %1514 = vmatpush.msra.mxu0 0.0
        %1515 = vmatpush.msra.mxu0 0.0
        %1516 = vmatpush.msra.mxu0 0.0
        %1517 = vmatpush.msra.mxu0 0.0
        %1518 = vmatpush.msra.mxu0 0.0
        %1519 = vmatpush.msra.mxu0 0.0
        %1520 = vmatpush.msra.mxu0 0.0
        %1521 = vmatpush.msra.mxu0 0.0
        %1522 = vmatpush.msra.mxu0 0.0
        %1523 = vmatpush.msra.mxu0 %v1472
        %1524 = vmatmul.f32.gmra.mxu0 %v1506
        %v1525 = vpop.f32.mrf.mxu0
        %v1526 = vadd.f32 0.0, %v1525
        %1527 = vdwg.mxu0
        %v1528 = vadd.f32 %v1469, %v1526
        %v1529 = vsel %vm1103, %v1335, 0.0
        %v1530 = vsel %vm1103, %v1355, 0.0
        %1531 = vmatpush.xpose.msra.mxu0 0.0
        %1532 = vmatpush.xpose.msra.mxu0 0.0
        %1533 = vmatpush.xpose.msra.mxu0 0.0
        %1534 = vmatpush.xpose.msra.mxu0 0.0
        %1535 = vmatpush.xpose.msra.mxu0 0.0
        %1536 = vmatpush.xpose.msra.mxu0 0.0
        %1537 = vmatpush.xpose.msra.mxu0 0.0
        %1538 = vmatpush.xpose.msra.mxu0 0.0
        %1539 = vmatpush.xpose.msra.mxu0 0.0
        %1540 = vmatpush.xpose.msra.mxu0 0.0
        %1541 = vmatpush.xpose.msra.mxu0 0.0
        %1542 = vmatpush.xpose.msra.mxu0 0.0
        %1543 = vmatpush.xpose.msra.mxu0 0.0
        %1544 = vmatpush.xpose.msra.mxu0 0.0
        %1545 = vmatpush.xpose.msra.mxu0 0.0
        %1546 = vmatpush.xpose.msra.mxu0 %v1529
        %1547 = vmatmul.f32.gmra.mxu0 %v1277
        %v1548 = vpop.f32.mrf.mxu0
        %v1549 = vadd.f32 0.0, %v1548
        %1550 = vdwg.mxu0
        %v1551 = vmul.f32 %v1549, 0.17677669
        %v1552 = vsel %vm937, %v1551, -inf
        %1553 = vmax.xlane.f32.xlu0 %v1552
        %v1554 = vpop.xlane.xlu0 %1553
        %v1555 = vsub.f32 %v1551, %v1554
        %v1556 = vmul.f32 %v1555, 1.442695
        %v1557 = vpow.pop %v1556
        %v1558 = vsel %vm937, %v1557, 0.0
        %1559 = vadd.xlane.f32.xlu0 %v1558
        %v1560 = vpop.xlane.xlu0 %1559
        %v1561 = vrcp.pop %v1560
        %v1562 = vmul.f32 %v1557, %v1561
        %v1564 = vsel %vm937, %v1562, 0
        %1566 = vmatpush.msra.mxu0 0.0
        %1567 = vmatpush.msra.mxu0 0.0
        %1568 = vmatpush.msra.mxu0 0.0
        %1569 = vmatpush.msra.mxu0 0.0
        %1570 = vmatpush.msra.mxu0 0.0
        %1571 = vmatpush.msra.mxu0 0.0
        %1572 = vmatpush.msra.mxu0 0.0
        %1573 = vmatpush.msra.mxu0 0.0
        %1574 = vmatpush.msra.mxu0 0.0
        %1575 = vmatpush.msra.mxu0 0.0
        %1576 = vmatpush.msra.mxu0 0.0
        %1577 = vmatpush.msra.mxu0 0.0
        %1578 = vmatpush.msra.mxu0 0.0
        %1579 = vmatpush.msra.mxu0 0.0
        %1580 = vmatpush.msra.mxu0 0.0
        %1581 = vmatpush.msra.mxu0 %v1530
        %1582 = vmatmul.f32.gmra.mxu0 %v1564
        %v1583 = vpop.f32.mrf.mxu0
        %v1584 = vadd.f32 0.0, %v1583
        %1585 = vdwg.mxu0
        %v1586 = vadd.f32 %v1528, %v1584
        %v1587 = vld [vmem:[#allocation9] sm:$0xff]
        %v1588 = vld [vmem:[#allocation9 + $0x8] sm:$0xff]
        %v1589 = vld [vmem:[#allocation9 + $0x10] sm:$0xff]
        %v1590 = vld [vmem:[#allocation9 + $0x18] sm:$0xff]
        %v1591 = vld [vmem:[#allocation9 + $0x20] sm:$0xff]
        %v1592 = vld [vmem:[#allocation9 + $0x28] sm:$0xff]
        %v1593 = vld [vmem:[#allocation9 + $0x30] sm:$0xff]
        %v1594 = vld [vmem:[#allocation9 + $0x38] sm:$0xff]
        %v1595 = vld [vmem:[#allocation9 + $0x40] sm:$0xff]
        %v1596 = vld [vmem:[#allocation9 + $0x48] sm:$0xff]
        %v1597 = vld [vmem:[#allocation9 + $0x50] sm:$0xff]
        %v1598 = vld [vmem:[#allocation9 + $0x58] sm:$0xff]
        %v1599 = vld [vmem:[#allocation9 + $0x60] sm:$0xff]
        %v1600 = vld [vmem:[#allocation9 + $0x68] sm:$0xff]
        %v1601 = vld [vmem:[#allocation9 + $0x70] sm:$0xff]
        %v1602 = vld [vmem:[#allocation9 + $0x78] sm:$0xff]
        %v1603 = vld [vmem:[#allocation10] sm:$0x1]
        %v1605 = vperm.slane %v1603, 0
        %1607 = vmatpush.msra.mxu0 %v1602
        %1608 = vmatpush.msra.mxu0 %v1601
        %1609 = vmatpush.msra.mxu0 %v1600
        %1610 = vmatpush.msra.mxu0 %v1599
        %1611 = vmatpush.msra.mxu0 %v1598
        %1612 = vmatpush.msra.mxu0 %v1597
        %1613 = vmatpush.msra.mxu0 %v1596
        %1614 = vmatpush.msra.mxu0 %v1595
        %1615 = vmatpush.msra.mxu0 %v1594
        %1616 = vmatpush.msra.mxu0 %v1593
        %1617 = vmatpush.msra.mxu0 %v1592
        %1618 = vmatpush.msra.mxu0 %v1591
        %1619 = vmatpush.msra.mxu0 %v1590
        %1620 = vmatpush.msra.mxu0 %v1589
        %1621 = vmatpush.msra.mxu0 %v1588
        %1622 = vmatpush.msra.mxu0 %v1587
        %1623 = vmatmul.f32.gmra.mxu0 %v1586
        %v1624 = vpop.f32.mrf.mxu0
        %v1625 = vadd.f32 %v1605, %v1624
        %1626 = vdwg.mxu0
        %v1627 = vadd.f32 %v1625, %v1238
        %1628 = vadd.xlane.f32.xlu0 %v1627
        %v1629 = vpop.xlane.xlu0 %1628
        %v1630 = vmul.f32 %v1629, %v1212
        %v1631 = vsub.f32 %v1627, %v1630
        %v1632 = vmul.f32 %v1631, %v1631
        %1633 = vadd.xlane.f32.xlu0 %v1632
        %v1634 = vpop.xlane.xlu0 %1633
        %v1635 = vmul.f32 %v1634, %v1212
        %v1636 = vadd.f32 %v1635, 1e-05
        %v1637 = vrsqrt.pop %v1636
        %v1638 = vmul.f32 %v1637, %v1636
        %v1639 = vmul.f32 %v1638, %v1637
        %v1640 = vmul.f32 0.5, %v1639
        %v1641 = vsub.f32 1.5, %v1640
        %v1642 = vmul.f32 %v1637, %v1641
        %vm1643 = vweird.f32 %v1636
        %vm1644 = vweird.f32 %v1637
        %vm1645 = vmor %vm1643, %vm1644
        %v1646 = vsel %vm1645, %v1637, %v1642
        %v1647 = vmul.f32 %v1631, %v1646
        %v1648 = vmul.f32 %v1647, %v1232
        %v1649 = vadd.f32 %v1648, %v1236
        %v1650 = vld [vmem:[%s15] sm:$0xff]
        %v1651 = vld [vmem:[%s15 + $0x8] sm:$0xff]
        %v1652 = vld [vmem:[%s15 + $0x10] sm:$0xff]
        %v1653 = vld [vmem:[%s15 + $0x18] sm:$0xff]
        %v1654 = vld [vmem:[%s15 + $0x20] sm:$0xff]
        %v1655 = vld [vmem:[%s15 + $0x28] sm:$0xff]
        %v1656 = vld [vmem:[%s15 + $0x30] sm:$0xff]
        %v1657 = vld [vmem:[%s15 + $0x38] sm:$0xff]
        %v1658 = vld [vmem:[%s15 + $0x40] sm:$0xff]
        %v1659 = vld [vmem:[%s15 + $0x48] sm:$0xff]
        %v1660 = vld [vmem:[%s15 + $0x50] sm:$0xff]
        %v1661 = vld [vmem:[%s15 + $0x58] sm:$0xff]
        %v1662 = vld [vmem:[%s15 + $0x60] sm:$0xff]
        %v1663 = vld [vmem:[%s15 + $0x68] sm:$0xff]
        %v1664 = vld [vmem:[%s15 + $0x70] sm:$0xff]
        %v1665 = vld [vmem:[%s15 + $0x78] sm:$0xff]
        %v1666 = vld [vmem:[#allocation15] sm:$0x1]
        %v1668 = vperm.slane %v1666, 0
        %1670 = vmatpush.msra.mxu0 %v1665
        %1671 = vmatpush.msra.mxu0 %v1664
        %1672 = vmatpush.msra.mxu0 %v1663
        %1673 = vmatpush.msra.mxu0 %v1662
        %1674 = vmatpush.msra.mxu0 %v1661
        %1675 = vmatpush.msra.mxu0 %v1660
        %1676 = vmatpush.msra.mxu0 %v1659
        %1677 = vmatpush.msra.mxu0 %v1658
        %1678 = vmatpush.msra.mxu0 %v1657
        %1679 = vmatpush.msra.mxu0 %v1656
        %1680 = vmatpush.msra.mxu0 %v1655
        %1681 = vmatpush.msra.mxu0 %v1654
        %1682 = vmatpush.msra.mxu0 %v1653
        %1683 = vmatpush.msra.mxu0 %v1652
        %1684 = vmatpush.msra.mxu0 %v1651
        %1685 = vmatpush.msra.mxu0 %v1650
        %1686 = vmatmul.f32.gmra.mxu0 %v1649
        %v1687 = vpop.f32.mrf.mxu0
        %v1688 = vadd.f32 %v1668, %v1687
        %1689 = vdwg.mxu0
        %v1690 = vmax.f32 %v1688, 0.0
        %v1691 = vld [vmem:[#allocation16] sm:$0xff]
        %v1692 = vld [vmem:[#allocation16 + $0x8] sm:$0xff]
        %v1693 = vld [vmem:[#allocation16 + $0x10] sm:$0xff]
        %v1694 = vld [vmem:[#allocation16 + $0x18] sm:$0xff]
        %v1695 = vld [vmem:[#allocation16 + $0x20] sm:$0xff]
        %v1696 = vld [vmem:[#allocation16 + $0x28] sm:$0xff]
        %v1697 = vld [vmem:[#allocation16 + $0x30] sm:$0xff]
        %v1698 = vld [vmem:[#allocation16 + $0x38] sm:$0xff]
        %v1699 = vld [vmem:[#allocation18] sm:$0x1]
        %v1701 = vperm.slane %v1699, 0
        %vm1703 = vcmask 523264
        %v1705 = vsel %vm1703, %v1690, 0
        %1707 = vmatpush.msra.mxu0 0.0
        %1708 = vmatpush.msra.mxu0 0.0
        %1709 = vmatpush.msra.mxu0 0.0
        %1710 = vmatpush.msra.mxu0 0.0
        %1711 = vmatpush.msra.mxu0 0.0
        %1712 = vmatpush.msra.mxu0 0.0
        %1713 = vmatpush.msra.mxu0 0.0
        %1714 = vmatpush.msra.mxu0 0.0
        %1715 = vmatpush.msra.mxu0 %v1698
        %1716 = vmatpush.msra.mxu0 %v1697
        %1717 = vmatpush.msra.mxu0 %v1696
        %1718 = vmatpush.msra.mxu0 %v1695
        %1719 = vmatpush.msra.mxu0 %v1694
        %1720 = vmatpush.msra.mxu0 %v1693
        %1721 = vmatpush.msra.mxu0 %v1692
        %1722 = vmatpush.msra.mxu0 %v1691
        %1723 = vmatmul.f32.gmra.mxu0 %v1705
        %v1724 = vpop.f32.mrf.mxu0
        %v1725 = vadd.f32 %v1701, %v1724
        %1726 = vdwg.mxu0
        %v1727 = vadd.f32 %v1725, %v1649
        %1728 = vadd.xlane.f32.xlu0 %v1727
        %v1729 = vpop.xlane.xlu0 %1728
        %v1730 = vmul.f32 %v1729, %v1212
        %v1731 = vsub.f32 %v1727, %v1730
        %v1732 = vmul.f32 %v1731, %v1731
        %1733 = vadd.xlane.f32.xlu0 %v1732
        %v1734 = vpop.xlane.xlu0 %1733
        %v1735 = vmul.f32 %v1734, %v1212
        %v1736 = vadd.f32 %v1735, 1e-05
        %v1737 = vrsqrt.pop %v1736
        %v1738 = vmul.f32 %v1737, %v1736
        %v1739 = vmul.f32 %v1738, %v1737
        %v1740 = vmul.f32 0.5, %v1739
        %v1741 = vsub.f32 1.5, %v1740
        %v1742 = vmul.f32 %v1737, %v1741
        %vm1743 = vweird.f32 %v1736
        %vm1744 = vweird.f32 %v1737
        %vm1745 = vmor %vm1743, %vm1744
        %v1746 = vsel %vm1745, %v1737, %v1742
        %v1747 = vmul.f32 %v1731, %v1746
        %v1748 = vmul.f32 %v1747, %v1232
        %v1749 = vadd.f32 %v1748, %v1236
        %1750 = vst [vmem:[%s784] sm:$0xff] %v1749
        %p1751 = scmp.lt.s32.totalorder %s36, 1
        %s1752 = scalar_select %p1751, %s36, 1
        %s1753 = smul.addr %s1752, 8
        %s1754 = scalar_lea.vmem %s19, %s1753
        // Predicated region
        $region141: #{_lambda_.8} parent=95 // pred_check
          %p1755 = pneg %p463
        $region142: #{_lambda_.8} parent=95 // pred_check_branch
          %1757 = sbr.rel (%p1755) target = $region144
        $region143: #{_lambda_.8} parent=95 // pred_region
          _
        $region144: #{_lambda_.8} parent=95 // pred_fallthru
          _
      $region96: #{_lambda_.8} parent=5 // pred_fallthru
        _
      %p1758 = scmp.le.s32.totalorder 2, %s31
      // Predicated region
      $region145: #{_lambda_.8} parent=5 // pred_check
        %p1759 = pneg %p1758
      $region146: #{_lambda_.8} parent=5 // pred_check_branch
        %1761 = sbr.rel (%p1759) target = $region148
      $region147: #{_lambda_.8} parent=5 // pred_region
        %s1762 = ssub.s32 %s31, 2
        // Predicated region
        $region149: #{_lambda_.8} parent=147 // pred_check
          %p1763 = pneg %p469
        $region150: #{_lambda_.8} parent=147 // pred_check_branch
          %1765 = sbr.rel (%p1763) target = $region152
        $region151: #{_lambda_.8} parent=147 // pred_region
          %p1766 = scmp.lt.s32.totalorder %s37, 1
          %s1767 = scalar_select %p1766, %s37, 1
          %s1768 = smul.addr %s1767, 8
          %s1769 = scalar_lea.vmem %s19, %s1768
        $region152: #{_lambda_.8} parent=147 // pred_fallthru
          _
      $region148: #{_lambda_.8} parent=5 // pred_fallthru
        _
    $region6: #{_lambda_.8} parent=1 // loop_footer
      %s35 = sadd.s32 1, %s31
    $region7: #{_lambda_.8} parent=1 // loop_footer_branch
      %30 = sbr.rel target = $region3
    $region8: #{_lambda_.8} parent=1 // loop_exit
      _
    %1770 = vsyncpa [#allocation3], 1
    %s1771 = scalar_lea.sflag [#allocation3], 1
    %1772 = vsyncpa %s1771, 1
    %1773 = vsyncpa [#allocation5], 1
    %1774 = vsyncpa [#allocation8], 1
    %1775 = vsyncpa [#allocation11], 1
    %1776 = vsyncpa [#allocation14], 1
    %1777 = vsyncpa [#allocation17], 1

// kernel: _lambda_.7
$region0: #{_lambda_.7}
  #allocation0 [shape = 'u32[]', space=smem, size = 0x4, offset = 0x4, fixed_abs, tag = 'smem constant byte address 0x4 - core index']
  #allocation1 [shape = 'u32[72,128]{1,0:T(1,128)}', space=vmem, size = 0x9000, scoped, tag = 'internal scratch']
  %s0 = inlined_call_operand.vmem [shape: f32[2,8,128], index: 0, kind: input, shape index: {}]
  %s1 = inlined_call_operand.vmem [shape: f32[2,8,128], index: 1, kind: input, shape index: {}]
  %s2 = inlined_call_operand.vmem [shape: f32[8,8], index: 2, kind: input, shape index: {}]
  %s3 = inlined_call_operand.hbm [shape: f32[128,384], index: 3, kind: input, shape index: {}]
  %s4 = inlined_call_operand.vmem [shape: f32[1,384], index: 4, kind: input, shape index: {}]
  %s5 = inlined_call_operand.hbm [shape: f32[128,128], index: 5, kind: input, shape index: {}]
  %s6 = inlined_call_operand.vmem [shape: f32[1,128], index: 6, kind: input, shape index: {}]
  %s7 = inlined_call_operand.hbm [shape: f32[128,128], index: 7, kind: input, shape index: {}]
  %s8 = inlined_call_operand.vmem [shape: f32[1,128], index: 8, kind: input, shape index: {}]
  %s9 = inlined_call_operand.hbm [shape: f32[128,256], index: 9, kind: input, shape index: {}]
  %s10 = inlined_call_operand.vmem [shape: f32[1,256], index: 10, kind: input, shape index: {}]
  %s11 = inlined_call_operand.hbm [shape: f32[128,128], index: 11, kind: input, shape index: {}]
  %s12 = inlined_call_operand.vmem [shape: f32[1,128], index: 12, kind: input, shape index: {}]
  %s13 = inlined_call_operand.vmem [shape: f32[1,128], index: 13, kind: input, shape index: {}]
  %s14 = inlined_call_operand.vmem [shape: f32[1,128], index: 14, kind: input, shape index: {}]
  %s15 = inlined_call_operand.vmem [shape: f32[128,64], index: 15, kind: input, shape index: {}]
  %s16 = inlined_call_operand.vmem [shape: f32[1,64], index: 16, kind: input, shape index: {}]
  %s17 = inlined_call_operand.vmem [shape: f32[64,128], index: 17, kind: input, shape index: {}]
  %s18 = inlined_call_operand.vmem [shape: f32[1,128], index: 18, kind: input, shape index: {}]
  %s19 = inlined_call_operand.vmem [shape: f32[2,8,128], index: 19, kind: output, shape index: {}]
  %s20 = sld [smem:[#allocation0]]
  $region129: #{_lambda_.7} parent=0
    _
  %s22 = ssub.s32 1, %s20
  %s23 = scalar_select 0, %s22, %s20
  $region1: #{_lambda_.7} parent=0
    #allocation2 [shape = 'u8[196608]{0}', space=vmem, size = 0x30000, scoped, tag = 'input window, operand 3, single buffered']
    #allocation3 [shape = 's32[2]{0}', space=sflag, size = 0x8, scoped, tag = 'scoped memory for _lambda_.7']
    #allocation4 [shape = 'u8[65536]{0}', space=vmem, size = 0x10000, scoped, tag = 'input window, operand 5, single buffered']
    #allocation5 [shape = 's32[1]{0}', space=sflag, size = 0x4, scoped, tag = 'scoped memory for _lambda_.7']
    #allocation6 [shape = 'u8[65536]{0}', space=vmem, size = 0x10000, scoped, tag = 'input window, operand 7, single buffered']
    #allocation7 [shape = 'u8[131072]{0}', space=vmem, size = 0x20000, scoped, tag = 'input window, operand 9, single buffered']
    #allocation8 [shape = 's32[1]{0}', space=sflag, size = 0x4, scoped, tag = 'scoped memory for _lambda_.7']
    #allocation9 [shape = 'u8[65536]{0}', space=vmem, size = 0x10000, scoped, tag = 'input window, operand 11, single buffered']
    %24 = vsyncpa [#allocation3], 0
    %25 = vsyncpa [#allocation5], 0
    %26 = vsyncpa [#allocation8], 0
    loop: start=0, step=1, limit=4
    $region2: #{_lambda_.7} parent=1 // loop_pre_header
      _
    $region3: #{_lambda_.7} parent=1 // loop_header
      %s28 = sphi 0, %s32
      %p29 = scmp.ge.s32.totalorder %s28, 4
      %s38 = sphi 0, %s40
      %s41 = sphi 0, %s38
      %s42 = sphi 0, %s41
      %s58 = sphi 0, %s42
      %s64 = sphi 0, %s66
      %s67 = sphi 0, %s64
      %s68 = sphi 0, %s67
      %s84 = sphi 0, %s68
      %s88 = sphi 0, %s88
      %s90 = sphi 0, %s88
      %s91 = sphi 0, %s90
      %s105 = sphi 0, %s91
      %s109 = sphi 0, %s109
      %s111 = sphi 0, %s109
      %s112 = sphi 0, %s111
      %s126 = sphi 0, %s112
      %s130 = sphi 0, %s130
      %s132 = sphi 0, %s130
      %s133 = sphi 0, %s132
      %s147 = sphi 0, %s133
      %s151 = sphi 0, %s151
      %s153 = sphi 0, %s151
      %s154 = sphi 0, %s153
      %s168 = sphi 0, %s154
      %s172 = sphi 0, %s172
      %s174 = sphi 0, %s172
      %s175 = sphi 0, %s174
      %s189 = sphi 0, %s175
      %s193 = sphi 0, %s193
      %s195 = sphi 0, %s193
      %s196 = sphi 0, %s195
      %s210 = sphi 0, %s196
      %s214 = sphi 0, %s214
      %s216 = sphi 0, %s214
      %s217 = sphi 0, %s216
      %s231 = sphi 0, %s217
      %s235 = sphi 0, %s235
      %s237 = sphi 0, %s235
      %s238 = sphi 0, %s237
      %s252 = sphi 0, %s238
      %s256 = sphi 0, %s256
      %s258 = sphi 0, %s256
      %s259 = sphi 0, %s258
      %s273 = sphi 0, %s259
      %s277 = sphi 0, %s277
      %s279 = sphi 0, %s277
      %s280 = sphi 0, %s279
      %s294 = sphi 0, %s280
      %s298 = sphi 0, %s298
      %s300 = sphi 0, %s298
      %s301 = sphi 0, %s300
      %s315 = sphi 0, %s301
      %s319 = sphi 0, %s319
      %s321 = sphi 0, %s319
      %s322 = sphi 0, %s321
      %s336 = sphi 0, %s322
      %s340 = sphi 0, %s340
      %s342 = sphi 0, %s340
      %s343 = sphi 0, %s342
      %s357 = sphi 0, %s343
      %s361 = sphi 0, %s361
      %s363 = sphi 0, %s361
      %s364 = sphi 0, %s363
      %s378 = sphi 0, %s364
      %s382 = sphi 0, %s382
      %s384 = sphi 0, %s382
      %s385 = sphi 0, %s384
      %s399 = sphi 0, %s385
      %s403 = sphi 0, %s403
      %s405 = sphi 0, %s403
      %s406 = sphi 0, %s405
      %s420 = sphi 0, %s406
      %s424 = sphi 0, %s424
      %s426 = sphi 0, %s424
      %s427 = sphi 0, %s426
      %s441 = sphi 0, %s427
      %s447 = sphi 0, %s449
      %s450 = sphi 0, %s447
      %s451 = sphi 0, %s450
      %s467 = sphi 0, %s451
    $region4: #{_lambda_.7} parent=1 // loop_header_branch
      %31 = sbr.rel (%p29) target = $region8
    $region5: #{_lambda_.7} parent=1 // loop_body
      %s33 = ssub.s32 %s28, 1
      %s34 = ssub.s32 %s28, 2
      %s35 = sadd.s32 %s28, 1
      %s36 = ssub.s32 %s28, %s35
      %p37 = scmp.eq.s32.totalorder %s36, 0
      %s39 = sadd.s32 %s38, 1
      %s40 = scalar_select %p37, %s38, %s39
      %p43 = pneg %p37
      %p44 = scmp.eq.s32.totalorder %s28, 1
      %p45 = por %p43, %p44
      %p46 = scmp.ne.s32.totalorder %s38, %s41
      %p47 = scmp.eq.s32.totalorder %s28, 0
      %p48 = por %p46, %p47
      %p49 = scmp.ne.s32.totalorder %s38, %s41
      %p50 = scmp.eq.s32.totalorder %s33, 1
      %p51 = por %p49, %p50
      %p52 = scmp.ne.s32.totalorder %s41, %s42
      %p53 = scmp.eq.s32.totalorder %s33, 0
      %p54 = por %p52, %p53
      %p55 = scmp.ne.s32.totalorder %s41, %s42
      %p56 = scmp.eq.s32.totalorder %s34, 1
      %p57 = por %p55, %p56
      %p59 = scmp.ne.s32.totalorder %s42, %s58
      %p60 = scmp.eq.s32.totalorder %s34, 0
      %p61 = por %p59, %p60
      %s62 = ssub.s32 %s28, %s35
      %p63 = scmp.eq.s32.totalorder %s62, 0
      %s65 = sadd.s32 %s64, 1
      %s66 = scalar_select %p63, %s64, %s65
      %p69 = pneg %p63
      %p70 = scmp.eq.s32.totalorder %s28, 1
      %p71 = por %p69, %p70
      %p72 = scmp.ne.s32.totalorder %s64, %s67
      %p73 = scmp.eq.s32.totalorder %s28, 0
      %p74 = por %p72, %p73
      %p75 = scmp.ne.s32.totalorder %s64, %s67
      %p76 = scmp.eq.s32.totalorder %s33, 1
      %p77 = por %p75, %p76
      %p78 = scmp.ne.s32.totalorder %s67, %s68
      %p79 = scmp.eq.s32.totalorder %s33, 0
      %p80 = por %p78, %p79
      %p81 = scmp.ne.s32.totalorder %s67, %s68
      %p82 = scmp.eq.s32.totalorder %s34, 1
      %p83 = por %p81, %p82
      %p85 = scmp.ne.s32.totalorder %s68, %s84
      %p86 = scmp.eq.s32.totalorder %s34, 0
      %p87 = por %p85, %p86
      %s89 = sadd.s32 %s88, 1
      %p92 = scmp.eq.s32.totalorder %s28, 1
      %p93 = scmp.ne.s32.totalorder %s88, %s90
      %p94 = scmp.eq.s32.totalorder %s28, 0
      %p95 = por %p93, %p94
      %p96 = scmp.ne.s32.totalorder %s88, %s90
      %p97 = scmp.eq.s32.totalorder %s33, 1
      %p98 = por %p96, %p97
      %p99 = scmp.ne.s32.totalorder %s90, %s91
      %p100 = scmp.eq.s32.totalorder %s33, 0
      %p101 = por %p99, %p100
      %p102 = scmp.ne.s32.totalorder %s90, %s91
      %p103 = scmp.eq.s32.totalorder %s34, 1
      %p104 = por %p102, %p103
      %p106 = scmp.ne.s32.totalorder %s91, %s105
      %p107 = scmp.eq.s32.totalorder %s34, 0
      %p108 = por %p106, %p107
      %s110 = sadd.s32 %s109, 1
      %p113 = scmp.eq.s32.totalorder %s28, 1
      %p114 = scmp.ne.s32.totalorder %s109, %s111
      %p115 = scmp.eq.s32.totalorder %s28, 0
      %p116 = por %p114, %p115
      %p117 = scmp.ne.s32.totalorder %s109, %s111
      %p118 = scmp.eq.s32.totalorder %s33, 1
      %p119 = por %p117, %p118
      %p120 = scmp.ne.s32.totalorder %s111, %s112
      %p121 = scmp.eq.s32.totalorder %s33, 0
      %p122 = por %p120, %p121
      %p123 = scmp.ne.s32.totalorder %s111, %s112
      %p124 = scmp.eq.s32.totalorder %s34, 1
      %p125 = por %p123, %p124
      %p127 = scmp.ne.s32.totalorder %s112, %s126
      %p128 = scmp.eq.s32.totalorder %s34, 0
      %p129 = por %p127, %p128
      %s131 = sadd.s32 %s130, 1
      %p134 = scmp.eq.s32.totalorder %s28, 1
      %p135 = scmp.ne.s32.totalorder %s130, %s132
      %p136 = scmp.eq.s32.totalorder %s28, 0
      %p137 = por %p135, %p136
      %p138 = scmp.ne.s32.totalorder %s130, %s132
      %p139 = scmp.eq.s32.totalorder %s33, 1
      %p140 = por %p138, %p139
      %p141 = scmp.ne.s32.totalorder %s132, %s133
      %p142 = scmp.eq.s32.totalorder %s33, 0
      %p143 = por %p141, %p142
      %p144 = scmp.ne.s32.totalorder %s132, %s133
      %p145 = scmp.eq.s32.totalorder %s34, 1
      %p146 = por %p144, %p145
      %p148 = scmp.ne.s32.totalorder %s133, %s147
      %p149 = scmp.eq.s32.totalorder %s34, 0
      %p150 = por %p148, %p149
      %s152 = sadd.s32 %s151, 1
      %p155 = scmp.eq.s32.totalorder %s28, 1
      %p156 = scmp.ne.s32.totalorder %s151, %s153
      %p157 = scmp.eq.s32.totalorder %s28, 0
      %p158 = por %p156, %p157
      %p159 = scmp.ne.s32.totalorder %s151, %s153
      %p160 = scmp.eq.s32.totalorder %s33, 1
      %p161 = por %p159, %p160
      %p162 = scmp.ne.s32.totalorder %s153, %s154
      %p163 = scmp.eq.s32.totalorder %s33, 0
      %p164 = por %p162, %p163
      %p165 = scmp.ne.s32.totalorder %s153, %s154
      %p166 = scmp.eq.s32.totalorder %s34, 1
      %p167 = por %p165, %p166
      %p169 = scmp.ne.s32.totalorder %s154, %s168
      %p170 = scmp.eq.s32.totalorder %s34, 0
      %p171 = por %p169, %p170
      %s173 = sadd.s32 %s172, 1
      %p176 = scmp.eq.s32.totalorder %s28, 1
      %p177 = scmp.ne.s32.totalorder %s172, %s174
      %p178 = scmp.eq.s32.totalorder %s28, 0
      %p179 = por %p177, %p178
      %p180 = scmp.ne.s32.totalorder %s172, %s174
      %p181 = scmp.eq.s32.totalorder %s33, 1
      %p182 = por %p180, %p181
      %p183 = scmp.ne.s32.totalorder %s174, %s175
      %p184 = scmp.eq.s32.totalorder %s33, 0
      %p185 = por %p183, %p184
      %p186 = scmp.ne.s32.totalorder %s174, %s175
      %p187 = scmp.eq.s32.totalorder %s34, 1
      %p188 = por %p186, %p187
      %p190 = scmp.ne.s32.totalorder %s175, %s189
      %p191 = scmp.eq.s32.totalorder %s34, 0
      %p192 = por %p190, %p191
      %s194 = sadd.s32 %s193, 1
      %p197 = scmp.eq.s32.totalorder %s28, 1
      %p198 = scmp.ne.s32.totalorder %s193, %s195
      %p199 = scmp.eq.s32.totalorder %s28, 0
      %p200 = por %p198, %p199
      %p201 = scmp.ne.s32.totalorder %s193, %s195
      %p202 = scmp.eq.s32.totalorder %s33, 1
      %p203 = por %p201, %p202
      %p204 = scmp.ne.s32.totalorder %s195, %s196
      %p205 = scmp.eq.s32.totalorder %s33, 0
      %p206 = por %p204, %p205
      %p207 = scmp.ne.s32.totalorder %s195, %s196
      %p208 = scmp.eq.s32.totalorder %s34, 1
      %p209 = por %p207, %p208
      %p211 = scmp.ne.s32.totalorder %s196, %s210
      %p212 = scmp.eq.s32.totalorder %s34, 0
      %p213 = por %p211, %p212
      %s215 = sadd.s32 %s214, 1
      %p218 = scmp.eq.s32.totalorder %s28, 1
      %p219 = scmp.ne.s32.totalorder %s214, %s216
      %p220 = scmp.eq.s32.totalorder %s28, 0
      %p221 = por %p219, %p220
      %p222 = scmp.ne.s32.totalorder %s214, %s216
      %p223 = scmp.eq.s32.totalorder %s33, 1
      %p224 = por %p222, %p223
      %p225 = scmp.ne.s32.totalorder %s216, %s217
      %p226 = scmp.eq.s32.totalorder %s33, 0
      %p227 = por %p225, %p226
      %p228 = scmp.ne.s32.totalorder %s216, %s217
      %p229 = scmp.eq.s32.totalorder %s34, 1
      %p230 = por %p228, %p229
      %p232 = scmp.ne.s32.totalorder %s217, %s231
      %p233 = scmp.eq.s32.totalorder %s34, 0
      %p234 = por %p232, %p233
      %s236 = sadd.s32 %s235, 1
      %p239 = scmp.eq.s32.totalorder %s28, 1
      %p240 = scmp.ne.s32.totalorder %s235, %s237
      %p241 = scmp.eq.s32.totalorder %s28, 0
      %p242 = por %p240, %p241
      %p243 = scmp.ne.s32.totalorder %s235, %s237
      %p244 = scmp.eq.s32.totalorder %s33, 1
      %p245 = por %p243, %p244
      %p246 = scmp.ne.s32.totalorder %s237, %s238
      %p247 = scmp.eq.s32.totalorder %s33, 0
      %p248 = por %p246, %p247
      %p249 = scmp.ne.s32.totalorder %s237, %s238
      %p250 = scmp.eq.s32.totalorder %s34, 1
      %p251 = por %p249, %p250
      %p253 = scmp.ne.s32.totalorder %s238, %s252
      %p254 = scmp.eq.s32.totalorder %s34, 0
      %p255 = por %p253, %p254
      %s257 = sadd.s32 %s256, 1
      %p260 = scmp.eq.s32.totalorder %s28, 1
      %p261 = scmp.ne.s32.totalorder %s256, %s258
      %p262 = scmp.eq.s32.totalorder %s28, 0
      %p263 = por %p261, %p262
      %p264 = scmp.ne.s32.totalorder %s256, %s258
      %p265 = scmp.eq.s32.totalorder %s33, 1
      %p266 = por %p264, %p265
      %p267 = scmp.ne.s32.totalorder %s258, %s259
      %p268 = scmp.eq.s32.totalorder %s33, 0
      %p269 = por %p267, %p268
      %p270 = scmp.ne.s32.totalorder %s258, %s259
      %p271 = scmp.eq.s32.totalorder %s34, 1
      %p272 = por %p270, %p271
      %p274 = scmp.ne.s32.totalorder %s259, %s273
      %p275 = scmp.eq.s32.totalorder %s34, 0
      %p276 = por %p274, %p275
      %s278 = sadd.s32 %s277, 1
      %p281 = scmp.eq.s32.totalorder %s28, 1
      %p282 = scmp.ne.s32.totalorder %s277, %s279
      %p283 = scmp.eq.s32.totalorder %s28, 0
      %p284 = por %p282, %p283
      %p285 = scmp.ne.s32.totalorder %s277, %s279
      %p286 = scmp.eq.s32.totalorder %s33, 1
      %p287 = por %p285, %p286
      %p288 = scmp.ne.s32.totalorder %s279, %s280
      %p289 = scmp.eq.s32.totalorder %s33, 0
      %p290 = por %p288, %p289
      %p291 = scmp.ne.s32.totalorder %s279, %s280
      %p292 = scmp.eq.s32.totalorder %s34, 1
      %p293 = por %p291, %p292
      %p295 = scmp.ne.s32.totalorder %s280, %s294
      %p296 = scmp.eq.s32.totalorder %s34, 0
      %p297 = por %p295, %p296
      %s299 = sadd.s32 %s298, 1
      %p302 = scmp.eq.s32.totalorder %s28, 1
      %p303 = scmp.ne.s32.totalorder %s298, %s300
      %p304 = scmp.eq.s32.totalorder %s28, 0
      %p305 = por %p303, %p304
      %p306 = scmp.ne.s32.totalorder %s298, %s300
      %p307 = scmp.eq.s32.totalorder %s33, 1
      %p308 = por %p306, %p307
      %p309 = scmp.ne.s32.totalorder %s300, %s301
      %p310 = scmp.eq.s32.totalorder %s33, 0
      %p311 = por %p309, %p310
      %p312 = scmp.ne.s32.totalorder %s300, %s301
      %p313 = scmp.eq.s32.totalorder %s34, 1
      %p314 = por %p312, %p313
      %p316 = scmp.ne.s32.totalorder %s301, %s315
      %p317 = scmp.eq.s32.totalorder %s34, 0
      %p318 = por %p316, %p317
      %s320 = sadd.s32 %s319, 1
      %p323 = scmp.eq.s32.totalorder %s28, 1
      %p324 = scmp.ne.s32.totalorder %s319, %s321
      %p325 = scmp.eq.s32.totalorder %s28, 0
      %p326 = por %p324, %p325
      %p327 = scmp.ne.s32.totalorder %s319, %s321
      %p328 = scmp.eq.s32.totalorder %s33, 1
      %p329 = por %p327, %p328
      %p330 = scmp.ne.s32.totalorder %s321, %s322
      %p331 = scmp.eq.s32.totalorder %s33, 0
      %p332 = por %p330, %p331
      %p333 = scmp.ne.s32.totalorder %s321, %s322
      %p334 = scmp.eq.s32.totalorder %s34, 1
      %p335 = por %p333, %p334
      %p337 = scmp.ne.s32.totalorder %s322, %s336
      %p338 = scmp.eq.s32.totalorder %s34, 0
      %p339 = por %p337, %p338
      %s341 = sadd.s32 %s340, 1
      %p344 = scmp.eq.s32.totalorder %s28, 1
      %p345 = scmp.ne.s32.totalorder %s340, %s342
      %p346 = scmp.eq.s32.totalorder %s28, 0
      %p347 = por %p345, %p346
      %p348 = scmp.ne.s32.totalorder %s340, %s342
      %p349 = scmp.eq.s32.totalorder %s33, 1
      %p350 = por %p348, %p349
      %p351 = scmp.ne.s32.totalorder %s342, %s343
      %p352 = scmp.eq.s32.totalorder %s33, 0
      %p353 = por %p351, %p352
      %p354 = scmp.ne.s32.totalorder %s342, %s343
      %p355 = scmp.eq.s32.totalorder %s34, 1
      %p356 = por %p354, %p355
      %p358 = scmp.ne.s32.totalorder %s343, %s357
      %p359 = scmp.eq.s32.totalorder %s34, 0
      %p360 = por %p358, %p359
      %s362 = sadd.s32 %s361, 1
      %p365 = scmp.eq.s32.totalorder %s28, 1
      %p366 = scmp.ne.s32.totalorder %s361, %s363
      %p367 = scmp.eq.s32.totalorder %s28, 0
      %p368 = por %p366, %p367
      %p369 = scmp.ne.s32.totalorder %s361, %s363
      %p370 = scmp.eq.s32.totalorder %s33, 1
      %p371 = por %p369, %p370
      %p372 = scmp.ne.s32.totalorder %s363, %s364
      %p373 = scmp.eq.s32.totalorder %s33, 0
      %p374 = por %p372, %p373
      %p375 = scmp.ne.s32.totalorder %s363, %s364
      %p376 = scmp.eq.s32.totalorder %s34, 1
      %p377 = por %p375, %p376
      %p379 = scmp.ne.s32.totalorder %s364, %s378
      %p380 = scmp.eq.s32.totalorder %s34, 0
      %p381 = por %p379, %p380
      %s383 = sadd.s32 %s382, 1
      %p386 = scmp.eq.s32.totalorder %s28, 1
      %p387 = scmp.ne.s32.totalorder %s382, %s384
      %p388 = scmp.eq.s32.totalorder %s28, 0
      %p389 = por %p387, %p388
      %p390 = scmp.ne.s32.totalorder %s382, %s384
      %p391 = scmp.eq.s32.totalorder %s33, 1
      %p392 = por %p390, %p391
      %p393 = scmp.ne.s32.totalorder %s384, %s385
      %p394 = scmp.eq.s32.totalorder %s33, 0
      %p395 = por %p393, %p394
      %p396 = scmp.ne.s32.totalorder %s384, %s385
      %p397 = scmp.eq.s32.totalorder %s34, 1
      %p398 = por %p396, %p397
      %p400 = scmp.ne.s32.totalorder %s385, %s399
      %p401 = scmp.eq.s32.totalorder %s34, 0
      %p402 = por %p400, %p401
      %s404 = sadd.s32 %s403, 1
      %p407 = scmp.eq.s32.totalorder %s28, 1
      %p408 = scmp.ne.s32.totalorder %s403, %s405
      %p409 = scmp.eq.s32.totalorder %s28, 0
      %p410 = por %p408, %p409
      %p411 = scmp.ne.s32.totalorder %s403, %s405
      %p412 = scmp.eq.s32.totalorder %s33, 1
      %p413 = por %p411, %p412
      %p414 = scmp.ne.s32.totalorder %s405, %s406
      %p415 = scmp.eq.s32.totalorder %s33, 0
      %p416 = por %p414, %p415
      %p417 = scmp.ne.s32.totalorder %s405, %s406
      %p418 = scmp.eq.s32.totalorder %s34, 1
      %p419 = por %p417, %p418
      %p421 = scmp.ne.s32.totalorder %s406, %s420
      %p422 = scmp.eq.s32.totalorder %s34, 0
      %p423 = por %p421, %p422
      %s425 = sadd.s32 %s424, 1
      %p428 = scmp.eq.s32.totalorder %s28, 1
      %p429 = scmp.ne.s32.totalorder %s424, %s426
      %p430 = scmp.eq.s32.totalorder %s28, 0
      %p431 = por %p429, %p430
      %p432 = scmp.ne.s32.totalorder %s424, %s426
      %p433 = scmp.eq.s32.totalorder %s33, 1
      %p434 = por %p432, %p433
      %p435 = scmp.ne.s32.totalorder %s426, %s427
      %p436 = scmp.eq.s32.totalorder %s33, 0
      %p437 = por %p435, %p436
      %p438 = scmp.ne.s32.totalorder %s426, %s427
      %p439 = scmp.eq.s32.totalorder %s34, 1
      %p440 = por %p438, %p439
      %p442 = scmp.ne.s32.totalorder %s427, %s441
      %p443 = scmp.eq.s32.totalorder %s34, 0
      %p444 = por %p442, %p443
      %s445 = ssub.s32 %s28, %s35
      %p446 = scmp.eq.s32.totalorder %s445, 0
      %s448 = sadd.s32 %s447, 1
      %s449 = scalar_select %p446, %s447, %s448
      %p452 = pneg %p446
      %p453 = scmp.eq.s32.totalorder %s28, 1
      %p454 = por %p452, %p453
      %p455 = scmp.ne.s32.totalorder %s447, %s450
      %p456 = scmp.eq.s32.totalorder %s28, 0
      %p457 = por %p455, %p456
      %p458 = scmp.ne.s32.totalorder %s447, %s450
      %p459 = scmp.eq.s32.totalorder %s33, 1
      %p460 = por %p458, %p459
      %p461 = scmp.ne.s32.totalorder %s450, %s451
      %p462 = scmp.eq.s32.totalorder %s33, 0
      %p463 = por %p461, %p462
      %p464 = scmp.ne.s32.totalorder %s450, %s451
      %p465 = scmp.eq.s32.totalorder %s34, 1
      %p466 = por %p464, %p465
      %p468 = scmp.ne.s32.totalorder %s451, %s467
      %p469 = scmp.eq.s32.totalorder %s34, 0
      %p470 = por %p468, %p469
      %p471 = scmp.le.s32.totalorder 1, %s28
      %p472 = scmp.lt.s32.totalorder %s28, 3
      %p473 = pnand %p471, %p472
      %p474 = pneg %p473
      // Predicated region
      $region9: #{_lambda_.7} parent=5 // pred_check
        _
      $region10: #{_lambda_.7} parent=5 // pred_check_branch
        %476 = sbr.rel (%p473) target = $region12
      $region11: #{_lambda_.7} parent=5 // pred_region
        %s477 = ssub.s32 %s28, 1
        // Predicated region
        $region13: #{_lambda_.7} parent=11 // pred_check
          %p478 = pneg %p101
        $region14: #{_lambda_.7} parent=11 // pred_check_branch
          %480 = sbr.rel (%p478) target = $region16
        $region15: #{_lambda_.7} parent=11 // pred_region
          _
        $region16: #{_lambda_.7} parent=11 // pred_fallthru
          _
        // Predicated region
        $region17: #{_lambda_.7} parent=11 // pred_check
          %p481 = pneg %p122
        $region18: #{_lambda_.7} parent=11 // pred_check_branch
          %483 = sbr.rel (%p481) target = $region20
        $region19: #{_lambda_.7} parent=11 // pred_region
          %485 = vsyncadd [#allocation3], 0
          %s486 = sshll.u32 %s3, 4
          %s487 = int_to_ptr.hbm [resolvable:$true] %s486
          %s488 = sshll.u32 [#allocation2], 4
          %s489 = int_to_ptr.vmem [resolvable:$true] %s488
          %494 = dma.hbm_to_vmem [thread:$0]  %s487, 6144, %s489, [#allocation3], 384, 384, 24
        $region20: #{_lambda_.7} parent=11 // pred_fallthru
          _
        // Predicated region
        $region21: #{_lambda_.7} parent=11 // pred_check
          %p495 = pneg %p143
        $region22: #{_lambda_.7} parent=11 // pred_check_branch
          %497 = sbr.rel (%p495) target = $region24
        $region23: #{_lambda_.7} parent=11 // pred_region
          _
        $region24: #{_lambda_.7} parent=11 // pred_fallthru
          _
        // Predicated region
        $region25: #{_lambda_.7} parent=11 // pred_check
          %p498 = pneg %p164
        $region26: #{_lambda_.7} parent=11 // pred_check_branch
          %500 = sbr.rel (%p498) target = $region28
        $region27: #{_lambda_.7} parent=11 // pred_region
          %502 = vsyncadd [#allocation5], 0
          %s503 = sshll.u32 %s5, 4
          %s504 = int_to_ptr.hbm [resolvable:$true] %s503
          %s505 = sshll.u32 [#allocation4], 4
          %s506 = int_to_ptr.vmem [resolvable:$true] %s505
          %511 = dma.hbm_to_vmem [thread:$0]  %s504, 2048, %s506, [#allocation5], 128, 128, 8
        $region28: #{_lambda_.7} parent=11 // pred_fallthru
          _
        // Predicated region
        $region29: #{_lambda_.7} parent=11 // pred_check
          %p512 = pneg %p185
        $region30: #{_lambda_.7} parent=11 // pred_check_branch
          %514 = sbr.rel (%p512) target = $region32
        $region31: #{_lambda_.7} parent=11 // pred_region
          _
        $region32: #{_lambda_.7} parent=11 // pred_fallthru
          _
        // Predicated region
        $region33: #{_lambda_.7} parent=11 // pred_check
          %p515 = pneg %p206
        $region34: #{_lambda_.7} parent=11 // pred_check_branch
          %517 = sbr.rel (%p515) target = $region36
        $region35: #{_lambda_.7} parent=11 // pred_region
          %519 = vsyncadd [#allocation5], 0
          %s520 = sshll.u32 %s7, 4
          %s521 = int_to_ptr.hbm [resolvable:$true] %s520
          %s522 = sshll.u32 [#allocation6], 4
          %s523 = int_to_ptr.vmem [resolvable:$true] %s522
          %528 = dma.hbm_to_vmem [thread:$0]  %s521, 2048, %s523, [#allocation5], 128, 128, 8
        $region36: #{_lambda_.7} parent=11 // pred_fallthru
          _
        // Predicated region
        $region37: #{_lambda_.7} parent=11 // pred_check
          %p529 = pneg %p227
        $region38: #{_lambda_.7} parent=11 // pred_check_branch
          %531 = sbr.rel (%p529) target = $region40
        $region39: #{_lambda_.7} parent=11 // pred_region
          _
        $region40: #{_lambda_.7} parent=11 // pred_fallthru
          _
        // Predicated region
        $region41: #{_lambda_.7} parent=11 // pred_check
          %p532 = pneg %p248
        $region42: #{_lambda_.7} parent=11 // pred_check_branch
          %534 = sbr.rel (%p532) target = $region44
        $region43: #{_lambda_.7} parent=11 // pred_region
          %536 = vsyncadd [#allocation8], 0
          %s537 = sshll.u32 %s9, 4
          %s538 = int_to_ptr.hbm [resolvable:$true] %s537
          %s539 = sshll.u32 [#allocation7], 4
          %s540 = int_to_ptr.vmem [resolvable:$true] %s539
          %545 = dma.hbm_to_vmem [thread:$0]  %s538, 4096, %s540, [#allocation8], 256, 256, 16
        $region44: #{_lambda_.7} parent=11 // pred_fallthru
          _
        // Predicated region
        $region45: #{_lambda_.7} parent=11 // pred_check
          %p546 = pneg %p269
        $region46: #{_lambda_.7} parent=11 // pred_check_branch
          %548 = sbr.rel (%p546) target = $region48
        $region47: #{_lambda_.7} parent=11 // pred_region
          _
        $region48: #{_lambda_.7} parent=11 // pred_fallthru
          _
        // Predicated region
        $region49: #{_lambda_.7} parent=11 // pred_check
          %p549 = pneg %p290
        $region50: #{_lambda_.7} parent=11 // pred_check_branch
          %551 = sbr.rel (%p549) target = $region52
        $region51: #{_lambda_.7} parent=11 // pred_region
          %553 = vsyncadd [#allocation8], 0
          %s554 = sshll.u32 %s11, 4
          %s555 = int_to_ptr.hbm [resolvable:$true] %s554
          %s556 = sshll.u32 [#allocation9], 4
          %s557 = int_to_ptr.vmem [resolvable:$true] %s556
          %562 = dma.hbm_to_vmem [thread:$0]  %s555, 2048, %s557, [#allocation8], 128, 128, 8
        $region52: #{_lambda_.7} parent=11 // pred_fallthru
          _
        // Predicated region
        $region53: #{_lambda_.7} parent=11 // pred_check
          %p563 = pneg %p311
        $region54: #{_lambda_.7} parent=11 // pred_check_branch
          %565 = sbr.rel (%p563) target = $region56
        $region55: #{_lambda_.7} parent=11 // pred_region
          _
        $region56: #{_lambda_.7} parent=11 // pred_fallthru
          _
        // Predicated region
        $region57: #{_lambda_.7} parent=11 // pred_check
          %p566 = pneg %p332
        $region58: #{_lambda_.7} parent=11 // pred_check_branch
          %568 = sbr.rel (%p566) target = $region60
        $region59: #{_lambda_.7} parent=11 // pred_region
          _
        $region60: #{_lambda_.7} parent=11 // pred_fallthru
          _
        // Predicated region
        $region61: #{_lambda_.7} parent=11 // pred_check
          %p569 = pneg %p353
        $region62: #{_lambda_.7} parent=11 // pred_check_branch
          %571 = sbr.rel (%p569) target = $region64
        $region63: #{_lambda_.7} parent=11 // pred_region
          _
        $region64: #{_lambda_.7} parent=11 // pred_fallthru
          _
        // Predicated region
        $region65: #{_lambda_.7} parent=11 // pred_check
          %p572 = pneg %p374
        $region66: #{_lambda_.7} parent=11 // pred_check_branch
          %574 = sbr.rel (%p572) target = $region68
        $region67: #{_lambda_.7} parent=11 // pred_region
          _
        $region68: #{_lambda_.7} parent=11 // pred_fallthru
          _
        // Predicated region
        $region69: #{_lambda_.7} parent=11 // pred_check
          %p575 = pneg %p395
        $region70: #{_lambda_.7} parent=11 // pred_check_branch
          %577 = sbr.rel (%p575) target = $region72
        $region71: #{_lambda_.7} parent=11 // pred_region
          _
        $region72: #{_lambda_.7} parent=11 // pred_fallthru
          _
        // Predicated region
        $region73: #{_lambda_.7} parent=11 // pred_check
          %p578 = pneg %p416
        $region74: #{_lambda_.7} parent=11 // pred_check_branch
          %580 = sbr.rel (%p578) target = $region76
        $region75: #{_lambda_.7} parent=11 // pred_region
          _
        $region76: #{_lambda_.7} parent=11 // pred_fallthru
          _
        // Predicated region
        $region77: #{_lambda_.7} parent=11 // pred_check
          %p581 = pneg %p437
        $region78: #{_lambda_.7} parent=11 // pred_check_branch
          %583 = sbr.rel (%p581) target = $region80
        $region79: #{_lambda_.7} parent=11 // pred_region
          _
        $region80: #{_lambda_.7} parent=11 // pred_fallthru
          _
      $region12: #{_lambda_.7} parent=5 // pred_fallthru
        _
      %p584 = scmp.lt.s32.totalorder %s28, 2
      // Predicated region
      $region81: #{_lambda_.7} parent=5 // pred_check
        %p585 = pneg %p584
      $region82: #{_lambda_.7} parent=5 // pred_check_branch
        %587 = sbr.rel (%p585) target = $region84
      $region83: #{_lambda_.7} parent=5 // pred_region
        // Predicated region
        $region85: #{_lambda_.7} parent=83 // pred_check
          %p588 = pneg %p48
        $region86: #{_lambda_.7} parent=83 // pred_check_branch
          %590 = sbr.rel (%p588) target = $region88
        $region87: #{_lambda_.7} parent=83 // pred_region
          %p591 = scmp.lt.s32.totalorder %s28, 1
          %s592 = scalar_select %p591, %s28, 1
          %s593 = smul.addr %s592, 8
          %s594 = scalar_lea.vmem %s0, %s593
        $region88: #{_lambda_.7} parent=83 // pred_fallthru
          _
        // Predicated region
        $region89: #{_lambda_.7} parent=83 // pred_check
          %p595 = pneg %p74
        $region90: #{_lambda_.7} parent=83 // pred_check_branch
          %597 = sbr.rel (%p595) target = $region92
        $region91: #{_lambda_.7} parent=83 // pred_region
          %p598 = scmp.lt.s32.totalorder %s28, 1
          %s599 = scalar_select %p598, %s28, 1
          %s600 = smul.addr %s599, 8
          %s601 = scalar_lea.vmem %s1, %s600
        $region92: #{_lambda_.7} parent=83 // pred_fallthru
          _
      $region84: #{_lambda_.7} parent=5 // pred_fallthru
        _
      %p602 = scmp.le.s32.totalorder 1, %s28
      %p603 = scmp.lt.s32.totalorder %s28, 3
      %p604 = pnand %p602, %p603
      %p605 = pneg %p604
      // Predicated region
      $region93: #{_lambda_.7} parent=5 // pred_check
        _
      $region94: #{_lambda_.7} parent=5 // pred_check_branch
        %607 = sbr.rel (%p604) target = $region96
      $region95: #{_lambda_.7} parent=5 // pred_region
        %s608 = ssub.s32 %s28, 1
        // Predicated region
        $region97: #{_lambda_.7} parent=95 // pred_check
          %p609 = pneg %p122
        $region98: #{_lambda_.7} parent=95 // pred_check_branch
          %611 = sbr.rel (%p609) target = $region100
        $region99: #{_lambda_.7} parent=95 // pred_region
          %613 = dma.done [#allocation3], 6144
        $region100: #{_lambda_.7} parent=95 // pred_fallthru
          _
        // Predicated region
        $region101: #{_lambda_.7} parent=95 // pred_check
          %p614 = pneg %p164
        $region102: #{_lambda_.7} parent=95 // pred_check_branch
          %616 = sbr.rel (%p614) target = $region104
        $region103: #{_lambda_.7} parent=95 // pred_region
          %618 = dma.done [#allocation5], 2048
        $region104: #{_lambda_.7} parent=95 // pred_fallthru
          _
        // Predicated region
        $region105: #{_lambda_.7} parent=95 // pred_check
          %p619 = pneg %p206
        $region106: #{_lambda_.7} parent=95 // pred_check_branch
          %621 = sbr.rel (%p619) target = $region108
        $region107: #{_lambda_.7} parent=95 // pred_region
          %623 = dma.done [#allocation5], 2048
        $region108: #{_lambda_.7} parent=95 // pred_fallthru
          _
        // Predicated region
        $region109: #{_lambda_.7} parent=95 // pred_check
          %p624 = pneg %p248
        $region110: #{_lambda_.7} parent=95 // pred_check_branch
          %626 = sbr.rel (%p624) target = $region112
        $region111: #{_lambda_.7} parent=95 // pred_region
          %628 = dma.done [#allocation8], 4096
        $region112: #{_lambda_.7} parent=95 // pred_fallthru
          _
        // Predicated region
        $region113: #{_lambda_.7} parent=95 // pred_check
          %p629 = pneg %p290
        $region114: #{_lambda_.7} parent=95 // pred_check_branch
          %631 = sbr.rel (%p629) target = $region116
        $region115: #{_lambda_.7} parent=95 // pred_region
          %633 = dma.done [#allocation8], 2048
        $region116: #{_lambda_.7} parent=95 // pred_fallthru
          _
        %p634 = scmp.lt.s32.totalorder %s33, 1
        %s635 = scalar_select %p634, %s33, 1
        %s636 = smul.addr %s635, 8
        %s637 = scalar_lea.vmem %s0, %s636
        %p638 = pneg %p54
        %p639 = pneg %p51
        %p640 = scmp.lt.s32.totalorder %s33, 1
        %s641 = scalar_select %p640, %s33, 1
        %s642 = smul.addr %s641, 8
        %s643 = scalar_lea.vmem %s1, %s642
        %p644 = pneg %p80
        %p645 = pneg %p77
        %p646 = pneg %p101
        %p647 = pneg %p98
        %p648 = pneg %p122
        %p649 = pneg %p119
        %p650 = pneg %p143
        %p651 = pneg %p140
        %p652 = pneg %p164
        %p653 = pneg %p161
        %p654 = pneg %p185
        %p655 = pneg %p182
        %p656 = pneg %p206
        %p657 = pneg %p203
        %p658 = pneg %p227
        %p659 = pneg %p224
        %p660 = pneg %p248
        %p661 = pneg %p245
        %p662 = pneg %p269
        %p663 = pneg %p266
        %p664 = pneg %p290
        %p665 = pneg %p287
        %p666 = pneg %p311
        %p667 = pneg %p308
        %p668 = pneg %p332
        %p669 = pneg %p329
        %p670 = pneg %p353
        %p671 = pneg %p350
        %p672 = pneg %p374
        %p673 = pneg %p371
        %p674 = pneg %p395
        %p675 = pneg %p392
        %p676 = pneg %p416
        %p677 = pneg %p413
        %p678 = pneg %p437
        %p679 = pneg %p434
        %p680 = pneg %p463
        %p681 = pneg %p460
        %p682 = scmp.lt.s32.totalorder %s33, 1
        %s683 = scalar_select %p682, %s33, 1
        %s684 = smul.addr %s683, 8
        %s685 = scalar_lea.vmem %s19, %s684
        %p686 = scmp.lt.s32.totalorder %s33, 1
        %s687 = scalar_select %p686, %s33, 1
        %s688 = smul.addr %s687, 8
        %s689 = scalar_lea.vmem %s0, %s688
        %p690 = scmp.lt.s32.totalorder %s33, 1
        %s691 = scalar_select %p690, %s33, 1
        %s692 = smul.addr %s691, 8
        %s693 = scalar_lea.vmem %s1, %s692
        %p694 = scmp.lt.s32.totalorder %s33, 1
        %s695 = scalar_select %p694, %s33, 1
        %s696 = smul.addr %s695, 8
        %s697 = scalar_lea.vmem %s19, %s696
        %v698 = vld [vmem:[%s689] sm:$0xff]
        %v699 = vld [vmem:[%s693] sm:$0xff]
        %v700 = vld [vmem:[%s2] sm:$0xff]
        %v701 = vld [vmem:[%s13] sm:$0x1]
        %v702 = vld [vmem:[%s14] sm:$0x1]
        %v703 = vlaneseq
        %v704 = vand.u32 %v703, 127
        %v705 = vld [vmem:[#allocation2] sm:$0xff]
        %v706 = vld [vmem:[#allocation2 + $0x8] sm:$0xff]
        %v707 = vld [vmem:[#allocation2 + $0x10] sm:$0xff]
        %v708 = vld [vmem:[#allocation2 + $0x18] sm:$0xff]
        %v709 = vld [vmem:[#allocation2 + $0x20] sm:$0xff]
        %v710 = vld [vmem:[#allocation2 + $0x28] sm:$0xff]
        %v711 = vld [vmem:[#allocation2 + $0x30] sm:$0xff]
        %v712 = vld [vmem:[#allocation2 + $0x38] sm:$0xff]
        %v713 = vld [vmem:[#allocation2 + $0x40] sm:$0xff]
        %v714 = vld [vmem:[#allocation2 + $0x48] sm:$0xff]
        %v715 = vld [vmem:[#allocation2 + $0x50] sm:$0xff]
        %v716 = vld [vmem:[#allocation2 + $0x58] sm:$0xff]
        %v717 = vld [vmem:[#allocation2 + $0x60] sm:$0xff]
        %v718 = vld [vmem:[#allocation2 + $0x68] sm:$0xff]
        %v719 = vld [vmem:[#allocation2 + $0x70] sm:$0xff]
        %v720 = vld [vmem:[#allocation2 + $0x78] sm:$0xff]
        %v721 = vld [vmem:[#allocation2 + $0x80] sm:$0xff]
        %v722 = vld [vmem:[#allocation2 + $0x88] sm:$0xff]
        %v723 = vld [vmem:[#allocation2 + $0x90] sm:$0xff]
        %v724 = vld [vmem:[#allocation2 + $0x98] sm:$0xff]
        %v725 = vld [vmem:[#allocation2 + $0xa0] sm:$0xff]
        %v726 = vld [vmem:[#allocation2 + $0xa8] sm:$0xff]
        %v727 = vld [vmem:[#allocation2 + $0xb0] sm:$0xff]
        %v728 = vld [vmem:[#allocation2 + $0xb8] sm:$0xff]
        %v729 = vld [vmem:[#allocation2 + $0xc0] sm:$0xff]
        %v730 = vld [vmem:[#allocation2 + $0xc8] sm:$0xff]
        %v731 = vld [vmem:[#allocation2 + $0xd0] sm:$0xff]
        %v732 = vld [vmem:[#allocation2 + $0xd8] sm:$0xff]
        %v733 = vld [vmem:[#allocation2 + $0xe0] sm:$0xff]
        %v734 = vld [vmem:[#allocation2 + $0xe8] sm:$0xff]
        %v735 = vld [vmem:[#allocation2 + $0xf0] sm:$0xff]
        %v736 = vld [vmem:[#allocation2 + $0xf8] sm:$0xff]
        %v737 = vld [vmem:[#allocation2 + $0x100] sm:$0xff]
        %v738 = vld [vmem:[#allocation2 + $0x108] sm:$0xff]
        %v739 = vld [vmem:[#allocation2 + $0x110] sm:$0xff]
        %v740 = vld [vmem:[#allocation2 + $0x118] sm:$0xff]
        %v741 = vld [vmem:[#allocation2 + $0x120] sm:$0xff]
        %v742 = vld [vmem:[#allocation2 + $0x128] sm:$0xff]
        %v743 = vld [vmem:[#allocation2 + $0x130] sm:$0xff]
        %v744 = vld [vmem:[#allocation2 + $0x138] sm:$0xff]
        %v745 = vld [vmem:[#allocation2 + $0x140] sm:$0xff]
        %v746 = vld [vmem:[#allocation2 + $0x148] sm:$0xff]
        %v747 = vld [vmem:[#allocation2 + $0x150] sm:$0xff]
        %v748 = vld [vmem:[#allocation2 + $0x158] sm:$0xff]
        %v749 = vld [vmem:[#allocation2 + $0x160] sm:$0xff]
        %v750 = vld [vmem:[#allocation2 + $0x168] sm:$0xff]
        %v751 = vld [vmem:[#allocation2 + $0x170] sm:$0xff]
        %v752 = vld [vmem:[#allocation2 + $0x178] sm:$0xff]
        %v753 = vld [vmem:[%s4] sm:$0x7]
        %v755 = vperm.slane %v753, 0
        %v756 = vperm.slane %v753, 1
        %v757 = vperm.slane %v753, 2
        %761 = vmatpush.msra.mxu0 %v750
        %762 = vmatpush.msra.mxu0 %v747
        %763 = vmatpush.msra.mxu0 %v744
        %764 = vmatpush.msra.mxu0 %v741
        %765 = vmatpush.msra.mxu0 %v738
        %766 = vmatpush.msra.mxu0 %v735
        %767 = vmatpush.msra.mxu0 %v732
        %768 = vmatpush.msra.mxu0 %v729
        %769 = vmatpush.msra.mxu0 %v726
        %770 = vmatpush.msra.mxu0 %v723
        %771 = vmatpush.msra.mxu0 %v720
        %772 = vmatpush.msra.mxu0 %v717
        %773 = vmatpush.msra.mxu0 %v714
        %774 = vmatpush.msra.mxu0 %v711
        %775 = vmatpush.msra.mxu0 %v708
        %776 = vmatpush.msra.mxu0 %v705
        %777 = vmatmul.f32.gmra.mxu0 %v698
        %v778 = vpop.f32.mrf.mxu0
        %v779 = vadd.f32 %v755, %v778
        %780 = vdwg.mxu0
        %781 = vmatpush.msra.mxu0 %v751
        %782 = vmatpush.msra.mxu0 %v748
        %783 = vmatpush.msra.mxu0 %v745
        %784 = vmatpush.msra.mxu0 %v742
        %785 = vmatpush.msra.mxu0 %v739
        %786 = vmatpush.msra.mxu0 %v736
        %787 = vmatpush.msra.mxu0 %v733
        %788 = vmatpush.msra.mxu0 %v730
        %789 = vmatpush.msra.mxu0 %v727
        %790 = vmatpush.msra.mxu0 %v724
        %791 = vmatpush.msra.mxu0 %v721
        %792 = vmatpush.msra.mxu0 %v718
        %793 = vmatpush.msra.mxu0 %v715
        %794 = vmatpush.msra.mxu0 %v712
        %795 = vmatpush.msra.mxu0 %v709
        %796 = vmatpush.msra.mxu0 %v706
        %797 = vmatmul.f32.gmra.mxu0 %v698
        %v798 = vpop.f32.mrf.mxu0
        %v799 = vadd.f32 %v756, %v798
        %800 = vdwg.mxu0
        %801 = vmatpush.msra.mxu0 %v752
        %802 = vmatpush.msra.mxu0 %v749
        %803 = vmatpush.msra.mxu0 %v746
        %804 = vmatpush.msra.mxu0 %v743
        %805 = vmatpush.msra.mxu0 %v740
        %806 = vmatpush.msra.mxu0 %v737
        %807 = vmatpush.msra.mxu0 %v734
        %808 = vmatpush.msra.mxu0 %v731
        %809 = vmatpush.msra.mxu0 %v728
        %810 = vmatpush.msra.mxu0 %v725
        %811 = vmatpush.msra.mxu0 %v722
        %812 = vmatpush.msra.mxu0 %v719
        %813 = vmatpush.msra.mxu0 %v716
        %814 = vmatpush.msra.mxu0 %v713
        %815 = vmatpush.msra.mxu0 %v710
        %816 = vmatpush.msra.mxu0 %v707
        %817 = vmatmul.f32.gmra.mxu0 %v698
        %v818 = vpop.f32.mrf.mxu0
        %v819 = vadd.f32 %v757, %v818
        %820 = vdwg.mxu0
        %vm821 = vcmp.ge.s32.totalorder %v704, 0
        %vm822 = vcmp.lt.s32.totalorder %v704, 32
        %vm823 = vmand %vm821, %vm822
        %v824 = vsel %vm823, 1, 0
        %vm825 = vcmp.eq.s32.totalorder %v824, 1
        %v826 = vsel %vm825, %v799, 0.0
        %v827 = vsel %vm825, %v819, 0.0
        %828 = vmatpush.xpose.msra.mxu0 0.0
        %829 = vmatpush.xpose.msra.mxu0 0.0
        %830 = vmatpush.xpose.msra.mxu0 0.0
        %831 = vmatpush.xpose.msra.mxu0 0.0
        %832 = vmatpush.xpose.msra.mxu0 0.0
        %833 = vmatpush.xpose.msra.mxu0 0.0
        %834 = vmatpush.xpose.msra.mxu0 0.0
        %835 = vmatpush.xpose.msra.mxu0 0.0
        %836 = vmatpush.xpose.msra.mxu0 0.0
        %837 = vmatpush.xpose.msra.mxu0 0.0
        %838 = vmatpush.xpose.msra.mxu0 0.0
        %839 = vmatpush.xpose.msra.mxu0 0.0
        %840 = vmatpush.xpose.msra.mxu0 0.0
        %841 = vmatpush.xpose.msra.mxu0 0.0
        %842 = vmatpush.xpose.msra.mxu0 0.0
        %843 = vmatpush.xpose.msra.mxu0 %v826
        %844 = vmatmul.f32.gmra.mxu0 %v779
        %v845 = vpop.f32.mrf.mxu0
        %v846 = vadd.f32 0.0, %v845
        %847 = vdwg.mxu0
        %v848 = vmul.f32 %v846, 0.17677669
        %v849 = vadd.f32 %v848, %v700
        %vm850 = vcmask 64512
        %v851 = vsel %vm850, %v849, -inf
        %852 = vmax.xlane.f32.xlu0 %v851
        %v853 = vpop.xlane.xlu0 %852
        %v854 = vsub.f32 %v849, %v853
        %v855 = vmul.f32 %v854, 1.442695
        %v856 = vpow.pop %v855
        %v857 = vsel %vm850, %v856, 0.0
        %858 = vadd.xlane.f32.xlu0 %v857
        %v859 = vpop.xlane.xlu0 %858
        %v860 = vrcp.pop %v859
        %v861 = vmul.f32 %v856, %v860
        %vm862 = vcmp.ge.s32.totalorder %v704, 32
        %vm863 = vcmp.lt.s32.totalorder %v704, 64
        %vm864 = vmand %vm862, %vm863
        %v865 = vsel %vm864, 1, 0
        %vm866 = vcmp.eq.s32.totalorder %v865, 1
        %v867 = vsel %vm866, %v799, 0.0
        %v868 = vsel %vm866, %v819, 0.0
        %869 = vmatpush.xpose.msra.mxu0 0.0
        %870 = vmatpush.xpose.msra.mxu0 0.0
        %871 = vmatpush.xpose.msra.mxu0 0.0
        %872 = vmatpush.xpose.msra.mxu0 0.0
        %873 = vmatpush.xpose.msra.mxu0 0.0
        %874 = vmatpush.xpose.msra.mxu0 0.0
        %875 = vmatpush.xpose.msra.mxu0 0.0
        %876 = vmatpush.xpose.msra.mxu0 0.0
        %877 = vmatpush.xpose.msra.mxu0 0.0
        %878 = vmatpush.xpose.msra.mxu0 0.0
        %879 = vmatpush.xpose.msra.mxu0 0.0
        %880 = vmatpush.xpose.msra.mxu0 0.0
        %881 = vmatpush.xpose.msra.mxu0 0.0
        %882 = vmatpush.xpose.msra.mxu0 0.0
        %883 = vmatpush.xpose.msra.mxu0 0.0
        %884 = vmatpush.xpose.msra.mxu0 %v867
        %885 = vmatmul.f32.gmra.mxu0 %v779
        %v886 = vpop.f32.mrf.mxu0
        %v887 = vadd.f32 0.0, %v886
        %888 = vdwg.mxu0
        %v889 = vmul.f32 %v887, 0.17677669
        %v890 = vadd.f32 %v889, %v700
        %v891 = vsel %vm850, %v890, -inf
        %892 = vmax.xlane.f32.xlu0 %v891
        %v893 = vpop.xlane.xlu0 %892
        %v894 = vsub.f32 %v890, %v893
        %v895 = vmul.f32 %v894, 1.442695
        %v896 = vpow.pop %v895
        %v897 = vsel %vm850, %v896, 0.0
        %898 = vadd.xlane.f32.xlu0 %v897
        %v899 = vpop.xlane.xlu0 %898
        %v900 = vrcp.pop %v899
        %v901 = vmul.f32 %v896, %v900
        %v903 = vsel %vm850, %v901, 0
        %905 = vmatpush.msra.mxu0 0.0
        %906 = vmatpush.msra.mxu0 0.0
        %907 = vmatpush.msra.mxu0 0.0
        %908 = vmatpush.msra.mxu0 0.0
        %909 = vmatpush.msra.mxu0 0.0
        %910 = vmatpush.msra.mxu0 0.0
        %911 = vmatpush.msra.mxu0 0.0
        %912 = vmatpush.msra.mxu0 0.0
        %913 = vmatpush.msra.mxu0 0.0
        %914 = vmatpush.msra.mxu0 0.0
        %915 = vmatpush.msra.mxu0 0.0
        %916 = vmatpush.msra.mxu0 0.0
        %917 = vmatpush.msra.mxu0 0.0
        %918 = vmatpush.msra.mxu0 0.0
        %919 = vmatpush.msra.mxu0 0.0
        %920 = vmatpush.msra.mxu0 %v868
        %921 = vmatmul.f32.gmra.mxu0 %v903
        %v922 = vpop.f32.mrf.mxu0
        %v923 = vadd.f32 0.0, %v922
        %924 = vdwg.mxu0
        %v926 = vsel %vm850, %v861, 0
        %928 = vmatpush.msra.mxu0 0.0
        %929 = vmatpush.msra.mxu0 0.0
        %930 = vmatpush.msra.mxu0 0.0
        %931 = vmatpush.msra.mxu0 0.0
        %932 = vmatpush.msra.mxu0 0.0
        %933 = vmatpush.msra.mxu0 0.0
        %934 = vmatpush.msra.mxu0 0.0
        %935 = vmatpush.msra.mxu0 0.0
        %936 = vmatpush.msra.mxu0 0.0
        %937 = vmatpush.msra.mxu0 0.0
        %938 = vmatpush.msra.mxu0 0.0
        %939 = vmatpush.msra.mxu0 0.0
        %940 = vmatpush.msra.mxu0 0.0
        %941 = vmatpush.msra.mxu0 0.0
        %942 = vmatpush.msra.mxu0 0.0
        %943 = vmatpush.msra.mxu0 %v827
        %944 = vmatmul.f32.gmra.mxu0 %v926
        %v945 = vpop.f32.mrf.mxu0
        %v946 = vadd.f32 %v923, %v945
        %947 = vdwg.mxu0
        %vm948 = vcmp.ge.s32.totalorder %v704, 64
        %vm949 = vcmp.lt.s32.totalorder %v704, 96
        %vm950 = vmand %vm948, %vm949
        %v951 = vsel %vm950, 1, 0
        %vm952 = vcmp.eq.s32.totalorder %v951, 1
        %v953 = vsel %vm952, %v799, 0.0
        %v954 = vsel %vm952, %v819, 0.0
        %955 = vmatpush.xpose.msra.mxu0 0.0
        %956 = vmatpush.xpose.msra.mxu0 0.0
        %957 = vmatpush.xpose.msra.mxu0 0.0
        %958 = vmatpush.xpose.msra.mxu0 0.0
        %959 = vmatpush.xpose.msra.mxu0 0.0
        %960 = vmatpush.xpose.msra.mxu0 0.0
        %961 = vmatpush.xpose.msra.mxu0 0.0
        %962 = vmatpush.xpose.msra.mxu0 0.0
        %963 = vmatpush.xpose.msra.mxu0 0.0
        %964 = vmatpush.xpose.msra.mxu0 0.0
        %965 = vmatpush.xpose.msra.mxu0 0.0
        %966 = vmatpush.xpose.msra.mxu0 0.0
        %967 = vmatpush.xpose.msra.mxu0 0.0
        %968 = vmatpush.xpose.msra.mxu0 0.0
        %969 = vmatpush.xpose.msra.mxu0 0.0
        %970 = vmatpush.xpose.msra.mxu0 %v953
        %971 = vmatmul.f32.gmra.mxu0 %v779
        %v972 = vpop.f32.mrf.mxu0
        %v973 = vadd.f32 0.0, %v972
        %974 = vdwg.mxu0
        %v975 = vmul.f32 %v973, 0.17677669
        %v976 = vadd.f32 %v975, %v700
        %v977 = vsel %vm850, %v976, -inf
        %978 = vmax.xlane.f32.xlu0 %v977
        %v979 = vpop.xlane.xlu0 %978
        %v980 = vsub.f32 %v976, %v979
        %v981 = vmul.f32 %v980, 1.442695
        %v982 = vpow.pop %v981
        %v983 = vsel %vm850, %v982, 0.0
        %984 = vadd.xlane.f32.xlu0 %v983
        %v985 = vpop.xlane.xlu0 %984
        %v986 = vrcp.pop %v985
        %v987 = vmul.f32 %v982, %v986
        %v989 = vsel %vm850, %v987, 0
        %991 = vmatpush.msra.mxu0 0.0
        %992 = vmatpush.msra.mxu0 0.0
        %993 = vmatpush.msra.mxu0 0.0
        %994 = vmatpush.msra.mxu0 0.0
        %995 = vmatpush.msra.mxu0 0.0
        %996 = vmatpush.msra.mxu0 0.0
        %997 = vmatpush.msra.mxu0 0.0
        %998 = vmatpush.msra.mxu0 0.0
        %999 = vmatpush.msra.mxu0 0.0
        %1000 = vmatpush.msra.mxu0 0.0
        %1001 = vmatpush.msra.mxu0 0.0
        %1002 = vmatpush.msra.mxu0 0.0
        %1003 = vmatpush.msra.mxu0 0.0
        %1004 = vmatpush.msra.mxu0 0.0
        %1005 = vmatpush.msra.mxu0 0.0
        %1006 = vmatpush.msra.mxu0 %v954
        %1007 = vmatmul.f32.gmra.mxu0 %v989
        %v1008 = vpop.f32.mrf.mxu0
        %v1009 = vadd.f32 0.0, %v1008
        %1010 = vdwg.mxu0
        %v1011 = vadd.f32 %v946, %v1009
        %vm1012 = vcmp.ge.s32.totalorder %v704, 96
        %vm1013 = vcmp.lt.s32.totalorder %v704, 128
        %vm1014 = vmand %vm1012, %vm1013
        %v1015 = vsel %vm1014, 1, 0
        %vm1016 = vcmp.eq.s32.totalorder %v1015, 1
        %v1017 = vsel %vm1016, %v799, 0.0
        %v1018 = vsel %vm1016, %v819, 0.0
        %1019 = vmatpush.xpose.msra.mxu0 0.0
        %1020 = vmatpush.xpose.msra.mxu0 0.0
        %1021 = vmatpush.xpose.msra.mxu0 0.0
        %1022 = vmatpush.xpose.msra.mxu0 0.0
        %1023 = vmatpush.xpose.msra.mxu0 0.0
        %1024 = vmatpush.xpose.msra.mxu0 0.0
        %1025 = vmatpush.xpose.msra.mxu0 0.0
        %1026 = vmatpush.xpose.msra.mxu0 0.0
        %1027 = vmatpush.xpose.msra.mxu0 0.0
        %1028 = vmatpush.xpose.msra.mxu0 0.0
        %1029 = vmatpush.xpose.msra.mxu0 0.0
        %1030 = vmatpush.xpose.msra.mxu0 0.0
        %1031 = vmatpush.xpose.msra.mxu0 0.0
        %1032 = vmatpush.xpose.msra.mxu0 0.0
        %1033 = vmatpush.xpose.msra.mxu0 0.0
        %1034 = vmatpush.xpose.msra.mxu0 %v1017
        %1035 = vmatmul.f32.gmra.mxu0 %v779
        %v1036 = vpop.f32.mrf.mxu0
        %v1037 = vadd.f32 0.0, %v1036
        %1038 = vdwg.mxu0
        %v1039 = vmul.f32 %v1037, 0.17677669
        %v1040 = vadd.f32 %v1039, %v700
        %v1041 = vsel %vm850, %v1040, -inf
        %1042 = vmax.xlane.f32.xlu0 %v1041
        %v1043 = vpop.xlane.xlu0 %1042
        %v1044 = vsub.f32 %v1040, %v1043
        %v1045 = vmul.f32 %v1044, 1.442695
        %v1046 = vpow.pop %v1045
        %v1047 = vsel %vm850, %v1046, 0.0
        %1048 = vadd.xlane.f32.xlu0 %v1047
        %v1049 = vpop.xlane.xlu0 %1048
        %v1050 = vrcp.pop %v1049
        %v1051 = vmul.f32 %v1046, %v1050
        %v1053 = vsel %vm850, %v1051, 0
        %1055 = vmatpush.msra.mxu0 0.0
        %1056 = vmatpush.msra.mxu0 0.0
        %1057 = vmatpush.msra.mxu0 0.0
        %1058 = vmatpush.msra.mxu0 0.0
        %1059 = vmatpush.msra.mxu0 0.0
        %1060 = vmatpush.msra.mxu0 0.0
        %1061 = vmatpush.msra.mxu0 0.0
        %1062 = vmatpush.msra.mxu0 0.0
        %1063 = vmatpush.msra.mxu0 0.0
        %1064 = vmatpush.msra.mxu0 0.0
        %1065 = vmatpush.msra.mxu0 0.0
        %1066 = vmatpush.msra.mxu0 0.0
        %1067 = vmatpush.msra.mxu0 0.0
        %1068 = vmatpush.msra.mxu0 0.0
        %1069 = vmatpush.msra.mxu0 0.0
        %1070 = vmatpush.msra.mxu0 %v1018
        %1071 = vmatmul.f32.gmra.mxu0 %v1053
        %v1072 = vpop.f32.mrf.mxu0
        %v1073 = vadd.f32 0.0, %v1072
        %1074 = vdwg.mxu0
        %v1075 = vadd.f32 %v1011, %v1073
        %v1076 = vld [vmem:[#allocation4] sm:$0xff]
        %v1077 = vld [vmem:[#allocation4 + $0x8] sm:$0xff]
        %v1078 = vld [vmem:[#allocation4 + $0x10] sm:$0xff]
        %v1079 = vld [vmem:[#allocation4 + $0x18] sm:$0xff]
        %v1080 = vld [vmem:[#allocation4 + $0x20] sm:$0xff]
        %v1081 = vld [vmem:[#allocation4 + $0x28] sm:$0xff]
        %v1082 = vld [vmem:[#allocation4 + $0x30] sm:$0xff]
        %v1083 = vld [vmem:[#allocation4 + $0x38] sm:$0xff]
        %v1084 = vld [vmem:[#allocation4 + $0x40] sm:$0xff]
        %v1085 = vld [vmem:[#allocation4 + $0x48] sm:$0xff]
        %v1086 = vld [vmem:[#allocation4 + $0x50] sm:$0xff]
        %v1087 = vld [vmem:[#allocation4 + $0x58] sm:$0xff]
        %v1088 = vld [vmem:[#allocation4 + $0x60] sm:$0xff]
        %v1089 = vld [vmem:[#allocation4 + $0x68] sm:$0xff]
        %v1090 = vld [vmem:[#allocation4 + $0x70] sm:$0xff]
        %v1091 = vld [vmem:[#allocation4 + $0x78] sm:$0xff]
        %v1092 = vld [vmem:[%s6] sm:$0x1]
        %v1094 = vperm.slane %v1092, 0
        %1096 = vmatpush.msra.mxu0 %v1091
        %1097 = vmatpush.msra.mxu0 %v1090
        %1098 = vmatpush.msra.mxu0 %v1089
        %1099 = vmatpush.msra.mxu0 %v1088
        %1100 = vmatpush.msra.mxu0 %v1087
        %1101 = vmatpush.msra.mxu0 %v1086
        %1102 = vmatpush.msra.mxu0 %v1085
        %1103 = vmatpush.msra.mxu0 %v1084
        %1104 = vmatpush.msra.mxu0 %v1083
        %1105 = vmatpush.msra.mxu0 %v1082
        %1106 = vmatpush.msra.mxu0 %v1081
        %1107 = vmatpush.msra.mxu0 %v1080
        %1108 = vmatpush.msra.mxu0 %v1079
        %1109 = vmatpush.msra.mxu0 %v1078
        %1110 = vmatpush.msra.mxu0 %v1077
        %1111 = vmatpush.msra.mxu0 %v1076
        %1112 = vmatmul.f32.gmra.mxu0 %v1075
        %v1113 = vpop.f32.mrf.mxu0
        %v1114 = vadd.f32 %v1094, %v1113
        %1115 = vdwg.mxu0
        %v1116 = vadd.f32 %v698, %v1114
        %1117 = vadd.xlane.f32.xlu0 %v1116
        %v1118 = vpop.xlane.xlu0 %1117
        %v1119 = vrcp.pop 128.0
        %v1120 = vmul.f32 128.0, %v1119
        %v1121 = vsub.f32 1.0, %v1120
        %v1122 = vmul.f32 %v1119, %v1121
        %v1123 = vadd.f32 %v1119, %v1122
        %vm1124 = vweird.f32 %v1119
        %v1125 = vsel %vm1124, %v1119, %v1123
        %v1126 = vmul.f32 %v1118, %v1125
        %v1127 = vsub.f32 %v1116, %v1126
        %v1128 = vmul.f32 %v1127, %v1127
        %1129 = vadd.xlane.f32.xlu0 %v1128
        %v1130 = vpop.xlane.xlu0 %1129
        %v1131 = vmul.f32 %v1130, %v1125
        %v1132 = vadd.f32 %v1131, 1e-05
        %v1133 = vrsqrt.pop %v1132
        %v1134 = vmul.f32 %v1133, %v1132
        %v1135 = vmul.f32 %v1134, %v1133
        %v1136 = vmul.f32 0.5, %v1135
        %v1137 = vsub.f32 1.5, %v1136
        %v1138 = vmul.f32 %v1133, %v1137
        %vm1139 = vweird.f32 %v1132
        %vm1140 = vweird.f32 %v1133
        %vm1141 = vmor %vm1139, %vm1140
        %v1142 = vsel %vm1141, %v1133, %v1138
        %v1143 = vmul.f32 %v1127, %v1142
        %v1145 = vperm.slane %v701, 0
        %v1147 = vmul.f32 %v1143, %v1145
        %v1149 = vperm.slane %v702, 0
        %v1151 = vadd.f32 %v1147, %v1149
        %v1152 = vld [vmem:[#allocation6] sm:$0xff]
        %v1153 = vld [vmem:[#allocation6 + $0x8] sm:$0xff]
        %v1154 = vld [vmem:[#allocation6 + $0x10] sm:$0xff]
        %v1155 = vld [vmem:[#allocation6 + $0x18] sm:$0xff]
        %v1156 = vld [vmem:[#allocation6 + $0x20] sm:$0xff]
        %v1157 = vld [vmem:[#allocation6 + $0x28] sm:$0xff]
        %v1158 = vld [vmem:[#allocation6 + $0x30] sm:$0xff]
        %v1159 = vld [vmem:[#allocation6 + $0x38] sm:$0xff]
        %v1160 = vld [vmem:[#allocation6 + $0x40] sm:$0xff]
        %v1161 = vld [vmem:[#allocation6 + $0x48] sm:$0xff]
        %v1162 = vld [vmem:[#allocation6 + $0x50] sm:$0xff]
        %v1163 = vld [vmem:[#allocation6 + $0x58] sm:$0xff]
        %v1164 = vld [vmem:[#allocation6 + $0x60] sm:$0xff]
        %v1165 = vld [vmem:[#allocation6 + $0x68] sm:$0xff]
        %v1166 = vld [vmem:[#allocation6 + $0x70] sm:$0xff]
        %v1167 = vld [vmem:[#allocation6 + $0x78] sm:$0xff]
        %v1168 = vld [vmem:[%s8] sm:$0x1]
        %v1170 = vperm.slane %v1168, 0
        %1172 = vmatpush.msra.mxu0 %v1167
        %1173 = vmatpush.msra.mxu0 %v1166
        %1174 = vmatpush.msra.mxu0 %v1165
        %1175 = vmatpush.msra.mxu0 %v1164
        %1176 = vmatpush.msra.mxu0 %v1163
        %1177 = vmatpush.msra.mxu0 %v1162
        %1178 = vmatpush.msra.mxu0 %v1161
        %1179 = vmatpush.msra.mxu0 %v1160
        %1180 = vmatpush.msra.mxu0 %v1159
        %1181 = vmatpush.msra.mxu0 %v1158
        %1182 = vmatpush.msra.mxu0 %v1157
        %1183 = vmatpush.msra.mxu0 %v1156
        %1184 = vmatpush.msra.mxu0 %v1155
        %1185 = vmatpush.msra.mxu0 %v1154
        %1186 = vmatpush.msra.mxu0 %v1153
        %1187 = vmatpush.msra.mxu0 %v1152
        %1188 = vmatmul.f32.gmra.mxu0 %v1151
        %v1189 = vpop.f32.mrf.mxu0
        %v1190 = vadd.f32 %v1170, %v1189
        %1191 = vdwg.mxu0
        %v1192 = vld [vmem:[#allocation7] sm:$0xff]
        %v1193 = vld [vmem:[#allocation7 + $0x8] sm:$0xff]
        %v1194 = vld [vmem:[#allocation7 + $0x10] sm:$0xff]
        %v1195 = vld [vmem:[#allocation7 + $0x18] sm:$0xff]
        %v1196 = vld [vmem:[#allocation7 + $0x20] sm:$0xff]
        %v1197 = vld [vmem:[#allocation7 + $0x28] sm:$0xff]
        %v1198 = vld [vmem:[#allocation7 + $0x30] sm:$0xff]
        %v1199 = vld [vmem:[#allocation7 + $0x38] sm:$0xff]
        %v1200 = vld [vmem:[#allocation7 + $0x40] sm:$0xff]
        %v1201 = vld [vmem:[#allocation7 + $0x48] sm:$0xff]
        %v1202 = vld [vmem:[#allocation7 + $0x50] sm:$0xff]
        %v1203 = vld [vmem:[#allocation7 + $0x58] sm:$0xff]
        %v1204 = vld [vmem:[#allocation7 + $0x60] sm:$0xff]
        %v1205 = vld [vmem:[#allocation7 + $0x68] sm:$0xff]
        %v1206 = vld [vmem:[#allocation7 + $0x70] sm:$0xff]
        %v1207 = vld [vmem:[#allocation7 + $0x78] sm:$0xff]
        %v1208 = vld [vmem:[#allocation7 + $0x80] sm:$0xff]
        %v1209 = vld [vmem:[#allocation7 + $0x88] sm:$0xff]
        %v1210 = vld [vmem:[#allocation7 + $0x90] sm:$0xff]
        %v1211 = vld [vmem:[#allocation7 + $0x98] sm:$0xff]
        %v1212 = vld [vmem:[#allocation7 + $0xa0] sm:$0xff]
        %v1213 = vld [vmem:[#allocation7 + $0xa8] sm:$0xff]
        %v1214 = vld [vmem:[#allocation7 + $0xb0] sm:$0xff]
        %v1215 = vld [vmem:[#allocation7 + $0xb8] sm:$0xff]
        %v1216 = vld [vmem:[#allocation7 + $0xc0] sm:$0xff]
        %v1217 = vld [vmem:[#allocation7 + $0xc8] sm:$0xff]
        %v1218 = vld [vmem:[#allocation7 + $0xd0] sm:$0xff]
        %v1219 = vld [vmem:[#allocation7 + $0xd8] sm:$0xff]
        %v1220 = vld [vmem:[#allocation7 + $0xe0] sm:$0xff]
        %v1221 = vld [vmem:[#allocation7 + $0xe8] sm:$0xff]
        %v1222 = vld [vmem:[#allocation7 + $0xf0] sm:$0xff]
        %v1223 = vld [vmem:[#allocation7 + $0xf8] sm:$0xff]
        %v1224 = vld [vmem:[%s10] sm:$0x3]
        %v1226 = vperm.slane %v1224, 0
        %v1227 = vperm.slane %v1224, 1
        %1230 = vmatpush.msra.mxu0 %v1222
        %1231 = vmatpush.msra.mxu0 %v1220
        %1232 = vmatpush.msra.mxu0 %v1218
        %1233 = vmatpush.msra.mxu0 %v1216
        %1234 = vmatpush.msra.mxu0 %v1214
        %1235 = vmatpush.msra.mxu0 %v1212
        %1236 = vmatpush.msra.mxu0 %v1210
        %1237 = vmatpush.msra.mxu0 %v1208
        %1238 = vmatpush.msra.mxu0 %v1206
        %1239 = vmatpush.msra.mxu0 %v1204
        %1240 = vmatpush.msra.mxu0 %v1202
        %1241 = vmatpush.msra.mxu0 %v1200
        %1242 = vmatpush.msra.mxu0 %v1198
        %1243 = vmatpush.msra.mxu0 %v1196
        %1244 = vmatpush.msra.mxu0 %v1194
        %1245 = vmatpush.msra.mxu0 %v1192
        %1246 = vmatmul.f32.gmra.mxu0 %v699
        %v1247 = vpop.f32.mrf.mxu0
        %v1248 = vadd.f32 %v1226, %v1247
        %1249 = vdwg.mxu0
        %1250 = vmatpush.msra.mxu0 %v1223
        %1251 = vmatpush.msra.mxu0 %v1221
        %1252 = vmatpush.msra.mxu0 %v1219
        %1253 = vmatpush.msra.mxu0 %v1217
        %1254 = vmatpush.msra.mxu0 %v1215
        %1255 = vmatpush.msra.mxu0 %v1213
        %1256 = vmatpush.msra.mxu0 %v1211
        %1257 = vmatpush.msra.mxu0 %v1209
        %1258 = vmatpush.msra.mxu0 %v1207
        %1259 = vmatpush.msra.mxu0 %v1205
        %1260 = vmatpush.msra.mxu0 %v1203
        %1261 = vmatpush.msra.mxu0 %v1201
        %1262 = vmatpush.msra.mxu0 %v1199
        %1263 = vmatpush.msra.mxu0 %v1197
        %1264 = vmatpush.msra.mxu0 %v1195
        %1265 = vmatpush.msra.mxu0 %v1193
        %1266 = vmatmul.f32.gmra.mxu0 %v699
        %v1267 = vpop.f32.mrf.mxu0
        %v1268 = vadd.f32 %v1227, %v1267
        %1269 = vdwg.mxu0
        %v1270 = vsel %vm825, %v1248, 0.0
        %v1271 = vsel %vm825, %v1268, 0.0
        %1272 = vmatpush.xpose.msra.mxu0 0.0
        %1273 = vmatpush.xpose.msra.mxu0 0.0
        %1274 = vmatpush.xpose.msra.mxu0 0.0
        %1275 = vmatpush.xpose.msra.mxu0 0.0
        %1276 = vmatpush.xpose.msra.mxu0 0.0
        %1277 = vmatpush.xpose.msra.mxu0 0.0
        %1278 = vmatpush.xpose.msra.mxu0 0.0
        %1279 = vmatpush.xpose.msra.mxu0 0.0
        %1280 = vmatpush.xpose.msra.mxu0 0.0
        %1281 = vmatpush.xpose.msra.mxu0 0.0
        %1282 = vmatpush.xpose.msra.mxu0 0.0
        %1283 = vmatpush.xpose.msra.mxu0 0.0
        %1284 = vmatpush.xpose.msra.mxu0 0.0
        %1285 = vmatpush.xpose.msra.mxu0 0.0
        %1286 = vmatpush.xpose.msra.mxu0 0.0
        %1287 = vmatpush.xpose.msra.mxu0 %v1270
        %1288 = vmatmul.f32.gmra.mxu0 %v1190
        %v1289 = vpop.f32.mrf.mxu0
        %v1290 = vadd.f32 0.0, %v1289
        %1291 = vdwg.mxu0
        %v1292 = vmul.f32 %v1290, 0.17677669
        %v1293 = vsel %vm850, %v1292, -inf
        %1294 = vmax.xlane.f32.xlu0 %v1293
        %v1295 = vpop.xlane.xlu0 %1294
        %v1296 = vsub.f32 %v1292, %v1295
        %v1297 = vmul.f32 %v1296, 1.442695
        %v1298 = vpow.pop %v1297
        %v1299 = vsel %vm850, %v1298, 0.0
        %1300 = vadd.xlane.f32.xlu0 %v1299
        %v1301 = vpop.xlane.xlu0 %1300
        %v1302 = vrcp.pop %v1301
        %v1303 = vmul.f32 %v1298, %v1302
        %v1304 = vsel %vm866, %v1248, 0.0
        %v1305 = vsel %vm866, %v1268, 0.0
        %1306 = vmatpush.xpose.msra.mxu0 0.0
        %1307 = vmatpush.xpose.msra.mxu0 0.0
        %1308 = vmatpush.xpose.msra.mxu0 0.0
        %1309 = vmatpush.xpose.msra.mxu0 0.0
        %1310 = vmatpush.xpose.msra.mxu0 0.0
        %1311 = vmatpush.xpose.msra.mxu0 0.0
        %1312 = vmatpush.xpose.msra.mxu0 0.0
        %1313 = vmatpush.xpose.msra.mxu0 0.0
        %1314 = vmatpush.xpose.msra.mxu0 0.0
        %1315 = vmatpush.xpose.msra.mxu0 0.0
        %1316 = vmatpush.xpose.msra.mxu0 0.0
        %1317 = vmatpush.xpose.msra.mxu0 0.0
        %1318 = vmatpush.xpose.msra.mxu0 0.0
        %1319 = vmatpush.xpose.msra.mxu0 0.0
        %1320 = vmatpush.xpose.msra.mxu0 0.0
        %1321 = vmatpush.xpose.msra.mxu0 %v1304
        %1322 = vmatmul.f32.gmra.mxu0 %v1190
        %v1323 = vpop.f32.mrf.mxu0
        %v1324 = vadd.f32 0.0, %v1323
        %1325 = vdwg.mxu0
        %v1326 = vmul.f32 %v1324, 0.17677669
        %v1327 = vsel %vm850, %v1326, -inf
        %1328 = vmax.xlane.f32.xlu0 %v1327
        %v1329 = vpop.xlane.xlu0 %1328
        %v1330 = vsub.f32 %v1326, %v1329
        %v1331 = vmul.f32 %v1330, 1.442695
        %v1332 = vpow.pop %v1331
        %v1333 = vsel %vm850, %v1332, 0.0
        %1334 = vadd.xlane.f32.xlu0 %v1333
        %v1335 = vpop.xlane.xlu0 %1334
        %v1336 = vrcp.pop %v1335
        %v1337 = vmul.f32 %v1332, %v1336
        %v1339 = vsel %vm850, %v1337, 0
        %1341 = vmatpush.msra.mxu0 0.0
        %1342 = vmatpush.msra.mxu0 0.0
        %1343 = vmatpush.msra.mxu0 0.0
        %1344 = vmatpush.msra.mxu0 0.0
        %1345 = vmatpush.msra.mxu0 0.0
        %1346 = vmatpush.msra.mxu0 0.0
        %1347 = vmatpush.msra.mxu0 0.0
        %1348 = vmatpush.msra.mxu0 0.0
        %1349 = vmatpush.msra.mxu0 0.0
        %1350 = vmatpush.msra.mxu0 0.0
        %1351 = vmatpush.msra.mxu0 0.0
        %1352 = vmatpush.msra.mxu0 0.0
        %1353 = vmatpush.msra.mxu0 0.0
        %1354 = vmatpush.msra.mxu0 0.0
        %1355 = vmatpush.msra.mxu0 0.0
        %1356 = vmatpush.msra.mxu0 %v1305
        %1357 = vmatmul.f32.gmra.mxu0 %v1339
        %v1358 = vpop.f32.mrf.mxu0
        %v1359 = vadd.f32 0.0, %v1358
        %1360 = vdwg.mxu0
        %v1362 = vsel %vm850, %v1303, 0
        %1364 = vmatpush.msra.mxu0 0.0
        %1365 = vmatpush.msra.mxu0 0.0
        %1366 = vmatpush.msra.mxu0 0.0
        %1367 = vmatpush.msra.mxu0 0.0
        %1368 = vmatpush.msra.mxu0 0.0
        %1369 = vmatpush.msra.mxu0 0.0
        %1370 = vmatpush.msra.mxu0 0.0
        %1371 = vmatpush.msra.mxu0 0.0
        %1372 = vmatpush.msra.mxu0 0.0
        %1373 = vmatpush.msra.mxu0 0.0
        %1374 = vmatpush.msra.mxu0 0.0
        %1375 = vmatpush.msra.mxu0 0.0
        %1376 = vmatpush.msra.mxu0 0.0
        %1377 = vmatpush.msra.mxu0 0.0
        %1378 = vmatpush.msra.mxu0 0.0
        %1379 = vmatpush.msra.mxu0 %v1271
        %1380 = vmatmul.f32.gmra.mxu0 %v1362
        %v1381 = vpop.f32.mrf.mxu0
        %v1382 = vadd.f32 %v1359, %v1381
        %1383 = vdwg.mxu0
        %v1384 = vsel %vm952, %v1248, 0.0
        %v1385 = vsel %vm952, %v1268, 0.0
        %1386 = vmatpush.xpose.msra.mxu0 0.0
        %1387 = vmatpush.xpose.msra.mxu0 0.0
        %1388 = vmatpush.xpose.msra.mxu0 0.0
        %1389 = vmatpush.xpose.msra.mxu0 0.0
        %1390 = vmatpush.xpose.msra.mxu0 0.0
        %1391 = vmatpush.xpose.msra.mxu0 0.0
        %1392 = vmatpush.xpose.msra.mxu0 0.0
        %1393 = vmatpush.xpose.msra.mxu0 0.0
        %1394 = vmatpush.xpose.msra.mxu0 0.0
        %1395 = vmatpush.xpose.msra.mxu0 0.0
        %1396 = vmatpush.xpose.msra.mxu0 0.0
        %1397 = vmatpush.xpose.msra.mxu0 0.0
        %1398 = vmatpush.xpose.msra.mxu0 0.0
        %1399 = vmatpush.xpose.msra.mxu0 0.0
        %1400 = vmatpush.xpose.msra.mxu0 0.0
        %1401 = vmatpush.xpose.msra.mxu0 %v1384
        %1402 = vmatmul.f32.gmra.mxu0 %v1190
        %v1403 = vpop.f32.mrf.mxu0
        %v1404 = vadd.f32 0.0, %v1403
        %1405 = vdwg.mxu0
        %v1406 = vmul.f32 %v1404, 0.17677669
        %v1407 = vsel %vm850, %v1406, -inf
        %1408 = vmax.xlane.f32.xlu0 %v1407
        %v1409 = vpop.xlane.xlu0 %1408
        %v1410 = vsub.f32 %v1406, %v1409
        %v1411 = vmul.f32 %v1410, 1.442695
        %v1412 = vpow.pop %v1411
        %v1413 = vsel %vm850, %v1412, 0.0
        %1414 = vadd.xlane.f32.xlu0 %v1413
        %v1415 = vpop.xlane.xlu0 %1414
        %v1416 = vrcp.pop %v1415
        %v1417 = vmul.f32 %v1412, %v1416
        %v1419 = vsel %vm850, %v1417, 0
        %1421 = vmatpush.msra.mxu0 0.0
        %1422 = vmatpush.msra.mxu0 0.0
        %1423 = vmatpush.msra.mxu0 0.0
        %1424 = vmatpush.msra.mxu0 0.0
        %1425 = vmatpush.msra.mxu0 0.0
        %1426 = vmatpush.msra.mxu0 0.0
        %1427 = vmatpush.msra.mxu0 0.0
        %1428 = vmatpush.msra.mxu0 0.0
        %1429 = vmatpush.msra.mxu0 0.0
        %1430 = vmatpush.msra.mxu0 0.0
        %1431 = vmatpush.msra.mxu0 0.0
        %1432 = vmatpush.msra.mxu0 0.0
        %1433 = vmatpush.msra.mxu0 0.0
        %1434 = vmatpush.msra.mxu0 0.0
        %1435 = vmatpush.msra.mxu0 0.0
        %1436 = vmatpush.msra.mxu0 %v1385
        %1437 = vmatmul.f32.gmra.mxu0 %v1419
        %v1438 = vpop.f32.mrf.mxu0
        %v1439 = vadd.f32 0.0, %v1438
        %1440 = vdwg.mxu0
        %v1441 = vadd.f32 %v1382, %v1439
        %v1442 = vsel %vm1016, %v1248, 0.0
        %v1443 = vsel %vm1016, %v1268, 0.0
        %1444 = vmatpush.xpose.msra.mxu0 0.0
        %1445 = vmatpush.xpose.msra.mxu0 0.0
        %1446 = vmatpush.xpose.msra.mxu0 0.0
        %1447 = vmatpush.xpose.msra.mxu0 0.0
        %1448 = vmatpush.xpose.msra.mxu0 0.0
        %1449 = vmatpush.xpose.msra.mxu0 0.0
        %1450 = vmatpush.xpose.msra.mxu0 0.0
        %1451 = vmatpush.xpose.msra.mxu0 0.0
        %1452 = vmatpush.xpose.msra.mxu0 0.0
        %1453 = vmatpush.xpose.msra.mxu0 0.0
        %1454 = vmatpush.xpose.msra.mxu0 0.0
        %1455 = vmatpush.xpose.msra.mxu0 0.0
        %1456 = vmatpush.xpose.msra.mxu0 0.0
        %1457 = vmatpush.xpose.msra.mxu0 0.0
        %1458 = vmatpush.xpose.msra.mxu0 0.0
        %1459 = vmatpush.xpose.msra.mxu0 %v1442
        %1460 = vmatmul.f32.gmra.mxu0 %v1190
        %v1461 = vpop.f32.mrf.mxu0
        %v1462 = vadd.f32 0.0, %v1461
        %1463 = vdwg.mxu0
        %v1464 = vmul.f32 %v1462, 0.17677669
        %v1465 = vsel %vm850, %v1464, -inf
        %1466 = vmax.xlane.f32.xlu0 %v1465
        %v1467 = vpop.xlane.xlu0 %1466
        %v1468 = vsub.f32 %v1464, %v1467
        %v1469 = vmul.f32 %v1468, 1.442695
        %v1470 = vpow.pop %v1469
        %v1471 = vsel %vm850, %v1470, 0.0
        %1472 = vadd.xlane.f32.xlu0 %v1471
        %v1473 = vpop.xlane.xlu0 %1472
        %v1474 = vrcp.pop %v1473
        %v1475 = vmul.f32 %v1470, %v1474
        %v1477 = vsel %vm850, %v1475, 0
        %1479 = vmatpush.msra.mxu0 0.0
        %1480 = vmatpush.msra.mxu0 0.0
        %1481 = vmatpush.msra.mxu0 0.0
        %1482 = vmatpush.msra.mxu0 0.0
        %1483 = vmatpush.msra.mxu0 0.0
        %1484 = vmatpush.msra.mxu0 0.0
        %1485 = vmatpush.msra.mxu0 0.0
        %1486 = vmatpush.msra.mxu0 0.0
        %1487 = vmatpush.msra.mxu0 0.0
        %1488 = vmatpush.msra.mxu0 0.0
        %1489 = vmatpush.msra.mxu0 0.0
        %1490 = vmatpush.msra.mxu0 0.0
        %1491 = vmatpush.msra.mxu0 0.0
        %1492 = vmatpush.msra.mxu0 0.0
        %1493 = vmatpush.msra.mxu0 0.0
        %1494 = vmatpush.msra.mxu0 %v1443
        %1495 = vmatmul.f32.gmra.mxu0 %v1477
        %v1496 = vpop.f32.mrf.mxu0
        %v1497 = vadd.f32 0.0, %v1496
        %1498 = vdwg.mxu0
        %v1499 = vadd.f32 %v1441, %v1497
        %v1500 = vld [vmem:[#allocation9] sm:$0xff]
        %v1501 = vld [vmem:[#allocation9 + $0x8] sm:$0xff]
        %v1502 = vld [vmem:[#allocation9 + $0x10] sm:$0xff]
        %v1503 = vld [vmem:[#allocation9 + $0x18] sm:$0xff]
        %v1504 = vld [vmem:[#allocation9 + $0x20] sm:$0xff]
        %v1505 = vld [vmem:[#allocation9 + $0x28] sm:$0xff]
        %v1506 = vld [vmem:[#allocation9 + $0x30] sm:$0xff]
        %v1507 = vld [vmem:[#allocation9 + $0x38] sm:$0xff]
        %v1508 = vld [vmem:[#allocation9 + $0x40] sm:$0xff]
        %v1509 = vld [vmem:[#allocation9 + $0x48] sm:$0xff]
        %v1510 = vld [vmem:[#allocation9 + $0x50] sm:$0xff]
        %v1511 = vld [vmem:[#allocation9 + $0x58] sm:$0xff]
        %v1512 = vld [vmem:[#allocation9 + $0x60] sm:$0xff]
        %v1513 = vld [vmem:[#allocation9 + $0x68] sm:$0xff]
        %v1514 = vld [vmem:[#allocation9 + $0x70] sm:$0xff]
        %v1515 = vld [vmem:[#allocation9 + $0x78] sm:$0xff]
        %v1516 = vld [vmem:[%s12] sm:$0x1]
        %v1518 = vperm.slane %v1516, 0
        %1520 = vmatpush.msra.mxu0 %v1515
        %1521 = vmatpush.msra.mxu0 %v1514
        %1522 = vmatpush.msra.mxu0 %v1513
        %1523 = vmatpush.msra.mxu0 %v1512
        %1524 = vmatpush.msra.mxu0 %v1511
        %1525 = vmatpush.msra.mxu0 %v1510
        %1526 = vmatpush.msra.mxu0 %v1509
        %1527 = vmatpush.msra.mxu0 %v1508
        %1528 = vmatpush.msra.mxu0 %v1507
        %1529 = vmatpush.msra.mxu0 %v1506
        %1530 = vmatpush.msra.mxu0 %v1505
        %1531 = vmatpush.msra.mxu0 %v1504
        %1532 = vmatpush.msra.mxu0 %v1503
        %1533 = vmatpush.msra.mxu0 %v1502
        %1534 = vmatpush.msra.mxu0 %v1501
        %1535 = vmatpush.msra.mxu0 %v1500
        %1536 = vmatmul.f32.gmra.mxu0 %v1499
        %v1537 = vpop.f32.mrf.mxu0
        %v1538 = vadd.f32 %v1518, %v1537
        %1539 = vdwg.mxu0
        %v1540 = vadd.f32 %v1538, %v1151
        %1541 = vadd.xlane.f32.xlu0 %v1540
        %v1542 = vpop.xlane.xlu0 %1541
        %v1543 = vmul.f32 %v1542, %v1125
        %v1544 = vsub.f32 %v1540, %v1543
        %v1545 = vmul.f32 %v1544, %v1544
        %1546 = vadd.xlane.f32.xlu0 %v1545
        %v1547 = vpop.xlane.xlu0 %1546
        %v1548 = vmul.f32 %v1547, %v1125
        %v1549 = vadd.f32 %v1548, 1e-05
        %v1550 = vrsqrt.pop %v1549
        %v1551 = vmul.f32 %v1550, %v1549
        %v1552 = vmul.f32 %v1551, %v1550
        %v1553 = vmul.f32 0.5, %v1552
        %v1554 = vsub.f32 1.5, %v1553
        %v1555 = vmul.f32 %v1550, %v1554
        %vm1556 = vweird.f32 %v1549
        %vm1557 = vweird.f32 %v1550
        %vm1558 = vmor %vm1556, %vm1557
        %v1559 = vsel %vm1558, %v1550, %v1555
        %v1560 = vmul.f32 %v1544, %v1559
        %v1561 = vmul.f32 %v1560, %v1145
        %v1562 = vadd.f32 %v1561, %v1149
        %v1563 = vld [vmem:[%s15] sm:$0xff]
        %v1564 = vld [vmem:[%s15 + $0x8] sm:$0xff]
        %v1565 = vld [vmem:[%s15 + $0x10] sm:$0xff]
        %v1566 = vld [vmem:[%s15 + $0x18] sm:$0xff]
        %v1567 = vld [vmem:[%s15 + $0x20] sm:$0xff]
        %v1568 = vld [vmem:[%s15 + $0x28] sm:$0xff]
        %v1569 = vld [vmem:[%s15 + $0x30] sm:$0xff]
        %v1570 = vld [vmem:[%s15 + $0x38] sm:$0xff]
        %v1571 = vld [vmem:[%s15 + $0x40] sm:$0xff]
        %v1572 = vld [vmem:[%s15 + $0x48] sm:$0xff]
        %v1573 = vld [vmem:[%s15 + $0x50] sm:$0xff]
        %v1574 = vld [vmem:[%s15 + $0x58] sm:$0xff]
        %v1575 = vld [vmem:[%s15 + $0x60] sm:$0xff]
        %v1576 = vld [vmem:[%s15 + $0x68] sm:$0xff]
        %v1577 = vld [vmem:[%s15 + $0x70] sm:$0xff]
        %v1578 = vld [vmem:[%s15 + $0x78] sm:$0xff]
        %v1579 = vld [vmem:[%s16] sm:$0x1]
        %v1581 = vperm.slane %v1579, 0
        %1583 = vmatpush.msra.mxu0 %v1578
        %1584 = vmatpush.msra.mxu0 %v1577
        %1585 = vmatpush.msra.mxu0 %v1576
        %1586 = vmatpush.msra.mxu0 %v1575
        %1587 = vmatpush.msra.mxu0 %v1574
        %1588 = vmatpush.msra.mxu0 %v1573
        %1589 = vmatpush.msra.mxu0 %v1572
        %1590 = vmatpush.msra.mxu0 %v1571
        %1591 = vmatpush.msra.mxu0 %v1570
        %1592 = vmatpush.msra.mxu0 %v1569
        %1593 = vmatpush.msra.mxu0 %v1568
        %1594 = vmatpush.msra.mxu0 %v1567
        %1595 = vmatpush.msra.mxu0 %v1566
        %1596 = vmatpush.msra.mxu0 %v1565
        %1597 = vmatpush.msra.mxu0 %v1564
        %1598 = vmatpush.msra.mxu0 %v1563
        %1599 = vmatmul.f32.gmra.mxu0 %v1562
        %v1600 = vpop.f32.mrf.mxu0
        %v1601 = vadd.f32 %v1581, %v1600
        %1602 = vdwg.mxu0
        %v1603 = vmax.f32 %v1601, 0.0
        %v1604 = vld [vmem:[%s17] sm:$0xff]
        %v1605 = vld [vmem:[%s17 + $0x8] sm:$0xff]
        %v1606 = vld [vmem:[%s17 + $0x10] sm:$0xff]
        %v1607 = vld [vmem:[%s17 + $0x18] sm:$0xff]
        %v1608 = vld [vmem:[%s17 + $0x20] sm:$0xff]
        %v1609 = vld [vmem:[%s17 + $0x28] sm:$0xff]
        %v1610 = vld [vmem:[%s17 + $0x30] sm:$0xff]
        %v1611 = vld [vmem:[%s17 + $0x38] sm:$0xff]
        %v1612 = vld [vmem:[%s18] sm:$0x1]
        %v1614 = vperm.slane %v1612, 0
        %vm1616 = vcmask 523264
        %v1618 = vsel %vm1616, %v1603, 0
        %1620 = vmatpush.msra.mxu0 0.0
        %1621 = vmatpush.msra.mxu0 0.0
        %1622 = vmatpush.msra.mxu0 0.0
        %1623 = vmatpush.msra.mxu0 0.0
        %1624 = vmatpush.msra.mxu0 0.0
        %1625 = vmatpush.msra.mxu0 0.0
        %1626 = vmatpush.msra.mxu0 0.0
        %1627 = vmatpush.msra.mxu0 0.0
        %1628 = vmatpush.msra.mxu0 %v1611
        %1629 = vmatpush.msra.mxu0 %v1610
        %1630 = vmatpush.msra.mxu0 %v1609
        %1631 = vmatpush.msra.mxu0 %v1608
        %1632 = vmatpush.msra.mxu0 %v1607
        %1633 = vmatpush.msra.mxu0 %v1606
        %1634 = vmatpush.msra.mxu0 %v1605
        %1635 = vmatpush.msra.mxu0 %v1604
        %1636 = vmatmul.f32.gmra.mxu0 %v1618
        %v1637 = vpop.f32.mrf.mxu0
        %v1638 = vadd.f32 %v1614, %v1637
        %1639 = vdwg.mxu0
        %v1640 = vadd.f32 %v1638, %v1562
        %1641 = vadd.xlane.f32.xlu0 %v1640
        %v1642 = vpop.xlane.xlu0 %1641
        %v1643 = vmul.f32 %v1642, %v1125
        %v1644 = vsub.f32 %v1640, %v1643
        %v1645 = vmul.f32 %v1644, %v1644
        %1646 = vadd.xlane.f32.xlu0 %v1645
        %v1647 = vpop.xlane.xlu0 %1646
        %v1648 = vmul.f32 %v1647, %v1125
        %v1649 = vadd.f32 %v1648, 1e-05
        %v1650 = vrsqrt.pop %v1649
        %v1651 = vmul.f32 %v1650, %v1649
        %v1652 = vmul.f32 %v1651, %v1650
        %v1653 = vmul.f32 0.5, %v1652
        %v1654 = vsub.f32 1.5, %v1653
        %v1655 = vmul.f32 %v1650, %v1654
        %vm1656 = vweird.f32 %v1649
        %vm1657 = vweird.f32 %v1650
        %vm1658 = vmor %vm1656, %vm1657
        %v1659 = vsel %vm1658, %v1650, %v1655
        %v1660 = vmul.f32 %v1644, %v1659
        %v1661 = vmul.f32 %v1660, %v1145
        %v1662 = vadd.f32 %v1661, %v1149
        %1663 = vst [vmem:[%s697] sm:$0xff] %v1662
        %p1664 = scmp.lt.s32.totalorder %s33, 1
        %s1665 = scalar_select %p1664, %s33, 1
        %s1666 = smul.addr %s1665, 8
        %s1667 = scalar_lea.vmem %s19, %s1666
        // Predicated region
        $region117: #{_lambda_.7} parent=95 // pred_check
          %p1668 = pneg %p460
        $region118: #{_lambda_.7} parent=95 // pred_check_branch
          %1670 = sbr.rel (%p1668) target = $region120
        $region119: #{_lambda_.7} parent=95 // pred_region
          _
        $region120: #{_lambda_.7} parent=95 // pred_fallthru
          _
      $region96: #{_lambda_.7} parent=5 // pred_fallthru
        _
      %p1671 = scmp.le.s32.totalorder 2, %s28
      // Predicated region
      $region121: #{_lambda_.7} parent=5 // pred_check
        %p1672 = pneg %p1671
      $region122: #{_lambda_.7} parent=5 // pred_check_branch
        %1674 = sbr.rel (%p1672) target = $region124
      $region123: #{_lambda_.7} parent=5 // pred_region
        %s1675 = ssub.s32 %s28, 2
        // Predicated region
        $region125: #{_lambda_.7} parent=123 // pred_check
          %p1676 = pneg %p466
        $region126: #{_lambda_.7} parent=123 // pred_check_branch
          %1678 = sbr.rel (%p1676) target = $region128
        $region127: #{_lambda_.7} parent=123 // pred_region
          %p1679 = scmp.lt.s32.totalorder %s34, 1
          %s1680 = scalar_select %p1679, %s34, 1
          %s1681 = smul.addr %s1680, 8
          %s1682 = scalar_lea.vmem %s19, %s1681
        $region128: #{_lambda_.7} parent=123 // pred_fallthru
          _
      $region124: #{_lambda_.7} parent=5 // pred_fallthru
        _
    $region6: #{_lambda_.7} parent=1 // loop_footer
      %s32 = sadd.s32 1, %s28
    $region7: #{_lambda_.7} parent=1 // loop_footer_branch
      %27 = sbr.rel target = $region3
    $region8: #{_lambda_.7} parent=1 // loop_exit
      _
    %1683 = vsyncpa [#allocation3], 1
    %s1684 = scalar_lea.sflag [#allocation3], 1
    %1685 = vsyncpa %s1684, 1
    %1686 = vsyncpa [#allocation5], 1
    %1687 = vsyncpa [#allocation8], 1

</llo_original>
